<compile_context>
chip_gen: v7x
topology: tpu7x:2x2x1
jax: 0.10.0
libtpu: 0.0.40
codegen_flags: <defaults>
</compile_context>

<pallas_src>
import math
from functools import partial

import jax
import jax.numpy as jnp
from jax import lax
from jax.experimental import pallas as pl
from jax.experimental.pallas import tpu as pltpu


# ----------------------------------------------------------------------------
# Fused Block kernel: one grid step == one batch element, full (T, C) slab.
# ----------------------------------------------------------------------------
def _block_kernel(x_ref, wqkv_ref, wproj_ref, wfc_ref, wmlp_ref,
                  g1_ref, b1_ref, g2_ref, b2_ref, o_ref,
                  *, n_head, ln_eps):
    _, T, C = x_ref.shape
    hd = C // n_head
    scale = 1.0 / math.sqrt(hd)

    x = x_ref[0]                                   # (T, C) native dtype
    xf = x.astype(jnp.float32)

    # ---------------- LayerNorm 1 (f32 math) ----------------
    mu = jnp.mean(xf, axis=-1, keepdims=True)
    xc = xf - mu
    var = jnp.mean(xc * xc, axis=-1, keepdims=True)
    h1 = xc * lax.rsqrt(var + ln_eps)
    h1 = h1 * g1_ref[...].astype(jnp.float32) + b1_ref[...].astype(jnp.float32)
    h1 = h1.astype(x.dtype)

    # ---------------- QKV projection: (T, C) @ (C, 3C) ----------------
    qkv = jnp.dot(h1, wqkv_ref[...],
                  preferred_element_type=jnp.float32).astype(x.dtype)

    # Causal mask, hoisted outside the per-head loop.
    row = lax.broadcasted_iota(jnp.int32, (T, T), 0)
    col = lax.broadcasted_iota(jnp.int32, (T, T), 1)
    causal = col <= row

    # ---------------- causal attention, one head at a time ----------------
    # (T, T) scores keep T on the lane axis; hd only appears as a matmul
    # contraction / minor output dim.
    y_heads = []
    for h in range(n_head):
        qh = qkv[:, h * hd:(h + 1) * hd]                    # (T, hd)
        kh = qkv[:, C + h * hd:C + (h + 1) * hd]            # (T, hd)
        vh = qkv[:, 2 * C + h * hd:2 * C + (h + 1) * hd]    # (T, hd)

        s = jnp.dot(qh, kh.T, preferred_element_type=jnp.float32) * scale
        s = jnp.where(causal, s, -jnp.inf)                  # diag always kept
        m = jnp.max(s, axis=-1, keepdims=True)
        p = jnp.exp(s - m)
        l = jnp.sum(p, axis=-1, keepdims=True)
        oh = jnp.dot(p.astype(x.dtype), vh,
                     preferred_element_type=jnp.float32)    # (T, hd) f32
        y_heads.append(oh * pl.reciprocal(l, approx=True))

    y = jnp.concatenate(y_heads, axis=-1).astype(x.dtype)   # (T, C)

    # ---------------- attention output projection + residual ----------------
    att = jnp.dot(y, wproj_ref[...], preferred_element_type=jnp.float32)
    x1 = xf + att                                            # (T, C) f32

    # ---------------- LayerNorm 2 (f32 math) ----------------
    mu2 = jnp.mean(x1, axis=-1, keepdims=True)
    xc2 = x1 - mu2
    var2 = jnp.mean(xc2 * xc2, axis=-1, keepdims=True)
    h2 = xc2 * lax.rsqrt(var2 + ln_eps)
    h2 = h2 * g2_ref[...].astype(jnp.float32) + b2_ref[...].astype(jnp.float32)
    h2 = h2.astype(x.dtype)

    # ---------------- MLP: C -> 4C -> GELU(tanh) -> C + residual ----------------
    f = jnp.dot(h2, wfc_ref[...], preferred_element_type=jnp.float32)
    g = jax.nn.gelu(f, approximate=True).astype(x.dtype)
    mlp_out = jnp.dot(g, wmlp_ref[...], preferred_element_type=jnp.float32)

    o_ref[0] = (x1 + mlp_out).astype(o_ref.dtype)


# ----------------------------------------------------------------------------
# Python wrapper
# ----------------------------------------------------------------------------
def prepare_params(w_attn, w_proj, w_fc, w_mlp_proj,
                   ln1_g, ln1_b, ln2_g, ln2_b):
    """Pre-transpose Linear weights (out,in)->(in,out) ONCE; LN params to (1,C)."""
    return (
        jnp.asarray(w_attn).T,       # (C, 3C)
        jnp.asarray(w_proj).T,       # (C, C)
        jnp.asarray(w_fc).T,         # (C, 4C)
        jnp.asarray(w_mlp_proj).T,   # (4C, C)
        jnp.asarray(ln1_g).reshape(1, -1),
        jnp.asarray(ln1_b).reshape(1, -1),
        jnp.asarray(ln2_g).reshape(1, -1),
        jnp.asarray(ln2_b).reshape(1, -1),
    )


def block_forward(x, params, *, n_head, ln_eps=1e-5):
    """x: (B, T, C); params from prepare_params()."""
    B, T, C = x.shape
    wqkv, wproj, wfc, wmlp, g1, b1, g2, b2 = params

    def whole(shape):
        n = len(shape)
        return pl.BlockSpec(shape, lambda i, _n=n: (0,) * _n)

    return pl.pallas_call(
        partial(_block_kernel, n_head=n_head, ln_eps=ln_eps),
        out_shape=jax.ShapeDtypeStruct((B, T, C), x.dtype),
        grid_spec=pltpu.PrefetchScalarGridSpec(
            num_scalar_prefetch=0,
            grid=(B,),
            in_specs=[
                pl.BlockSpec((1, T, C), lambda i: (i, 0, 0)),
                whole(wqkv.shape), whole(wproj.shape),
                whole(wfc.shape), whole(wmlp.shape),
                whole(g1.shape), whole(b1.shape),
                whole(g2.shape), whole(b2.shape),
            ],
            out_specs=pl.BlockSpec((1, T, C), lambda i: (i, 0, 0)),
        ),
        compiler_params=pltpu.CompilerParams(
            dimension_semantics=("parallel",),
        ),
    )(x, wqkv, wproj, wfc, wmlp, g1, b1, g2, b2)


# ----------------------------------------------------------------------------
# Pure-JAX reference for a silent correctness check.
# ----------------------------------------------------------------------------
def _reference_block(x, w_attn, w_proj, w_fc, w_mlp_proj,
                     ln1_g, ln1_b, ln2_g, ln2_b, n_head, eps=1e-5):
    B, T, C = x.shape
    hd = C // n_head

    def ln(z, g, b):
        mu = z.mean(-1, keepdims=True)
        var = ((z - mu) ** 2).mean(-1, keepdims=True)
        return (z - mu) / jnp.sqrt(var + eps) * g + b

    h = ln(x, ln1_g, ln1_b)
    qkv = h @ w_attn.T
    q, k, v = jnp.split(qkv, 3, axis=2)

    def heads(t):
        return t.reshape(B, T, n_head, hd).transpose(0, 2, 1, 3)

    q, k, v = heads(q), heads(k), heads(v)
    s = jnp.einsum("bhqd,bhkd->bhqk", q, k) / math.sqrt(hd)
    mask = jnp.tril(jnp.ones((T, T), dtype=bool))
    s = jnp.where(mask, s, -jnp.inf)
    p = jax.nn.softmax(s, axis=-1)
    y = jnp.einsum("bhqk,bhkd->bhqd", p, v)
    y = y.transpose(0, 2, 1, 3).reshape(B, T, C)
    x = x + y @ w_proj.T

    h2 = ln(x, ln2_g, ln2_b)
    f = jax.nn.gelu(h2 @ w_fc.T, approximate=True)
    return x + f @ w_mlp_proj.T


if __name__ == "__main__":
    # Small config implied by the module: n_embd divisible by n_head.
    batch, seq, n_embd, n_head = 2, 128, 32, 4

    key = jax.random.PRNGKey(0)
    kx, ka, kp, kf, km, k1, k2, k3, k4 = jax.random.split(key, 9)

    x = jax.random.normal(kx, (batch, seq, n_embd), jnp.float32)
    # PyTorch Linear convention: weight shape = (out_features, in_features).
    w_attn = jax.random.normal(ka, (3 * n_embd, n_embd), jnp.float32) * 0.02
    w_proj = jax.random.normal(kp, (n_embd, n_embd), jnp.float32) * 0.02
    w_fc = jax.random.normal(kf, (4 * n_embd, n_embd), jnp.float32) * 0.02
    w_mlp_proj = jax.random.normal(km, (n_embd, 4 * n_embd), jnp.float32) * 0.02
    ln1_g = 1.0 + 0.1 * jax.random.normal(k1, (n_embd,), jnp.float32)
    ln1_b = 0.1 * jax.random.normal(k2, (n_embd,), jnp.float32)
    ln2_g = 1.0 + 0.1 * jax.random.normal(k3, (n_embd,), jnp.float32)
    ln2_b = 0.1 * jax.random.normal(k4, (n_embd,), jnp.float32)

    params = prepare_params(w_attn, w_proj, w_fc, w_mlp_proj,
                            ln1_g, ln1_b, ln2_g, ln2_b)

    y = block_forward(x, params, n_head=n_head)
    y = jax.block_until_ready(y)

    y_ref = _reference_block(x, w_attn, w_proj, w_fc, w_mlp_proj,
                             ln1_g, ln1_b, ln2_g, ln2_b, n_head)
    assert jnp.allclose(y, y_ref, atol=5e-3, rtol=5e-3), "mismatch vs reference"

    print("KERNEL_OK")
</pallas_src>

<mosaic_0001>
module attributes {stable_mosaic.version = 11 : i64} {
  func.func @_block_kernel(%arg0: i32, %arg1: memref<1x128x32xf32, #tpu.memory_space<vmem>>, %arg2: memref<32x96xf32, #tpu.memory_space<vmem>>, %arg3: memref<32x32xf32, #tpu.memory_space<vmem>>, %arg4: memref<32x128xf32, #tpu.memory_space<vmem>>, %arg5: memref<128x32xf32, #tpu.memory_space<vmem>>, %arg6: memref<1x32xf32, #tpu.memory_space<vmem>>, %arg7: memref<1x32xf32, #tpu.memory_space<vmem>>, %arg8: memref<1x32xf32, #tpu.memory_space<vmem>>, %arg9: memref<1x32xf32, #tpu.memory_space<vmem>>, %arg10: memref<1x128x32xf32, #tpu.memory_space<vmem>>) attributes {dimension_semantics = [#tpu.dimension_semantics<parallel>], iteration_bounds = array<i64: 2>, scalar_prefetch = 0 : i64, scratch_operands = 0 : i64, tpu.core_type = #tpu.core_type<tc>, window_params = [{transform_indices = @transform_0, window_bounds = array<i64: 1, 128, 32>}, {pipeline_mode = #tpu.pipeline_mode<synchronous>, transform_indices = @transform_1, window_bounds = array<i64: 32, 96>}, {pipeline_mode = #tpu.pipeline_mode<synchronous>, transform_indices = @transform_2, window_bounds = array<i64: 32, 32>}, {pipeline_mode = #tpu.pipeline_mode<synchronous>, transform_indices = @transform_3, window_bounds = array<i64: 32, 128>}, {pipeline_mode = #tpu.pipeline_mode<synchronous>, transform_indices = @transform_4, window_bounds = array<i64: 128, 32>}, {pipeline_mode = #tpu.pipeline_mode<synchronous>, transform_indices = @transform_5, window_bounds = array<i64: 1, 32>}, {pipeline_mode = #tpu.pipeline_mode<synchronous>, transform_indices = @transform_6, window_bounds = array<i64: 1, 32>}, {pipeline_mode = #tpu.pipeline_mode<synchronous>, transform_indices = @transform_7, window_bounds = array<i64: 1, 32>}, {pipeline_mode = #tpu.pipeline_mode<synchronous>, transform_indices = @transform_8, window_bounds = array<i64: 1, 32>}, {transform_indices = @transform_9, window_bounds = array<i64: 1, 128, 32>}]} {
    %c0 = arith.constant 0 : index
    %c0_0 = arith.constant 0 : index
    %c0_1 = arith.constant 0 : index
    %0 = vector.load %arg1[%c0, %c0_0, %c0_1] : memref<1x128x32xf32, #tpu.memory_space<vmem>>, vector<1x128x32xf32>
    %1 = vector.shape_cast %0 : vector<1x128x32xf32> to vector<128x32xf32>
    %cst = arith.constant dense<0.000000e+00> : vector<128xf32>
    %2 = vector.multi_reduction <add>, %1, %cst [1] : vector<128x32xf32> to vector<128xf32>
    %3 = vector.shape_cast %2 : vector<128xf32> to vector<128x1xf32>
    %cst_2 = arith.constant 3.200000e+01 : f32
    %4 = vector.broadcast %cst_2 : f32 to vector<128x1xf32>
    %5 = arith.divf %3, %4 : vector<128x1xf32>
    %6 = vector.broadcast %5 : vector<128x1xf32> to vector<128x32xf32>
    %7 = arith.subf %1, %6 : vector<128x32xf32>
    %8 = arith.mulf %7, %7 : vector<128x32xf32>
    %cst_3 = arith.constant dense<0.000000e+00> : vector<128xf32>
    %9 = vector.multi_reduction <add>, %8, %cst_3 [1] : vector<128x32xf32> to vector<128xf32>
    %10 = vector.shape_cast %9 : vector<128xf32> to vector<128x1xf32>
    %cst_4 = arith.constant 3.200000e+01 : f32
    %11 = vector.broadcast %cst_4 : f32 to vector<128x1xf32>
    %12 = arith.divf %10, %11 : vector<128x1xf32>
    %cst_5 = arith.constant 9.99999974E-6 : f32
    %13 = vector.broadcast %cst_5 : f32 to vector<128x1xf32>
    %14 = arith.addf %12, %13 : vector<128x1xf32>
    %15 = math.rsqrt %14 : vector<128x1xf32>
    %16 = vector.broadcast %15 : vector<128x1xf32> to vector<128x32xf32>
    %17 = arith.mulf %7, %16 : vector<128x32xf32>
    %c0_6 = arith.constant 0 : index
    %c0_7 = arith.constant 0 : index
    %18 = vector.load %arg6[%c0_6, %c0_7] : memref<1x32xf32, #tpu.memory_space<vmem>>, vector<1x32xf32>
    %19 = vector.broadcast %18 : vector<1x32xf32> to vector<128x32xf32>
    %20 = arith.mulf %17, %19 : vector<128x32xf32>
    %c0_8 = arith.constant 0 : index
    %c0_9 = arith.constant 0 : index
    %21 = vector.load %arg7[%c0_8, %c0_9] : memref<1x32xf32, #tpu.memory_space<vmem>>, vector<1x32xf32>
    %22 = vector.broadcast %21 : vector<1x32xf32> to vector<128x32xf32>
    %23 = arith.addf %20, %22 : vector<128x32xf32>
    %c0_10 = arith.constant 0 : index
    %c0_11 = arith.constant 0 : index
    %24 = vector.load %arg2[%c0_10, %c0_11] : memref<32x96xf32, #tpu.memory_space<vmem>>, vector<32x96xf32>
    %cst_12 = arith.constant dense<0.000000e+00> : vector<128x96xf32>
    %25 = tpu.matmul %23, %24, %cst_12 {dimension_numbers = #tpu.dot_dimension_numbers<[1], [0], [0], [1], [0, 0, 1, 1], [], []>} : vector<128x32xf32>, vector<32x96xf32>, vector<128x96xf32> -> vector<128x96xf32>
    %26 = tpu.iota {dimensions = array<i32: 0>} : vector<128x128xi32>
    %27 = tpu.iota {dimensions = array<i32: 1>} : vector<128x128xi32>
    %28 = arith.cmpi sle, %27, %26 : vector<128x128xi32>
    %29 = vector.extract_strided_slice %25 {offsets = [0, 0], sizes = [128, 8], strides = [1, 1]} : vector<128x96xf32> to vector<128x8xf32>
    %30 = vector.extract_strided_slice %25 {offsets = [0, 32], sizes = [128, 8], strides = [1, 1]} : vector<128x96xf32> to vector<128x8xf32>
    %31 = vector.extract_strided_slice %25 {offsets = [0, 64], sizes = [128, 8], strides = [1, 1]} : vector<128x96xf32> to vector<128x8xf32>
    %32 = tpu.transpose %30, [1, 0] : vector<128x8xf32> -> vector<8x128xf32>
    %cst_13 = arith.constant dense<0.000000e+00> : vector<128x128xf32>
    %33 = tpu.matmul %29, %32, %cst_13 {dimension_numbers = #tpu.dot_dimension_numbers<[1], [0], [0], [1], [0, 0, 1, 1], [], []>} : vector<128x8xf32>, vector<8x128xf32>, vector<128x128xf32> -> vector<128x128xf32>
    %cst_14 = arith.constant 0.353553385 : f32
    %34 = vector.broadcast %cst_14 : f32 to vector<128x128xf32>
    %35 = arith.mulf %33, %34 : vector<128x128xf32>
    %cst_15 = arith.constant 0xFF800000 : f32
    %36 = vector.broadcast %cst_15 : f32 to vector<128x128xf32>
    %37 = arith.select %28, %35, %36 : vector<128x128xi1>, vector<128x128xf32>
    %cst_16 = arith.constant dense<0xFF800000> : vector<128xf32>
    %38 = vector.multi_reduction <maximumf>, %37, %cst_16 [1] : vector<128x128xf32> to vector<128xf32>
    %39 = vector.shape_cast %38 : vector<128xf32> to vector<128x1xf32>
    %40 = vector.broadcast %39 : vector<128x1xf32> to vector<128x128xf32>
    %41 = arith.subf %37, %40 : vector<128x128xf32>
    %42 = math.exp %41 : vector<128x128xf32>
    %cst_17 = arith.constant dense<0.000000e+00> : vector<128xf32>
    %43 = vector.multi_reduction <add>, %42, %cst_17 [1] : vector<128x128xf32> to vector<128xf32>
    %44 = vector.shape_cast %43 : vector<128xf32> to vector<128x1xf32>
    %cst_18 = arith.constant dense<0.000000e+00> : vector<128x8xf32>
    %45 = tpu.matmul %42, %31, %cst_18 {dimension_numbers = #tpu.dot_dimension_numbers<[1], [0], [0], [1], [0, 0, 1, 1], [], []>} : vector<128x128xf32>, vector<128x8xf32>, vector<128x8xf32> -> vector<128x8xf32>
    %46 = tpu.reciprocal %44 {approx = true} : vector<128x1xf32> -> vector<128x1xf32>
    %47 = vector.broadcast %46 : vector<128x1xf32> to vector<128x8xf32>
    %48 = arith.mulf %45, %47 : vector<128x8xf32>
    %49 = vector.extract_strided_slice %25 {offsets = [0, 8], sizes = [128, 8], strides = [1, 1]} : vector<128x96xf32> to vector<128x8xf32>
    %50 = vector.extract_strided_slice %25 {offsets = [0, 40], sizes = [128, 8], strides = [1, 1]} : vector<128x96xf32> to vector<128x8xf32>
    %51 = vector.extract_strided_slice %25 {offsets = [0, 72], sizes = [128, 8], strides = [1, 1]} : vector<128x96xf32> to vector<128x8xf32>
    %52 = tpu.transpose %50, [1, 0] : vector<128x8xf32> -> vector<8x128xf32>
    %cst_19 = arith.constant dense<0.000000e+00> : vector<128x128xf32>
    %53 = tpu.matmul %49, %52, %cst_19 {dimension_numbers = #tpu.dot_dimension_numbers<[1], [0], [0], [1], [0, 0, 1, 1], [], []>} : vector<128x8xf32>, vector<8x128xf32>, vector<128x128xf32> -> vector<128x128xf32>
    %cst_20 = arith.constant 0.353553385 : f32
    %54 = vector.broadcast %cst_20 : f32 to vector<128x128xf32>
    %55 = arith.mulf %53, %54 : vector<128x128xf32>
    %cst_21 = arith.constant 0xFF800000 : f32
    %56 = vector.broadcast %cst_21 : f32 to vector<128x128xf32>
    %57 = arith.select %28, %55, %56 : vector<128x128xi1>, vector<128x128xf32>
    %cst_22 = arith.constant dense<0xFF800000> : vector<128xf32>
    %58 = vector.multi_reduction <maximumf>, %57, %cst_22 [1] : vector<128x128xf32> to vector<128xf32>
    %59 = vector.shape_cast %58 : vector<128xf32> to vector<128x1xf32>
    %60 = vector.broadcast %59 : vector<128x1xf32> to vector<128x128xf32>
    %61 = arith.subf %57, %60 : vector<128x128xf32>
    %62 = math.exp %61 : vector<128x128xf32>
    %cst_23 = arith.constant dense<0.000000e+00> : vector<128xf32>
    %63 = vector.multi_reduction <add>, %62, %cst_23 [1] : vector<128x128xf32> to vector<128xf32>
    %64 = vector.shape_cast %63 : vector<128xf32> to vector<128x1xf32>
    %cst_24 = arith.constant dense<0.000000e+00> : vector<128x8xf32>
    %65 = tpu.matmul %62, %51, %cst_24 {dimension_numbers = #tpu.dot_dimension_numbers<[1], [0], [0], [1], [0, 0, 1, 1], [], []>} : vector<128x128xf32>, vector<128x8xf32>, vector<128x8xf32> -> vector<128x8xf32>
    %66 = tpu.reciprocal %64 {approx = true} : vector<128x1xf32> -> vector<128x1xf32>
    %67 = vector.broadcast %66 : vector<128x1xf32> to vector<128x8xf32>
    %68 = arith.mulf %65, %67 : vector<128x8xf32>
    %69 = vector.extract_strided_slice %25 {offsets = [0, 16], sizes = [128, 8], strides = [1, 1]} : vector<128x96xf32> to vector<128x8xf32>
    %70 = vector.extract_strided_slice %25 {offsets = [0, 48], sizes = [128, 8], strides = [1, 1]} : vector<128x96xf32> to vector<128x8xf32>
    %71 = vector.extract_strided_slice %25 {offsets = [0, 80], sizes = [128, 8], strides = [1, 1]} : vector<128x96xf32> to vector<128x8xf32>
    %72 = tpu.transpose %70, [1, 0] : vector<128x8xf32> -> vector<8x128xf32>
    %cst_25 = arith.constant dense<0.000000e+00> : vector<128x128xf32>
    %73 = tpu.matmul %69, %72, %cst_25 {dimension_numbers = #tpu.dot_dimension_numbers<[1], [0], [0], [1], [0, 0, 1, 1], [], []>} : vector<128x8xf32>, vector<8x128xf32>, vector<128x128xf32> -> vector<128x128xf32>
    %cst_26 = arith.constant 0.353553385 : f32
    %74 = vector.broadcast %cst_26 : f32 to vector<128x128xf32>
    %75 = arith.mulf %73, %74 : vector<128x128xf32>
    %cst_27 = arith.constant 0xFF800000 : f32
    %76 = vector.broadcast %cst_27 : f32 to vector<128x128xf32>
    %77 = arith.select %28, %75, %76 : vector<128x128xi1>, vector<128x128xf32>
    %cst_28 = arith.constant dense<0xFF800000> : vector<128xf32>
    %78 = vector.multi_reduction <maximumf>, %77, %cst_28 [1] : vector<128x128xf32> to vector<128xf32>
    %79 = vector.shape_cast %78 : vector<128xf32> to vector<128x1xf32>
    %80 = vector.broadcast %79 : vector<128x1xf32> to vector<128x128xf32>
    %81 = arith.subf %77, %80 : vector<128x128xf32>
    %82 = math.exp %81 : vector<128x128xf32>
    %cst_29 = arith.constant dense<0.000000e+00> : vector<128xf32>
    %83 = vector.multi_reduction <add>, %82, %cst_29 [1] : vector<128x128xf32> to vector<128xf32>
    %84 = vector.shape_cast %83 : vector<128xf32> to vector<128x1xf32>
    %cst_30 = arith.constant dense<0.000000e+00> : vector<128x8xf32>
    %85 = tpu.matmul %82, %71, %cst_30 {dimension_numbers = #tpu.dot_dimension_numbers<[1], [0], [0], [1], [0, 0, 1, 1], [], []>} : vector<128x128xf32>, vector<128x8xf32>, vector<128x8xf32> -> vector<128x8xf32>
    %86 = tpu.reciprocal %84 {approx = true} : vector<128x1xf32> -> vector<128x1xf32>
    %87 = vector.broadcast %86 : vector<128x1xf32> to vector<128x8xf32>
    %88 = arith.mulf %85, %87 : vector<128x8xf32>
    %89 = vector.extract_strided_slice %25 {offsets = [0, 24], sizes = [128, 8], strides = [1, 1]} : vector<128x96xf32> to vector<128x8xf32>
    %90 = vector.extract_strided_slice %25 {offsets = [0, 56], sizes = [128, 8], strides = [1, 1]} : vector<128x96xf32> to vector<128x8xf32>
    %91 = vector.extract_strided_slice %25 {offsets = [0, 88], sizes = [128, 8], strides = [1, 1]} : vector<128x96xf32> to vector<128x8xf32>
    %92 = tpu.transpose %90, [1, 0] : vector<128x8xf32> -> vector<8x128xf32>
    %cst_31 = arith.constant dense<0.000000e+00> : vector<128x128xf32>
    %93 = tpu.matmul %89, %92, %cst_31 {dimension_numbers = #tpu.dot_dimension_numbers<[1], [0], [0], [1], [0, 0, 1, 1], [], []>} : vector<128x8xf32>, vector<8x128xf32>, vector<128x128xf32> -> vector<128x128xf32>
    %cst_32 = arith.constant 0.353553385 : f32
    %94 = vector.broadcast %cst_32 : f32 to vector<128x128xf32>
    %95 = arith.mulf %93, %94 : vector<128x128xf32>
    %cst_33 = arith.constant 0xFF800000 : f32
    %96 = vector.broadcast %cst_33 : f32 to vector<128x128xf32>
    %97 = arith.select %28, %95, %96 : vector<128x128xi1>, vector<128x128xf32>
    %cst_34 = arith.constant dense<0xFF800000> : vector<128xf32>
    %98 = vector.multi_reduction <maximumf>, %97, %cst_34 [1] : vector<128x128xf32> to vector<128xf32>
    %99 = vector.shape_cast %98 : vector<128xf32> to vector<128x1xf32>
    %100 = vector.broadcast %99 : vector<128x1xf32> to vector<128x128xf32>
    %101 = arith.subf %97, %100 : vector<128x128xf32>
    %102 = math.exp %101 : vector<128x128xf32>
    %cst_35 = arith.constant dense<0.000000e+00> : vector<128xf32>
    %103 = vector.multi_reduction <add>, %102, %cst_35 [1] : vector<128x128xf32> to vector<128xf32>
    %104 = vector.shape_cast %103 : vector<128xf32> to vector<128x1xf32>
    %cst_36 = arith.constant dense<0.000000e+00> : vector<128x8xf32>
    %105 = tpu.matmul %102, %91, %cst_36 {dimension_numbers = #tpu.dot_dimension_numbers<[1], [0], [0], [1], [0, 0, 1, 1], [], []>} : vector<128x128xf32>, vector<128x8xf32>, vector<128x8xf32> -> vector<128x8xf32>
    %106 = tpu.reciprocal %104 {approx = true} : vector<128x1xf32> -> vector<128x1xf32>
    %107 = vector.broadcast %106 : vector<128x1xf32> to vector<128x8xf32>
    %108 = arith.mulf %105, %107 : vector<128x8xf32>
    %109 = tpu.concatenate %48, %68, %88, %108 in 1 : vector<128x8xf32>, vector<128x8xf32>, vector<128x8xf32>, vector<128x8xf32> -> vector<128x32xf32>
    %c0_37 = arith.constant 0 : index
    %c0_38 = arith.constant 0 : index
    %110 = vector.load %arg3[%c0_37, %c0_38] : memref<32x32xf32, #tpu.memory_space<vmem>>, vector<32x32xf32>
    %cst_39 = arith.constant dense<0.000000e+00> : vector<128x32xf32>
    %111 = tpu.matmul %109, %110, %cst_39 {dimension_numbers = #tpu.dot_dimension_numbers<[1], [0], [0], [1], [0, 0, 1, 1], [], []>} : vector<128x32xf32>, vector<32x32xf32>, vector<128x32xf32> -> vector<128x32xf32>
    %112 = arith.addf %1, %111 : vector<128x32xf32>
    %cst_40 = arith.constant dense<0.000000e+00> : vector<128xf32>
    %113 = vector.multi_reduction <add>, %112, %cst_40 [1] : vector<128x32xf32> to vector<128xf32>
    %114 = vector.shape_cast %113 : vector<128xf32> to vector<128x1xf32>
    %cst_41 = arith.constant 3.200000e+01 : f32
    %115 = vector.broadcast %cst_41 : f32 to vector<128x1xf32>
    %116 = arith.divf %114, %115 : vector<128x1xf32>
    %117 = vector.broadcast %116 : vector<128x1xf32> to vector<128x32xf32>
    %118 = arith.subf %112, %117 : vector<128x32xf32>
    %119 = arith.mulf %118, %118 : vector<128x32xf32>
    %cst_42 = arith.constant dense<0.000000e+00> : vector<128xf32>
    %120 = vector.multi_reduction <add>, %119, %cst_42 [1] : vector<128x32xf32> to vector<128xf32>
    %121 = vector.shape_cast %120 : vector<128xf32> to vector<128x1xf32>
    %cst_43 = arith.constant 3.200000e+01 : f32
    %122 = vector.broadcast %cst_43 : f32 to vector<128x1xf32>
    %123 = arith.divf %121, %122 : vector<128x1xf32>
    %cst_44 = arith.constant 9.99999974E-6 : f32
    %124 = vector.broadcast %cst_44 : f32 to vector<128x1xf32>
    %125 = arith.addf %123, %124 : vector<128x1xf32>
    %126 = math.rsqrt %125 : vector<128x1xf32>
    %127 = vector.broadcast %126 : vector<128x1xf32> to vector<128x32xf32>
    %128 = arith.mulf %118, %127 : vector<128x32xf32>
    %c0_45 = arith.constant 0 : index
    %c0_46 = arith.constant 0 : index
    %129 = vector.load %arg8[%c0_45, %c0_46] : memref<1x32xf32, #tpu.memory_space<vmem>>, vector<1x32xf32>
    %130 = vector.broadcast %129 : vector<1x32xf32> to vector<128x32xf32>
    %131 = arith.mulf %128, %130 : vector<128x32xf32>
    %c0_47 = arith.constant 0 : index
    %c0_48 = arith.constant 0 : index
    %132 = vector.load %arg9[%c0_47, %c0_48] : memref<1x32xf32, #tpu.memory_space<vmem>>, vector<1x32xf32>
    %133 = vector.broadcast %132 : vector<1x32xf32> to vector<128x32xf32>
    %134 = arith.addf %131, %133 : vector<128x32xf32>
    %c0_49 = arith.constant 0 : index
    %c0_50 = arith.constant 0 : index
    %135 = vector.load %arg4[%c0_49, %c0_50] : memref<32x128xf32, #tpu.memory_space<vmem>>, vector<32x128xf32>
    %cst_51 = arith.constant dense<0.000000e+00> : vector<128x128xf32>
    %136 = tpu.matmul %134, %135, %cst_51 {dimension_numbers = #tpu.dot_dimension_numbers<[1], [0], [0], [1], [0, 0, 1, 1], [], []>} : vector<128x32xf32>, vector<32x128xf32>, vector<128x128xf32> -> vector<128x128xf32>
    %137 = arith.mulf %136, %136 : vector<128x128xf32>
    %138 = arith.mulf %136, %137 : vector<128x128xf32>
    %cst_52 = arith.constant 4.471500e-02 : f32
    %139 = vector.broadcast %cst_52 : f32 to vector<128x128xf32>
    %140 = arith.mulf %139, %138 : vector<128x128xf32>
    %141 = arith.addf %136, %140 : vector<128x128xf32>
    %cst_53 = arith.constant 0.797884583 : f32
    %142 = vector.broadcast %cst_53 : f32 to vector<128x128xf32>
    %143 = arith.mulf %142, %141 : vector<128x128xf32>
    %144 = math.tanh %143 : vector<128x128xf32>
    %cst_54 = arith.constant 1.000000e+00 : f32
    %145 = vector.broadcast %cst_54 : f32 to vector<128x128xf32>
    %146 = arith.addf %145, %144 : vector<128x128xf32>
    %cst_55 = arith.constant 5.000000e-01 : f32
    %147 = vector.broadcast %cst_55 : f32 to vector<128x128xf32>
    %148 = arith.mulf %147, %146 : vector<128x128xf32>
    %149 = arith.mulf %136, %148 : vector<128x128xf32>
    %c0_56 = arith.constant 0 : index
    %c0_57 = arith.constant 0 : index
    %150 = vector.load %arg5[%c0_56, %c0_57] : memref<128x32xf32, #tpu.memory_space<vmem>>, vector<128x32xf32>
    %cst_58 = arith.constant dense<0.000000e+00> : vector<128x32xf32>
    %151 = tpu.matmul %149, %150, %cst_58 {dimension_numbers = #tpu.dot_dimension_numbers<[1], [0], [0], [1], [0, 0, 1, 1], [], []>} : vector<128x128xf32>, vector<128x32xf32>, vector<128x32xf32> -> vector<128x32xf32>
    %152 = arith.addf %112, %151 : vector<128x32xf32>
    %c0_59 = arith.constant 0 : index
    %c0_60 = arith.constant 0 : index
    %c0_61 = arith.constant 0 : index
    %153 = vector.load %arg10[%c0_59, %c0_60, %c0_61] : memref<1x128x32xf32, #tpu.memory_space<vmem>>, vector<1x128x32xf32>
    %154 = vector.shape_cast %153 : vector<1x128x32xf32> to vector<128x32xf32>
    %155 = vector.shape_cast %152 : vector<128x32xf32> to vector<1x128x32xf32>
    tpu.vector_store %arg10[%c0_59, %c0_60, %c0_61], %155 {strides = array<i32>} : memref<1x128x32xf32, #tpu.memory_space<vmem>>, vector<1x128x32xf32>,
    return
  }
  func.func @transform_0(%arg0: i32) -> (i32, i32, i32) {
    %c0_i32 = arith.constant 0 : i32
    %c0_i32_0 = arith.constant 0 : i32
    %c0_i32_1 = arith.constant 0 : i32
    return %arg0, %c0_i32, %c0_i32_0 : i32, i32, i32
  }
  func.func @transform_1(%arg0: i32) -> (i32, i32) {
    %c0_i32 = arith.constant 0 : i32
    %c0_i32_0 = arith.constant 0 : i32
    %c0_i32_1 = arith.constant 0 : i32
    return %c0_i32, %c0_i32_0 : i32, i32
  }
  func.func @transform_2(%arg0: i32) -> (i32, i32) {
    %c0_i32 = arith.constant 0 : i32
    %c0_i32_0 = arith.constant 0 : i32
    %c0_i32_1 = arith.constant 0 : i32
    return %c0_i32, %c0_i32_0 : i32, i32
  }
  func.func @transform_3(%arg0: i32) -> (i32, i32) {
    %c0_i32 = arith.constant 0 : i32
    %c0_i32_0 = arith.constant 0 : i32
    %c0_i32_1 = arith.constant 0 : i32
    return %c0_i32, %c0_i32_0 : i32, i32
  }
  func.func @transform_4(%arg0: i32) -> (i32, i32) {
    %c0_i32 = arith.constant 0 : i32
    %c0_i32_0 = arith.constant 0 : i32
    %c0_i32_1 = arith.constant 0 : i32
    return %c0_i32, %c0_i32_0 : i32, i32
  }
  func.func @transform_5(%arg0: i32) -> (i32, i32) {
    %c0_i32 = arith.constant 0 : i32
    %c0_i32_0 = arith.constant 0 : i32
    %c0_i32_1 = arith.constant 0 : i32
    return %c0_i32, %c0_i32_0 : i32, i32
  }
  func.func @transform_6(%arg0: i32) -> (i32, i32) {
    %c0_i32 = arith.constant 0 : i32
    %c0_i32_0 = arith.constant 0 : i32
    %c0_i32_1 = arith.constant 0 : i32
    return %c0_i32, %c0_i32_0 : i32, i32
  }
  func.func @transform_7(%arg0: i32) -> (i32, i32) {
    %c0_i32 = arith.constant 0 : i32
    %c0_i32_0 = arith.constant 0 : i32
    %c0_i32_1 = arith.constant 0 : i32
    return %c0_i32, %c0_i32_0 : i32, i32
  }
  func.func @transform_8(%arg0: i32) -> (i32, i32) {
    %c0_i32 = arith.constant 0 : i32
    %c0_i32_0 = arith.constant 0 : i32
    %c0_i32_1 = arith.constant 0 : i32
    return %c0_i32, %c0_i32_0 : i32, i32
  }
  func.func @transform_9(%arg0: i32) -> (i32, i32, i32) {
    %c0_i32 = arith.constant 0 : i32
    %c0_i32_0 = arith.constant 0 : i32
    %c0_i32_1 = arith.constant 0 : i32
    return %arg0, %c0_i32, %c0_i32_0 : i32, i32, i32
  }
}

</mosaic_0001>

<llo_original>
// kernel: tpu_custom_call.1
$region0: #{tpu_custom_call.1}
  #allocation0 [shape = 'u32[]', space=smem, size = 0x4, offset = 0x4, fixed_abs, tag = 'smem constant byte address 0x4 - core index']
  #allocation1 [shape = 'u32[144,128]{1,0:T(1,128)}', space=vmem, size = 0x12000, scoped, tag = 'internal scratch']
  %s0 = inlined_call_operand.vmem [shape: f32[2,128,32], index: 0, kind: input, shape index: {}]
  %s1 = inlined_call_operand.vmem [shape: f32[32,96], index: 1, kind: input, shape index: {}]
  %s2 = inlined_call_operand.vmem [shape: f32[32,32], index: 2, kind: input, shape index: {}]
  %s3 = inlined_call_operand.vmem [shape: f32[32,128], index: 3, kind: input, shape index: {}]
  %s4 = inlined_call_operand.vmem [shape: f32[128,32], index: 4, kind: input, shape index: {}]
  %s5 = inlined_call_operand.vmem [shape: f32[1,32], index: 5, kind: input, shape index: {}]
  %s6 = inlined_call_operand.vmem [shape: f32[1,32], index: 6, kind: input, shape index: {}]
  %s7 = inlined_call_operand.vmem [shape: f32[1,32], index: 7, kind: input, shape index: {}]
  %s8 = inlined_call_operand.vmem [shape: f32[1,32], index: 8, kind: input, shape index: {}]
  %s9 = inlined_call_operand.vmem [shape: f32[2,128,32], index: 9, kind: output, shape index: {}]
  %s10 = sld [smem:[#allocation0]]
  $region69: #{tpu_custom_call.1} parent=0
    _
  %s12 = ssub.s32 1, %s10
  %s13 = scalar_select 0, %s12, %s10
  loop: start=0, step=1, limit=4
  $region2: #{tpu_custom_call.1} parent=0 // loop_pre_header
    _
  $region3: #{tpu_custom_call.1} parent=0 // loop_header
    %s15 = sphi 0, %s19
    %p16 = scmp.ge.s32.totalorder %s15, 4
    %s25 = sphi 0, %s27
    %s28 = sphi 0, %s25
    %s29 = sphi 0, %s28
    %s45 = sphi 0, %s29
    %s49 = sphi 0, %s49
    %s51 = sphi 0, %s49
    %s52 = sphi 0, %s51
    %s66 = sphi 0, %s52
    %s70 = sphi 0, %s70
    %s72 = sphi 0, %s70
    %s73 = sphi 0, %s72
    %s87 = sphi 0, %s73
    %s91 = sphi 0, %s91
    %s93 = sphi 0, %s91
    %s94 = sphi 0, %s93
    %s108 = sphi 0, %s94
    %s112 = sphi 0, %s112
    %s114 = sphi 0, %s112
    %s115 = sphi 0, %s114
    %s129 = sphi 0, %s115
    %s133 = sphi 0, %s133
    %s135 = sphi 0, %s133
    %s136 = sphi 0, %s135
    %s150 = sphi 0, %s136
    %s154 = sphi 0, %s154
    %s156 = sphi 0, %s154
    %s157 = sphi 0, %s156
    %s171 = sphi 0, %s157
    %s175 = sphi 0, %s175
    %s177 = sphi 0, %s175
    %s178 = sphi 0, %s177
    %s192 = sphi 0, %s178
    %s196 = sphi 0, %s196
    %s198 = sphi 0, %s196
    %s199 = sphi 0, %s198
    %s213 = sphi 0, %s199
    %s219 = sphi 0, %s221
    %s222 = sphi 0, %s219
    %s223 = sphi 0, %s222
    %s239 = sphi 0, %s223
  $region4: #{tpu_custom_call.1} parent=0 // loop_header_branch
    %18 = sbr.rel (%p16) target = $region8
  $region5: #{tpu_custom_call.1} parent=0 // loop_body
    %s20 = ssub.s32 %s15, 1
    %s21 = ssub.s32 %s15, 2
    %s22 = sadd.s32 %s15, 1
    %s23 = ssub.s32 %s15, %s22
    %p24 = scmp.eq.s32.totalorder %s23, 0
    %s26 = sadd.s32 %s25, 1
    %s27 = scalar_select %p24, %s25, %s26
    %p30 = pneg %p24
    %p31 = scmp.eq.s32.totalorder %s15, 1
    %p32 = por %p30, %p31
    %p33 = scmp.ne.s32.totalorder %s25, %s28
    %p34 = scmp.eq.s32.totalorder %s15, 0
    %p35 = por %p33, %p34
    %p36 = scmp.ne.s32.totalorder %s25, %s28
    %p37 = scmp.eq.s32.totalorder %s20, 1
    %p38 = por %p36, %p37
    %p39 = scmp.ne.s32.totalorder %s28, %s29
    %p40 = scmp.eq.s32.totalorder %s20, 0
    %p41 = por %p39, %p40
    %p42 = scmp.ne.s32.totalorder %s28, %s29
    %p43 = scmp.eq.s32.totalorder %s21, 1
    %p44 = por %p42, %p43
    %p46 = scmp.ne.s32.totalorder %s29, %s45
    %p47 = scmp.eq.s32.totalorder %s21, 0
    %p48 = por %p46, %p47
    %s50 = sadd.s32 %s49, 1
    %p53 = scmp.eq.s32.totalorder %s15, 1
    %p54 = scmp.ne.s32.totalorder %s49, %s51
    %p55 = scmp.eq.s32.totalorder %s15, 0
    %p56 = por %p54, %p55
    %p57 = scmp.ne.s32.totalorder %s49, %s51
    %p58 = scmp.eq.s32.totalorder %s20, 1
    %p59 = por %p57, %p58
    %p60 = scmp.ne.s32.totalorder %s51, %s52
    %p61 = scmp.eq.s32.totalorder %s20, 0
    %p62 = por %p60, %p61
    %p63 = scmp.ne.s32.totalorder %s51, %s52
    %p64 = scmp.eq.s32.totalorder %s21, 1
    %p65 = por %p63, %p64
    %p67 = scmp.ne.s32.totalorder %s52, %s66
    %p68 = scmp.eq.s32.totalorder %s21, 0
    %p69 = por %p67, %p68
    %s71 = sadd.s32 %s70, 1
    %p74 = scmp.eq.s32.totalorder %s15, 1
    %p75 = scmp.ne.s32.totalorder %s70, %s72
    %p76 = scmp.eq.s32.totalorder %s15, 0
    %p77 = por %p75, %p76
    %p78 = scmp.ne.s32.totalorder %s70, %s72
    %p79 = scmp.eq.s32.totalorder %s20, 1
    %p80 = por %p78, %p79
    %p81 = scmp.ne.s32.totalorder %s72, %s73
    %p82 = scmp.eq.s32.totalorder %s20, 0
    %p83 = por %p81, %p82
    %p84 = scmp.ne.s32.totalorder %s72, %s73
    %p85 = scmp.eq.s32.totalorder %s21, 1
    %p86 = por %p84, %p85
    %p88 = scmp.ne.s32.totalorder %s73, %s87
    %p89 = scmp.eq.s32.totalorder %s21, 0
    %p90 = por %p88, %p89
    %s92 = sadd.s32 %s91, 1
    %p95 = scmp.eq.s32.totalorder %s15, 1
    %p96 = scmp.ne.s32.totalorder %s91, %s93
    %p97 = scmp.eq.s32.totalorder %s15, 0
    %p98 = por %p96, %p97
    %p99 = scmp.ne.s32.totalorder %s91, %s93
    %p100 = scmp.eq.s32.totalorder %s20, 1
    %p101 = por %p99, %p100
    %p102 = scmp.ne.s32.totalorder %s93, %s94
    %p103 = scmp.eq.s32.totalorder %s20, 0
    %p104 = por %p102, %p103
    %p105 = scmp.ne.s32.totalorder %s93, %s94
    %p106 = scmp.eq.s32.totalorder %s21, 1
    %p107 = por %p105, %p106
    %p109 = scmp.ne.s32.totalorder %s94, %s108
    %p110 = scmp.eq.s32.totalorder %s21, 0
    %p111 = por %p109, %p110
    %s113 = sadd.s32 %s112, 1
    %p116 = scmp.eq.s32.totalorder %s15, 1
    %p117 = scmp.ne.s32.totalorder %s112, %s114
    %p118 = scmp.eq.s32.totalorder %s15, 0
    %p119 = por %p117, %p118
    %p120 = scmp.ne.s32.totalorder %s112, %s114
    %p121 = scmp.eq.s32.totalorder %s20, 1
    %p122 = por %p120, %p121
    %p123 = scmp.ne.s32.totalorder %s114, %s115
    %p124 = scmp.eq.s32.totalorder %s20, 0
    %p125 = por %p123, %p124
    %p126 = scmp.ne.s32.totalorder %s114, %s115
    %p127 = scmp.eq.s32.totalorder %s21, 1
    %p128 = por %p126, %p127
    %p130 = scmp.ne.s32.totalorder %s115, %s129
    %p131 = scmp.eq.s32.totalorder %s21, 0
    %p132 = por %p130, %p131
    %s134 = sadd.s32 %s133, 1
    %p137 = scmp.eq.s32.totalorder %s15, 1
    %p138 = scmp.ne.s32.totalorder %s133, %s135
    %p139 = scmp.eq.s32.totalorder %s15, 0
    %p140 = por %p138, %p139
    %p141 = scmp.ne.s32.totalorder %s133, %s135
    %p142 = scmp.eq.s32.totalorder %s20, 1
    %p143 = por %p141, %p142
    %p144 = scmp.ne.s32.totalorder %s135, %s136
    %p145 = scmp.eq.s32.totalorder %s20, 0
    %p146 = por %p144, %p145
    %p147 = scmp.ne.s32.totalorder %s135, %s136
    %p148 = scmp.eq.s32.totalorder %s21, 1
    %p149 = por %p147, %p148
    %p151 = scmp.ne.s32.totalorder %s136, %s150
    %p152 = scmp.eq.s32.totalorder %s21, 0
    %p153 = por %p151, %p152
    %s155 = sadd.s32 %s154, 1
    %p158 = scmp.eq.s32.totalorder %s15, 1
    %p159 = scmp.ne.s32.totalorder %s154, %s156
    %p160 = scmp.eq.s32.totalorder %s15, 0
    %p161 = por %p159, %p160
    %p162 = scmp.ne.s32.totalorder %s154, %s156
    %p163 = scmp.eq.s32.totalorder %s20, 1
    %p164 = por %p162, %p163
    %p165 = scmp.ne.s32.totalorder %s156, %s157
    %p166 = scmp.eq.s32.totalorder %s20, 0
    %p167 = por %p165, %p166
    %p168 = scmp.ne.s32.totalorder %s156, %s157
    %p169 = scmp.eq.s32.totalorder %s21, 1
    %p170 = por %p168, %p169
    %p172 = scmp.ne.s32.totalorder %s157, %s171
    %p173 = scmp.eq.s32.totalorder %s21, 0
    %p174 = por %p172, %p173
    %s176 = sadd.s32 %s175, 1
    %p179 = scmp.eq.s32.totalorder %s15, 1
    %p180 = scmp.ne.s32.totalorder %s175, %s177
    %p181 = scmp.eq.s32.totalorder %s15, 0
    %p182 = por %p180, %p181
    %p183 = scmp.ne.s32.totalorder %s175, %s177
    %p184 = scmp.eq.s32.totalorder %s20, 1
    %p185 = por %p183, %p184
    %p186 = scmp.ne.s32.totalorder %s177, %s178
    %p187 = scmp.eq.s32.totalorder %s20, 0
    %p188 = por %p186, %p187
    %p189 = scmp.ne.s32.totalorder %s177, %s178
    %p190 = scmp.eq.s32.totalorder %s21, 1
    %p191 = por %p189, %p190
    %p193 = scmp.ne.s32.totalorder %s178, %s192
    %p194 = scmp.eq.s32.totalorder %s21, 0
    %p195 = por %p193, %p194
    %s197 = sadd.s32 %s196, 1
    %p200 = scmp.eq.s32.totalorder %s15, 1
    %p201 = scmp.ne.s32.totalorder %s196, %s198
    %p202 = scmp.eq.s32.totalorder %s15, 0
    %p203 = por %p201, %p202
    %p204 = scmp.ne.s32.totalorder %s196, %s198
    %p205 = scmp.eq.s32.totalorder %s20, 1
    %p206 = por %p204, %p205
    %p207 = scmp.ne.s32.totalorder %s198, %s199
    %p208 = scmp.eq.s32.totalorder %s20, 0
    %p209 = por %p207, %p208
    %p210 = scmp.ne.s32.totalorder %s198, %s199
    %p211 = scmp.eq.s32.totalorder %s21, 1
    %p212 = por %p210, %p211
    %p214 = scmp.ne.s32.totalorder %s199, %s213
    %p215 = scmp.eq.s32.totalorder %s21, 0
    %p216 = por %p214, %p215
    %s217 = ssub.s32 %s15, %s22
    %p218 = scmp.eq.s32.totalorder %s217, 0
    %s220 = sadd.s32 %s219, 1
    %s221 = scalar_select %p218, %s219, %s220
    %p224 = pneg %p218
    %p225 = scmp.eq.s32.totalorder %s15, 1
    %p226 = por %p224, %p225
    %p227 = scmp.ne.s32.totalorder %s219, %s222
    %p228 = scmp.eq.s32.totalorder %s15, 0
    %p229 = por %p227, %p228
    %p230 = scmp.ne.s32.totalorder %s219, %s222
    %p231 = scmp.eq.s32.totalorder %s20, 1
    %p232 = por %p230, %p231
    %p233 = scmp.ne.s32.totalorder %s222, %s223
    %p234 = scmp.eq.s32.totalorder %s20, 0
    %p235 = por %p233, %p234
    %p236 = scmp.ne.s32.totalorder %s222, %s223
    %p237 = scmp.eq.s32.totalorder %s21, 1
    %p238 = por %p236, %p237
    %p240 = scmp.ne.s32.totalorder %s223, %s239
    %p241 = scmp.eq.s32.totalorder %s21, 0
    %p242 = por %p240, %p241
    %p243 = scmp.le.s32.totalorder 1, %s15
    %p244 = scmp.lt.s32.totalorder %s15, 3
    %p245 = pnand %p243, %p244
    %p246 = pneg %p245
    // Predicated region
    $region9: #{tpu_custom_call.1} parent=5 // pred_check
      _
    $region10: #{tpu_custom_call.1} parent=5 // pred_check_branch
      %248 = sbr.rel (%p245) target = $region12
    $region11: #{tpu_custom_call.1} parent=5 // pred_region
      %s249 = ssub.s32 %s15, 1
      // Predicated region
      $region13: #{tpu_custom_call.1} parent=11 // pred_check
        %p250 = pneg %p62
      $region14: #{tpu_custom_call.1} parent=11 // pred_check_branch
        %252 = sbr.rel (%p250) target = $region16
      $region15: #{tpu_custom_call.1} parent=11 // pred_region
        _
      $region16: #{tpu_custom_call.1} parent=11 // pred_fallthru
        _
      // Predicated region
      $region17: #{tpu_custom_call.1} parent=11 // pred_check
        %p253 = pneg %p83
      $region18: #{tpu_custom_call.1} parent=11 // pred_check_branch
        %255 = sbr.rel (%p253) target = $region20
      $region19: #{tpu_custom_call.1} parent=11 // pred_region
        _
      $region20: #{tpu_custom_call.1} parent=11 // pred_fallthru
        _
      // Predicated region
      $region21: #{tpu_custom_call.1} parent=11 // pred_check
        %p256 = pneg %p104
      $region22: #{tpu_custom_call.1} parent=11 // pred_check_branch
        %258 = sbr.rel (%p256) target = $region24
      $region23: #{tpu_custom_call.1} parent=11 // pred_region
        _
      $region24: #{tpu_custom_call.1} parent=11 // pred_fallthru
        _
      // Predicated region
      $region25: #{tpu_custom_call.1} parent=11 // pred_check
        %p259 = pneg %p125
      $region26: #{tpu_custom_call.1} parent=11 // pred_check_branch
        %261 = sbr.rel (%p259) target = $region28
      $region27: #{tpu_custom_call.1} parent=11 // pred_region
        _
      $region28: #{tpu_custom_call.1} parent=11 // pred_fallthru
        _
      // Predicated region
      $region29: #{tpu_custom_call.1} parent=11 // pred_check
        %p262 = pneg %p146
      $region30: #{tpu_custom_call.1} parent=11 // pred_check_branch
        %264 = sbr.rel (%p262) target = $region32
      $region31: #{tpu_custom_call.1} parent=11 // pred_region
        _
      $region32: #{tpu_custom_call.1} parent=11 // pred_fallthru
        _
      // Predicated region
      $region33: #{tpu_custom_call.1} parent=11 // pred_check
        %p265 = pneg %p167
      $region34: #{tpu_custom_call.1} parent=11 // pred_check_branch
        %267 = sbr.rel (%p265) target = $region36
      $region35: #{tpu_custom_call.1} parent=11 // pred_region
        _
      $region36: #{tpu_custom_call.1} parent=11 // pred_fallthru
        _
      // Predicated region
      $region37: #{tpu_custom_call.1} parent=11 // pred_check
        %p268 = pneg %p188
      $region38: #{tpu_custom_call.1} parent=11 // pred_check_branch
        %270 = sbr.rel (%p268) target = $region40
      $region39: #{tpu_custom_call.1} parent=11 // pred_region
        _
      $region40: #{tpu_custom_call.1} parent=11 // pred_fallthru
        _
      // Predicated region
      $region41: #{tpu_custom_call.1} parent=11 // pred_check
        %p271 = pneg %p209
      $region42: #{tpu_custom_call.1} parent=11 // pred_check_branch
        %273 = sbr.rel (%p271) target = $region44
      $region43: #{tpu_custom_call.1} parent=11 // pred_region
        _
      $region44: #{tpu_custom_call.1} parent=11 // pred_fallthru
        _
    $region12: #{tpu_custom_call.1} parent=5 // pred_fallthru
      _
    %p274 = scmp.lt.s32.totalorder %s15, 2
    // Predicated region
    $region45: #{tpu_custom_call.1} parent=5 // pred_check
      %p275 = pneg %p274
    $region46: #{tpu_custom_call.1} parent=5 // pred_check_branch
      %277 = sbr.rel (%p275) target = $region48
    $region47: #{tpu_custom_call.1} parent=5 // pred_region
      // Predicated region
      $region49: #{tpu_custom_call.1} parent=47 // pred_check
        %p278 = pneg %p35
      $region50: #{tpu_custom_call.1} parent=47 // pred_check_branch
        %280 = sbr.rel (%p278) target = $region52
      $region51: #{tpu_custom_call.1} parent=47 // pred_region
        %p281 = scmp.lt.s32.totalorder %s15, 1
        %s282 = scalar_select %p281, %s15, 1
        %s283 = smul.addr %s282, 16
        %s284 = smul.addr %s283, 8
        %s285 = scalar_lea.vmem %s0, %s284
      $region52: #{tpu_custom_call.1} parent=47 // pred_fallthru
        _
    $region48: #{tpu_custom_call.1} parent=5 // pred_fallthru
      _
    %p286 = scmp.le.s32.totalorder 1, %s15
    %p287 = scmp.lt.s32.totalorder %s15, 3
    %p288 = pnand %p286, %p287
    %p289 = pneg %p288
    // Predicated region
    $region53: #{tpu_custom_call.1} parent=5 // pred_check
      _
    $region54: #{tpu_custom_call.1} parent=5 // pred_check_branch
      %291 = sbr.rel (%p288) target = $region56
    $region55: #{tpu_custom_call.1} parent=5 // pred_region
      %s292 = ssub.s32 %s15, 1
      %p293 = scmp.lt.s32.totalorder %s20, 1
      %s294 = scalar_select %p293, %s20, 1
      %s295 = smul.addr %s294, 16
      %s296 = smul.addr %s295, 8
      %s297 = scalar_lea.vmem %s0, %s296
      %p298 = pneg %p41
      %p299 = pneg %p38
      %p300 = pneg %p62
      %p301 = pneg %p59
      %p302 = pneg %p83
      %p303 = pneg %p80
      %p304 = pneg %p104
      %p305 = pneg %p101
      %p306 = pneg %p125
      %p307 = pneg %p122
      %p308 = pneg %p146
      %p309 = pneg %p143
      %p310 = pneg %p167
      %p311 = pneg %p164
      %p312 = pneg %p188
      %p313 = pneg %p185
      %p314 = pneg %p209
      %p315 = pneg %p206
      %p316 = pneg %p235
      %p317 = pneg %p232
      %p318 = scmp.lt.s32.totalorder %s20, 1
      %s319 = scalar_select %p318, %s20, 1
      %s320 = smul.addr %s319, 16
      %s321 = smul.addr %s320, 8
      %s322 = scalar_lea.vmem %s9, %s321
      %p323 = scmp.lt.s32.totalorder %s20, 1
      %s324 = scalar_select %p323, %s20, 1
      %s325 = smul.addr %s324, 16
      %s326 = smul.addr %s325, 8
      %s327 = scalar_lea.vmem %s0, %s326
      %p328 = scmp.lt.s32.totalorder %s20, 1
      %s329 = scalar_select %p328, %s20, 1
      %s330 = smul.addr %s329, 16
      %s331 = smul.addr %s330, 8
      %s332 = scalar_lea.vmem %s9, %s331
      %v333 = vld [vmem:[%s327] sm:$0xff]
      %v334 = vld [vmem:[%s327 + $0x8] sm:$0xff]
      %v335 = vld [vmem:[%s327 + $0x10] sm:$0xff]
      %v336 = vld [vmem:[%s327 + $0x18] sm:$0xff]
      %v337 = vld [vmem:[%s327 + $0x20] sm:$0xff]
      %v338 = vld [vmem:[%s327 + $0x28] sm:$0xff]
      %v339 = vld [vmem:[%s327 + $0x30] sm:$0xff]
      %v340 = vld [vmem:[%s327 + $0x38] sm:$0xff]
      %v341 = vld [vmem:[%s327 + $0x40] sm:$0xff]
      %v342 = vld [vmem:[%s327 + $0x48] sm:$0xff]
      %v343 = vld [vmem:[%s327 + $0x50] sm:$0xff]
      %v344 = vld [vmem:[%s327 + $0x58] sm:$0xff]
      %v345 = vld [vmem:[%s327 + $0x60] sm:$0xff]
      %v346 = vld [vmem:[%s327 + $0x68] sm:$0xff]
      %v347 = vld [vmem:[%s327 + $0x70] sm:$0xff]
      %v348 = vld [vmem:[%s327 + $0x78] sm:$0xff]
      %vm349 = vcmask 261120
      %v350 = vsel %vm349, %v333, 0.0
      %351 = vadd.xlane.f32.xlu0 %v350
      %v352 = vpop.xlane.xlu0 %351
      %v353 = vsel %vm349, %v334, 0.0
      %354 = vadd.xlane.f32.xlu0 %v353
      %v355 = vpop.xlane.xlu0 %354
      %v356 = vsel %vm349, %v335, 0.0
      %357 = vadd.xlane.f32.xlu0 %v356
      %v358 = vpop.xlane.xlu0 %357
      %v359 = vsel %vm349, %v336, 0.0
      %360 = vadd.xlane.f32.xlu0 %v359
      %v361 = vpop.xlane.xlu0 %360
      %v362 = vsel %vm349, %v337, 0.0
      %363 = vadd.xlane.f32.xlu0 %v362
      %v364 = vpop.xlane.xlu0 %363
      %v365 = vsel %vm349, %v338, 0.0
      %366 = vadd.xlane.f32.xlu0 %v365
      %v367 = vpop.xlane.xlu0 %366
      %v368 = vsel %vm349, %v339, 0.0
      %369 = vadd.xlane.f32.xlu0 %v368
      %v370 = vpop.xlane.xlu0 %369
      %v371 = vsel %vm349, %v340, 0.0
      %372 = vadd.xlane.f32.xlu0 %v371
      %v373 = vpop.xlane.xlu0 %372
      %v374 = vsel %vm349, %v341, 0.0
      %375 = vadd.xlane.f32.xlu0 %v374
      %v376 = vpop.xlane.xlu0 %375
      %v377 = vsel %vm349, %v342, 0.0
      %378 = vadd.xlane.f32.xlu0 %v377
      %v379 = vpop.xlane.xlu0 %378
      %v380 = vsel %vm349, %v343, 0.0
      %381 = vadd.xlane.f32.xlu0 %v380
      %v382 = vpop.xlane.xlu0 %381
      %v383 = vsel %vm349, %v344, 0.0
      %384 = vadd.xlane.f32.xlu0 %v383
      %v385 = vpop.xlane.xlu0 %384
      %v386 = vsel %vm349, %v345, 0.0
      %387 = vadd.xlane.f32.xlu0 %v386
      %v388 = vpop.xlane.xlu0 %387
      %v389 = vsel %vm349, %v346, 0.0
      %390 = vadd.xlane.f32.xlu0 %v389
      %v391 = vpop.xlane.xlu0 %390
      %v392 = vsel %vm349, %v347, 0.0
      %393 = vadd.xlane.f32.xlu0 %v392
      %v394 = vpop.xlane.xlu0 %393
      %v395 = vsel %vm349, %v348, 0.0
      %396 = vadd.xlane.f32.xlu0 %v395
      %v397 = vpop.xlane.xlu0 %396
      %v398 = vrcp.pop 32.0
      %v399 = vmul.f32 %v352, %v398
      %v400 = vmul.f32 %v355, %v398
      %v401 = vmul.f32 %v358, %v398
      %v402 = vmul.f32 %v361, %v398
      %v403 = vmul.f32 %v364, %v398
      %v404 = vmul.f32 %v367, %v398
      %v405 = vmul.f32 %v370, %v398
      %v406 = vmul.f32 %v373, %v398
      %v407 = vmul.f32 %v376, %v398
      %v408 = vmul.f32 %v379, %v398
      %v409 = vmul.f32 %v382, %v398
      %v410 = vmul.f32 %v385, %v398
      %v411 = vmul.f32 %v388, %v398
      %v412 = vmul.f32 %v391, %v398
      %v413 = vmul.f32 %v394, %v398
      %v414 = vmul.f32 %v397, %v398
      %v415 = vsub.f32 %v333, %v399
      %v416 = vsub.f32 %v334, %v400
      %v417 = vsub.f32 %v335, %v401
      %v418 = vsub.f32 %v336, %v402
      %v419 = vsub.f32 %v337, %v403
      %v420 = vsub.f32 %v338, %v404
      %v421 = vsub.f32 %v339, %v405
      %v422 = vsub.f32 %v340, %v406
      %v423 = vsub.f32 %v341, %v407
      %v424 = vsub.f32 %v342, %v408
      %v425 = vsub.f32 %v343, %v409
      %v426 = vsub.f32 %v344, %v410
      %v427 = vsub.f32 %v345, %v411
      %v428 = vsub.f32 %v346, %v412
      %v429 = vsub.f32 %v347, %v413
      %v430 = vsub.f32 %v348, %v414
      %v431 = vmul.f32 %v415, %v415
      %v432 = vmul.f32 %v416, %v416
      %v433 = vmul.f32 %v417, %v417
      %v434 = vmul.f32 %v418, %v418
      %v435 = vmul.f32 %v419, %v419
      %v436 = vmul.f32 %v420, %v420
      %v437 = vmul.f32 %v421, %v421
      %v438 = vmul.f32 %v422, %v422
      %v439 = vmul.f32 %v423, %v423
      %v440 = vmul.f32 %v424, %v424
      %v441 = vmul.f32 %v425, %v425
      %v442 = vmul.f32 %v426, %v426
      %v443 = vmul.f32 %v427, %v427
      %v444 = vmul.f32 %v428, %v428
      %v445 = vmul.f32 %v429, %v429
      %v446 = vmul.f32 %v430, %v430
      %v447 = vsel %vm349, %v431, 0.0
      %448 = vadd.xlane.f32.xlu0 %v447
      %v449 = vpop.xlane.xlu0 %448
      %v450 = vsel %vm349, %v432, 0.0
      %451 = vadd.xlane.f32.xlu0 %v450
      %v452 = vpop.xlane.xlu0 %451
      %v453 = vsel %vm349, %v433, 0.0
      %454 = vadd.xlane.f32.xlu0 %v453
      %v455 = vpop.xlane.xlu0 %454
      %v456 = vsel %vm349, %v434, 0.0
      %457 = vadd.xlane.f32.xlu0 %v456
      %v458 = vpop.xlane.xlu0 %457
      %v459 = vsel %vm349, %v435, 0.0
      %460 = vadd.xlane.f32.xlu0 %v459
      %v461 = vpop.xlane.xlu0 %460
      %v462 = vsel %vm349, %v436, 0.0
      %463 = vadd.xlane.f32.xlu0 %v462
      %v464 = vpop.xlane.xlu0 %463
      %v465 = vsel %vm349, %v437, 0.0
      %466 = vadd.xlane.f32.xlu0 %v465
      %v467 = vpop.xlane.xlu0 %466
      %v468 = vsel %vm349, %v438, 0.0
      %469 = vadd.xlane.f32.xlu0 %v468
      %v470 = vpop.xlane.xlu0 %469
      %v471 = vsel %vm349, %v439, 0.0
      %472 = vadd.xlane.f32.xlu0 %v471
      %v473 = vpop.xlane.xlu0 %472
      %v474 = vsel %vm349, %v440, 0.0
      %475 = vadd.xlane.f32.xlu0 %v474
      %v476 = vpop.xlane.xlu0 %475
      %v477 = vsel %vm349, %v441, 0.0
      %478 = vadd.xlane.f32.xlu0 %v477
      %v479 = vpop.xlane.xlu0 %478
      %v480 = vsel %vm349, %v442, 0.0
      %481 = vadd.xlane.f32.xlu0 %v480
      %v482 = vpop.xlane.xlu0 %481
      %v483 = vsel %vm349, %v443, 0.0
      %484 = vadd.xlane.f32.xlu0 %v483
      %v485 = vpop.xlane.xlu0 %484
      %v486 = vsel %vm349, %v444, 0.0
      %487 = vadd.xlane.f32.xlu0 %v486
      %v488 = vpop.xlane.xlu0 %487
      %v489 = vsel %vm349, %v445, 0.0
      %490 = vadd.xlane.f32.xlu0 %v489
      %v491 = vpop.xlane.xlu0 %490
      %v492 = vsel %vm349, %v446, 0.0
      %493 = vadd.xlane.f32.xlu0 %v492
      %v494 = vpop.xlane.xlu0 %493
      %v495 = vmul.f32 %v449, %v398
      %v496 = vmul.f32 %v452, %v398
      %v497 = vmul.f32 %v455, %v398
      %v498 = vmul.f32 %v458, %v398
      %v499 = vmul.f32 %v461, %v398
      %v500 = vmul.f32 %v464, %v398
      %v501 = vmul.f32 %v467, %v398
      %v502 = vmul.f32 %v470, %v398
      %v503 = vmul.f32 %v473, %v398
      %v504 = vmul.f32 %v476, %v398
      %v505 = vmul.f32 %v479, %v398
      %v506 = vmul.f32 %v482, %v398
      %v507 = vmul.f32 %v485, %v398
      %v508 = vmul.f32 %v488, %v398
      %v509 = vmul.f32 %v491, %v398
      %v510 = vmul.f32 %v494, %v398
      %v511 = vadd.f32 %v495, 1e-05
      %v512 = vadd.f32 %v496, 1e-05
      %v513 = vadd.f32 %v497, 1e-05
      %v514 = vadd.f32 %v498, 1e-05
      %v515 = vadd.f32 %v499, 1e-05
      %v516 = vadd.f32 %v500, 1e-05
      %v517 = vadd.f32 %v501, 1e-05
      %v518 = vadd.f32 %v502, 1e-05
      %v519 = vadd.f32 %v503, 1e-05
      %v520 = vadd.f32 %v504, 1e-05
      %v521 = vadd.f32 %v505, 1e-05
      %v522 = vadd.f32 %v506, 1e-05
      %v523 = vadd.f32 %v507, 1e-05
      %v524 = vadd.f32 %v508, 1e-05
      %v525 = vadd.f32 %v509, 1e-05
      %v526 = vadd.f32 %v510, 1e-05
      %v527 = vrsqrt.pop %v511
      %v528 = vrsqrt.pop %v512
      %v529 = vrsqrt.pop %v513
      %v530 = vrsqrt.pop %v514
      %v531 = vrsqrt.pop %v515
      %v532 = vrsqrt.pop %v516
      %v533 = vrsqrt.pop %v517
      %v534 = vrsqrt.pop %v518
      %v535 = vrsqrt.pop %v519
      %v536 = vrsqrt.pop %v520
      %v537 = vrsqrt.pop %v521
      %v538 = vrsqrt.pop %v522
      %v539 = vrsqrt.pop %v523
      %v540 = vrsqrt.pop %v524
      %v541 = vrsqrt.pop %v525
      %v542 = vrsqrt.pop %v526
      %v543 = vmul.f32 %v415, %v527
      %v544 = vmul.f32 %v416, %v528
      %v545 = vmul.f32 %v417, %v529
      %v546 = vmul.f32 %v418, %v530
      %v547 = vmul.f32 %v419, %v531
      %v548 = vmul.f32 %v420, %v532
      %v549 = vmul.f32 %v421, %v533
      %v550 = vmul.f32 %v422, %v534
      %v551 = vmul.f32 %v423, %v535
      %v552 = vmul.f32 %v424, %v536
      %v553 = vmul.f32 %v425, %v537
      %v554 = vmul.f32 %v426, %v538
      %v555 = vmul.f32 %v427, %v539
      %v556 = vmul.f32 %v428, %v540
      %v557 = vmul.f32 %v429, %v541
      %v558 = vmul.f32 %v430, %v542
      %v559 = vld [vmem:[%s5] sm:$0x1]
      %v561 = vlaneseq
      %v562 = vshrl.u32 %v561, 7
      %v563 = vsub.s32 0, %v562
      %v564 = vrot.slane %v559, %v563
      %v566 = vmul.f32 %v543, %v564
      %v567 = vmul.f32 %v544, %v564
      %v568 = vmul.f32 %v545, %v564
      %v569 = vmul.f32 %v546, %v564
      %v570 = vmul.f32 %v547, %v564
      %v571 = vmul.f32 %v548, %v564
      %v572 = vmul.f32 %v549, %v564
      %v573 = vmul.f32 %v550, %v564
      %v574 = vmul.f32 %v551, %v564
      %v575 = vmul.f32 %v552, %v564
      %v576 = vmul.f32 %v553, %v564
      %v577 = vmul.f32 %v554, %v564
      %v578 = vmul.f32 %v555, %v564
      %v579 = vmul.f32 %v556, %v564
      %v580 = vmul.f32 %v557, %v564
      %v581 = vmul.f32 %v558, %v564
      %v582 = vld [vmem:[%s6] sm:$0x1]
      %v584 = vlaneseq
      %v585 = vshrl.u32 %v584, 7
      %v586 = vsub.s32 0, %v585
      %v587 = vrot.slane %v582, %v586
      %v589 = vadd.f32 %v566, %v587
      %v590 = vadd.f32 %v567, %v587
      %v591 = vadd.f32 %v568, %v587
      %v592 = vadd.f32 %v569, %v587
      %v593 = vadd.f32 %v570, %v587
      %v594 = vadd.f32 %v571, %v587
      %v595 = vadd.f32 %v572, %v587
      %v596 = vadd.f32 %v573, %v587
      %v597 = vadd.f32 %v574, %v587
      %v598 = vadd.f32 %v575, %v587
      %v599 = vadd.f32 %v576, %v587
      %v600 = vadd.f32 %v577, %v587
      %v601 = vadd.f32 %v578, %v587
      %v602 = vadd.f32 %v579, %v587
      %v603 = vadd.f32 %v580, %v587
      %v604 = vadd.f32 %v581, %v587
      %v605 = vld [vmem:[%s1] sm:$0xff]
      %v606 = vld [vmem:[%s1 + $0x8] sm:$0xff]
      %v607 = vld [vmem:[%s1 + $0x10] sm:$0xff]
      %v608 = vld [vmem:[%s1 + $0x18] sm:$0xff]
      %v610 = vsel %vm349, %v589, 0
      %v613 = vsel %vm349, %v590, 0
      %v616 = vsel %vm349, %v591, 0
      %v619 = vsel %vm349, %v592, 0
      %v622 = vsel %vm349, %v593, 0
      %v625 = vsel %vm349, %v594, 0
      %v628 = vsel %vm349, %v595, 0
      %v631 = vsel %vm349, %v596, 0
      %v634 = vsel %vm349, %v597, 0
      %v637 = vsel %vm349, %v598, 0
      %v640 = vsel %vm349, %v599, 0
      %v643 = vsel %vm349, %v600, 0
      %v646 = vsel %vm349, %v601, 0
      %v649 = vsel %vm349, %v602, 0
      %v652 = vsel %vm349, %v603, 0
      %v655 = vsel %vm349, %v604, 0
      %657 = vmatprep.subr.mxu0 0.0
      %658 = vmatpush1.msra.mxu0 %v605
      %659 = vmatprep.subr.mxu0 0.0
      %660 = vmatpush1.msra.mxu0 %v606
      %661 = vmatprep.subr.mxu0 0.0
      %662 = vmatpush1.msra.mxu0 %v607
      %663 = vmatprep.subr.mxu0 0.0
      %664 = vmatpush1.msra.mxu0 %v608
      %665 = vmatprep.subr.mxu0 0.0
      %666 = vmatpush1.msra.mxu0 0.0
      %667 = vmatprep.subr.mxu0 0.0
      %668 = vmatpush1.msra.mxu0 0.0
      %669 = vmatprep.subr.mxu0 0.0
      %670 = vmatpush1.msra.mxu0 0.0
      %671 = vmatprep.subr.mxu0 0.0
      %672 = vmatpush1.msra.mxu0 0.0
      %673 = vmatprep.subr.mxu0 0.0
      %674 = vmatpush1.msra.mxu0 0.0
      %675 = vmatprep.subr.mxu0 0.0
      %676 = vmatpush1.msra.mxu0 0.0
      %677 = vmatprep.subr.mxu0 0.0
      %678 = vmatpush1.msra.mxu0 0.0
      %679 = vmatprep.subr.mxu0 0.0
      %680 = vmatpush1.msra.mxu0 0.0
      %681 = vmatprep.subr.mxu0 0.0
      %682 = vmatpush1.msra.mxu0 0.0
      %683 = vmatprep.subr.mxu0 0.0
      %684 = vmatpush1.msra.mxu0 0.0
      %685 = vmatprep.subr.mxu0 0.0
      %686 = vmatpush1.msra.mxu0 0.0
      %687 = vmatprep.subr.mxu0 0.0
      %688 = vmatpush1.msra.mxu0 0.0
      %689 = vmatprep.subr.mxu0 0.0
      %690 = vmatpush1.msra.mxu0 0.0
      %691 = vmatprep.subr.mxu0 0.0
      %692 = vmatpush1.msra.mxu0 0.0
      %693 = vmatprep.subr.mxu0 0.0
      %694 = vmatpush1.msra.mxu0 0.0
      %695 = vmatprep.subr.mxu0 0.0
      %696 = vmatpush1.msra.mxu0 0.0
      %697 = vmatprep.subr.mxu0 0.0
      %698 = vmatpush1.msra.mxu0 0.0
      %699 = vmatprep.subr.mxu0 0.0
      %700 = vmatpush1.msra.mxu0 0.0
      %701 = vmatprep.subr.mxu0 0.0
      %702 = vmatpush1.msra.mxu0 0.0
      %703 = vmatprep.subr.mxu0 0.0
      %704 = vmatpush1.msra.mxu0 0.0
      %705 = vmatprep.subr.mxu0 0.0
      %706 = vmatpush1.msra.mxu0 0.0
      %707 = vmatprep.subr.mxu0 0.0
      %708 = vmatpush1.msra.mxu0 0.0
      %709 = vmatprep.subr.mxu0 0.0
      %710 = vmatpush1.msra.mxu0 0.0
      %711 = vmatprep.subr.mxu0 0.0
      %712 = vmatpush1.msra.mxu0 0.0
      %713 = vmatprep.subr.mxu0 0.0
      %714 = vmatpush1.msra.mxu0 0.0
      %715 = vmatprep.subr.mxu0 0.0
      %716 = vmatpush1.msra.mxu0 0.0
      %717 = vmatprep.subr.mxu0 0.0
      %718 = vmatpush1.msra.mxu0 0.0
      %719 = vmatprep.subr.mxu0 0.0
      %720 = vmatpush1.msra.mxu0 0.0
      %721 = vmatprep.mubr.f32.mxu0 0.0
      %722 = vmatmul.mubr.f32.gmra.mrb[0].mxu0 %v610
      %v723 = vpop.f32.mrb[0].mxu0
      %v724 = vadd.f32 0.0, %v723
      %v725 = vpop.f32.mrb[0].mxu0
      %726 = vmatprep.mubr.f32.mxu0 0.0
      %727 = vmatmul.mubr.f32.gmra.mrb[0].mxu0 %v613
      %v728 = vpop.f32.mrb[0].mxu0
      %v729 = vadd.f32 0.0, %v728
      %v730 = vpop.f32.mrb[0].mxu0
      %731 = vmatprep.mubr.f32.mxu0 0.0
      %732 = vmatmul.mubr.f32.gmra.mrb[0].mxu0 %v616
      %v733 = vpop.f32.mrb[0].mxu0
      %v734 = vadd.f32 0.0, %v733
      %v735 = vpop.f32.mrb[0].mxu0
      %736 = vmatprep.mubr.f32.mxu0 0.0
      %737 = vmatmul.mubr.f32.gmra.mrb[0].mxu0 %v619
      %v738 = vpop.f32.mrb[0].mxu0
      %v739 = vadd.f32 0.0, %v738
      %v740 = vpop.f32.mrb[0].mxu0
      %741 = vmatprep.mubr.f32.mxu0 0.0
      %742 = vmatmul.mubr.f32.gmra.mrb[0].mxu0 %v622
      %v743 = vpop.f32.mrb[0].mxu0
      %v744 = vadd.f32 0.0, %v743
      %v745 = vpop.f32.mrb[0].mxu0
      %746 = vmatprep.mubr.f32.mxu0 0.0
      %747 = vmatmul.mubr.f32.gmra.mrb[0].mxu0 %v625
      %v748 = vpop.f32.mrb[0].mxu0
      %v749 = vadd.f32 0.0, %v748
      %v750 = vpop.f32.mrb[0].mxu0
      %751 = vmatprep.mubr.f32.mxu0 0.0
      %752 = vmatmul.mubr.f32.gmra.mrb[0].mxu0 %v628
      %v753 = vpop.f32.mrb[0].mxu0
      %v754 = vadd.f32 0.0, %v753
      %v755 = vpop.f32.mrb[0].mxu0
      %756 = vmatprep.mubr.f32.mxu0 0.0
      %757 = vmatmul.mubr.f32.gmra.mrb[0].mxu0 %v631
      %v758 = vpop.f32.mrb[0].mxu0
      %v759 = vadd.f32 0.0, %v758
      %v760 = vpop.f32.mrb[0].mxu0
      %761 = vmatprep.mubr.f32.mxu0 0.0
      %762 = vmatmul.mubr.f32.gmra.mrb[0].mxu0 %v634
      %v763 = vpop.f32.mrb[0].mxu0
      %v764 = vadd.f32 0.0, %v763
      %v765 = vpop.f32.mrb[0].mxu0
      %766 = vmatprep.mubr.f32.mxu0 0.0
      %767 = vmatmul.mubr.f32.gmra.mrb[0].mxu0 %v637
      %v768 = vpop.f32.mrb[0].mxu0
      %v769 = vadd.f32 0.0, %v768
      %v770 = vpop.f32.mrb[0].mxu0
      %771 = vmatprep.mubr.f32.mxu0 0.0
      %772 = vmatmul.mubr.f32.gmra.mrb[0].mxu0 %v640
      %v773 = vpop.f32.mrb[0].mxu0
      %v774 = vadd.f32 0.0, %v773
      %v775 = vpop.f32.mrb[0].mxu0
      %776 = vmatprep.mubr.f32.mxu0 0.0
      %777 = vmatmul.mubr.f32.gmra.mrb[0].mxu0 %v643
      %v778 = vpop.f32.mrb[0].mxu0
      %v779 = vadd.f32 0.0, %v778
      %v780 = vpop.f32.mrb[0].mxu0
      %781 = vmatprep.mubr.f32.mxu0 0.0
      %782 = vmatmul.mubr.f32.gmra.mrb[0].mxu0 %v646
      %v783 = vpop.f32.mrb[0].mxu0
      %v784 = vadd.f32 0.0, %v783
      %v785 = vpop.f32.mrb[0].mxu0
      %786 = vmatprep.mubr.f32.mxu0 0.0
      %787 = vmatmul.mubr.f32.gmra.mrb[0].mxu0 %v649
      %v788 = vpop.f32.mrb[0].mxu0
      %v789 = vadd.f32 0.0, %v788
      %v790 = vpop.f32.mrb[0].mxu0
      %791 = vmatprep.mubr.f32.mxu0 0.0
      %792 = vmatmul.mubr.f32.gmra.mrb[0].mxu0 %v652
      %v793 = vpop.f32.mrb[0].mxu0
      %v794 = vadd.f32 0.0, %v793
      %v795 = vpop.f32.mrb[0].mxu0
      %796 = vmatprep.mubr.f32.mxu0 0.0
      %797 = vmatmul.mubr.f32.gmra.mrb[0].mxu0 %v655
      %v798 = vpop.f32.mrb[0].mxu0
      %v799 = vadd.f32 0.0, %v798
      %v800 = vpop.f32.mrb[0].mxu0
      %801 = vdwg.mxu0
      %v802 = vlaneseq
      %v803 = vshrl.u32 %v802, 7
      %v804 = vadd.s32 %v803, 8
      %v805 = vadd.s32 %v803, 16
      %v806 = vadd.s32 %v803, 24
      %v807 = vadd.s32 %v803, 32
      %v808 = vadd.s32 %v803, 40
      %v809 = vadd.s32 %v803, 48
      %v810 = vadd.s32 %v803, 56
      %v811 = vadd.s32 %v803, 64
      %v812 = vadd.s32 %v803, 72
      %v813 = vadd.s32 %v803, 80
      %v814 = vadd.s32 %v803, 88
      %v815 = vadd.s32 %v803, 96
      %v816 = vadd.s32 %v803, 104
      %v817 = vadd.s32 %v803, 112
      %v818 = vadd.s32 %v803, 120
      %v819 = vlaneseq
      %v820 = vand.u32 %v819, 127
      %vm821 = vcmp.le.s32.totalorder %v820, %v803
      %vm822 = vcmp.le.s32.totalorder %v820, %v804
      %vm823 = vcmp.le.s32.totalorder %v820, %v805
      %vm824 = vcmp.le.s32.totalorder %v820, %v806
      %vm825 = vcmp.le.s32.totalorder %v820, %v807
      %vm826 = vcmp.le.s32.totalorder %v820, %v808
      %vm827 = vcmp.le.s32.totalorder %v820, %v809
      %vm828 = vcmp.le.s32.totalorder %v820, %v810
      %vm829 = vcmp.le.s32.totalorder %v820, %v811
      %vm830 = vcmp.le.s32.totalorder %v820, %v812
      %vm831 = vcmp.le.s32.totalorder %v820, %v813
      %vm832 = vcmp.le.s32.totalorder %v820, %v814
      %vm833 = vcmp.le.s32.totalorder %v820, %v815
      %vm834 = vcmp.le.s32.totalorder %v820, %v816
      %vm835 = vcmp.le.s32.totalorder %v820, %v817
      %vm836 = vcmp.le.s32.totalorder %v820, %v818
      %853 = vrot.lane.b32.xlu0 %v724, 96
      %v854 = vpop.permute.xlu0 %853
      %855 = vrot.lane.b32.xlu0 %v729, 96
      %v856 = vpop.permute.xlu0 %855
      %857 = vrot.lane.b32.xlu0 %v734, 96
      %v858 = vpop.permute.xlu0 %857
      %859 = vrot.lane.b32.xlu0 %v739, 96
      %v860 = vpop.permute.xlu0 %859
      %861 = vrot.lane.b32.xlu0 %v744, 96
      %v862 = vpop.permute.xlu0 %861
      %863 = vrot.lane.b32.xlu0 %v749, 96
      %v864 = vpop.permute.xlu0 %863
      %865 = vrot.lane.b32.xlu0 %v754, 96
      %v866 = vpop.permute.xlu0 %865
      %867 = vrot.lane.b32.xlu0 %v759, 96
      %v868 = vpop.permute.xlu0 %867
      %869 = vrot.lane.b32.xlu0 %v764, 96
      %v870 = vpop.permute.xlu0 %869
      %871 = vrot.lane.b32.xlu0 %v769, 96
      %v872 = vpop.permute.xlu0 %871
      %873 = vrot.lane.b32.xlu0 %v774, 96
      %v874 = vpop.permute.xlu0 %873
      %875 = vrot.lane.b32.xlu0 %v779, 96
      %v876 = vpop.permute.xlu0 %875
      %877 = vrot.lane.b32.xlu0 %v784, 96
      %v878 = vpop.permute.xlu0 %877
      %879 = vrot.lane.b32.xlu0 %v789, 96
      %v880 = vpop.permute.xlu0 %879
      %881 = vrot.lane.b32.xlu0 %v794, 96
      %v882 = vpop.permute.xlu0 %881
      %883 = vrot.lane.b32.xlu0 %v799, 96
      %v884 = vpop.permute.xlu0 %883
      %vm885 = vcmask 64512
      %v886 = vsel %vm885, %v724, 0
      %v888 = vsel %vm885, %v729, 0
      %v890 = vsel %vm885, %v734, 0
      %v892 = vsel %vm885, %v739, 0
      %v894 = vsel %vm885, %v744, 0
      %v896 = vsel %vm885, %v749, 0
      %v898 = vsel %vm885, %v754, 0
      %v900 = vsel %vm885, %v759, 0
      %v902 = vsel %vm885, %v764, 0
      %v904 = vsel %vm885, %v769, 0
      %v906 = vsel %vm885, %v774, 0
      %v908 = vsel %vm885, %v779, 0
      %v910 = vsel %vm885, %v784, 0
      %v912 = vsel %vm885, %v789, 0
      %v914 = vsel %vm885, %v794, 0
      %v916 = vsel %vm885, %v799, 0
      %v918 = vsel %vm885, %v854, 0
      %v920 = vsel %vm885, %v856, 0
      %v922 = vsel %vm885, %v858, 0
      %v924 = vsel %vm885, %v860, 0
      %v926 = vsel %vm885, %v862, 0
      %v928 = vsel %vm885, %v864, 0
      %v930 = vsel %vm885, %v866, 0
      %v932 = vsel %vm885, %v868, 0
      %v934 = vsel %vm885, %v870, 0
      %v936 = vsel %vm885, %v872, 0
      %v938 = vsel %vm885, %v874, 0
      %v940 = vsel %vm885, %v876, 0
      %v942 = vsel %vm885, %v878, 0
      %v944 = vsel %vm885, %v880, 0
      %v946 = vsel %vm885, %v882, 0
      %v948 = vsel %vm885, %v884, 0
      %950 = vmatprep.subr.mxu0 0.0
      %951 = vmatpush1.xpose.msra.mxu0 %v918
      %952 = vmatprep.subr.mxu0 0.0
      %953 = vmatpush1.xpose.msra.mxu0 %v920
      %954 = vmatprep.subr.mxu0 0.0
      %955 = vmatpush1.xpose.msra.mxu0 %v922
      %956 = vmatprep.subr.mxu0 0.0
      %957 = vmatpush1.xpose.msra.mxu0 %v924
      %958 = vmatprep.subr.mxu0 0.0
      %959 = vmatpush1.xpose.msra.mxu0 %v926
      %960 = vmatprep.subr.mxu0 0.0
      %961 = vmatpush1.xpose.msra.mxu0 %v928
      %962 = vmatprep.subr.mxu0 0.0
      %963 = vmatpush1.xpose.msra.mxu0 %v930
      %964 = vmatprep.subr.mxu0 0.0
      %965 = vmatpush1.xpose.msra.mxu0 %v932
      %966 = vmatprep.subr.mxu0 0.0
      %967 = vmatpush1.xpose.msra.mxu0 %v934
      %968 = vmatprep.subr.mxu0 0.0
      %969 = vmatpush1.xpose.msra.mxu0 %v936
      %970 = vmatprep.subr.mxu0 0.0
      %971 = vmatpush1.xpose.msra.mxu0 %v938
      %972 = vmatprep.subr.mxu0 0.0
      %973 = vmatpush1.xpose.msra.mxu0 %v940
      %974 = vmatprep.subr.mxu0 0.0
      %975 = vmatpush1.xpose.msra.mxu0 %v942
      %976 = vmatprep.subr.mxu0 0.0
      %977 = vmatpush1.xpose.msra.mxu0 %v944
      %978 = vmatprep.subr.mxu0 0.0
      %979 = vmatpush1.xpose.msra.mxu0 %v946
      %980 = vmatprep.subr.mxu0 0.0
      %981 = vmatpush1.xpose.msra.mxu0 %v948
      %982 = vmatprep.subr.mxu0 0.0
      %983 = vmatpush1.xpose.msra.mxu0 0.0
      %984 = vmatprep.subr.mxu0 0.0
      %985 = vmatpush1.xpose.msra.mxu0 0.0
      %986 = vmatprep.subr.mxu0 0.0
      %987 = vmatpush1.xpose.msra.mxu0 0.0
      %988 = vmatprep.subr.mxu0 0.0
      %989 = vmatpush1.xpose.msra.mxu0 0.0
      %990 = vmatprep.subr.mxu0 0.0
      %991 = vmatpush1.xpose.msra.mxu0 0.0
      %992 = vmatprep.subr.mxu0 0.0
      %993 = vmatpush1.xpose.msra.mxu0 0.0
      %994 = vmatprep.subr.mxu0 0.0
      %995 = vmatpush1.xpose.msra.mxu0 0.0
      %996 = vmatprep.subr.mxu0 0.0
      %997 = vmatpush1.xpose.msra.mxu0 0.0
      %998 = vmatprep.subr.mxu0 0.0
      %999 = vmatpush1.xpose.msra.mxu0 0.0
      %1000 = vmatprep.subr.mxu0 0.0
      %1001 = vmatpush1.xpose.msra.mxu0 0.0
      %1002 = vmatprep.subr.mxu0 0.0
      %1003 = vmatpush1.xpose.msra.mxu0 0.0
      %1004 = vmatprep.subr.mxu0 0.0
      %1005 = vmatpush1.xpose.msra.mxu0 0.0
      %1006 = vmatprep.subr.mxu0 0.0
      %1007 = vmatpush1.xpose.msra.mxu0 0.0
      %1008 = vmatprep.subr.mxu0 0.0
      %1009 = vmatpush1.xpose.msra.mxu0 0.0
      %1010 = vmatprep.subr.mxu0 0.0
      %1011 = vmatpush1.xpose.msra.mxu0 0.0
      %1012 = vmatprep.subr.mxu0 0.0
      %1013 = vmatpush1.xpose.msra.mxu0 0.0
      %1014 = vmatprep.mubr.f32.mxu0 0.0
      %1015 = vmatmul.mubr.f32.gmra.mrb[0].mxu0 %v886
      %v1016 = vpop.f32.mrb[0].mxu0
      %v1017 = vadd.f32 0.0, %v1016
      %v1018 = vpop.f32.mrb[0].mxu0
      %1019 = vmatprep.mubr.f32.mxu0 0.0
      %1020 = vmatmul.mubr.f32.gmra.mrb[0].mxu0 %v888
      %v1021 = vpop.f32.mrb[0].mxu0
      %v1022 = vadd.f32 0.0, %v1021
      %v1023 = vpop.f32.mrb[0].mxu0
      %1024 = vmatprep.mubr.f32.mxu0 0.0
      %1025 = vmatmul.mubr.f32.gmra.mrb[0].mxu0 %v890
      %v1026 = vpop.f32.mrb[0].mxu0
      %v1027 = vadd.f32 0.0, %v1026
      %v1028 = vpop.f32.mrb[0].mxu0
      %1029 = vmatprep.mubr.f32.mxu0 0.0
      %1030 = vmatmul.mubr.f32.gmra.mrb[0].mxu0 %v892
      %v1031 = vpop.f32.mrb[0].mxu0
      %v1032 = vadd.f32 0.0, %v1031
      %v1033 = vpop.f32.mrb[0].mxu0
      %1034 = vmatprep.mubr.f32.mxu0 0.0
      %1035 = vmatmul.mubr.f32.gmra.mrb[0].mxu0 %v894
      %v1036 = vpop.f32.mrb[0].mxu0
      %v1037 = vadd.f32 0.0, %v1036
      %v1038 = vpop.f32.mrb[0].mxu0
      %1039 = vmatprep.mubr.f32.mxu0 0.0
      %1040 = vmatmul.mubr.f32.gmra.mrb[0].mxu0 %v896
      %v1041 = vpop.f32.mrb[0].mxu0
      %v1042 = vadd.f32 0.0, %v1041
      %v1043 = vpop.f32.mrb[0].mxu0
      %1044 = vmatprep.mubr.f32.mxu0 0.0
      %1045 = vmatmul.mubr.f32.gmra.mrb[0].mxu0 %v898
      %v1046 = vpop.f32.mrb[0].mxu0
      %v1047 = vadd.f32 0.0, %v1046
      %v1048 = vpop.f32.mrb[0].mxu0
      %1049 = vmatprep.mubr.f32.mxu0 0.0
      %1050 = vmatmul.mubr.f32.gmra.mrb[0].mxu0 %v900
      %v1051 = vpop.f32.mrb[0].mxu0
      %v1052 = vadd.f32 0.0, %v1051
      %v1053 = vpop.f32.mrb[0].mxu0
      %1054 = vmatprep.mubr.f32.mxu0 0.0
      %1055 = vmatmul.mubr.f32.gmra.mrb[0].mxu0 %v902
      %v1056 = vpop.f32.mrb[0].mxu0
      %v1057 = vadd.f32 0.0, %v1056
      %v1058 = vpop.f32.mrb[0].mxu0
      %1059 = vmatprep.mubr.f32.mxu0 0.0
      %1060 = vmatmul.mubr.f32.gmra.mrb[0].mxu0 %v904
      %v1061 = vpop.f32.mrb[0].mxu0
      %v1062 = vadd.f32 0.0, %v1061
      %v1063 = vpop.f32.mrb[0].mxu0
      %1064 = vmatprep.mubr.f32.mxu0 0.0
      %1065 = vmatmul.mubr.f32.gmra.mrb[0].mxu0 %v906
      %v1066 = vpop.f32.mrb[0].mxu0
      %v1067 = vadd.f32 0.0, %v1066
      %v1068 = vpop.f32.mrb[0].mxu0
      %1069 = vmatprep.mubr.f32.mxu0 0.0
      %1070 = vmatmul.mubr.f32.gmra.mrb[0].mxu0 %v908
      %v1071 = vpop.f32.mrb[0].mxu0
      %v1072 = vadd.f32 0.0, %v1071
      %v1073 = vpop.f32.mrb[0].mxu0
      %1074 = vmatprep.mubr.f32.mxu0 0.0
      %1075 = vmatmul.mubr.f32.gmra.mrb[0].mxu0 %v910
      %v1076 = vpop.f32.mrb[0].mxu0
      %v1077 = vadd.f32 0.0, %v1076
      %v1078 = vpop.f32.mrb[0].mxu0
      %1079 = vmatprep.mubr.f32.mxu0 0.0
      %1080 = vmatmul.mubr.f32.gmra.mrb[0].mxu0 %v912
      %v1081 = vpop.f32.mrb[0].mxu0
      %v1082 = vadd.f32 0.0, %v1081
      %v1083 = vpop.f32.mrb[0].mxu0
      %1084 = vmatprep.mubr.f32.mxu0 0.0
      %1085 = vmatmul.mubr.f32.gmra.mrb[0].mxu0 %v914
      %v1086 = vpop.f32.mrb[0].mxu0
      %v1087 = vadd.f32 0.0, %v1086
      %v1088 = vpop.f32.mrb[0].mxu0
      %1089 = vmatprep.mubr.f32.mxu0 0.0
      %1090 = vmatmul.mubr.f32.gmra.mrb[0].mxu0 %v916
      %v1091 = vpop.f32.mrb[0].mxu0
      %v1092 = vadd.f32 0.0, %v1091
      %v1093 = vpop.f32.mrb[0].mxu0
      %1094 = vdwg.mxu0
      %v1095 = vmul.f32 %v1017, 0.35355338
      %v1096 = vmul.f32 %v1022, 0.35355338
      %v1097 = vmul.f32 %v1027, 0.35355338
      %v1098 = vmul.f32 %v1032, 0.35355338
      %v1099 = vmul.f32 %v1037, 0.35355338
      %v1100 = vmul.f32 %v1042, 0.35355338
      %v1101 = vmul.f32 %v1047, 0.35355338
      %v1102 = vmul.f32 %v1052, 0.35355338
      %v1103 = vmul.f32 %v1057, 0.35355338
      %v1104 = vmul.f32 %v1062, 0.35355338
      %v1105 = vmul.f32 %v1067, 0.35355338
      %v1106 = vmul.f32 %v1072, 0.35355338
      %v1107 = vmul.f32 %v1077, 0.35355338
      %v1108 = vmul.f32 %v1082, 0.35355338
      %v1109 = vmul.f32 %v1087, 0.35355338
      %v1110 = vmul.f32 %v1092, 0.35355338
      %v1111 = vsel %vm821, %v1095, -inf
      %v1112 = vsel %vm822, %v1096, -inf
      %v1113 = vsel %vm823, %v1097, -inf
      %v1114 = vsel %vm824, %v1098, -inf
      %v1115 = vsel %vm825, %v1099, -inf
      %v1116 = vsel %vm826, %v1100, -inf
      %v1117 = vsel %vm827, %v1101, -inf
      %v1118 = vsel %vm828, %v1102, -inf
      %v1119 = vsel %vm829, %v1103, -inf
      %v1120 = vsel %vm830, %v1104, -inf
      %v1121 = vsel %vm831, %v1105, -inf
      %v1122 = vsel %vm832, %v1106, -inf
      %v1123 = vsel %vm833, %v1107, -inf
      %v1124 = vsel %vm834, %v1108, -inf
      %v1125 = vsel %vm835, %v1109, -inf
      %v1126 = vsel %vm836, %v1110, -inf
      %1127 = vmax.xlane.f32.xlu0 %v1111
      %v1128 = vpop.xlane.xlu0 %1127
      %1129 = vmax.xlane.f32.xlu0 %v1112
      %v1130 = vpop.xlane.xlu0 %1129
      %1131 = vmax.xlane.f32.xlu0 %v1113
      %v1132 = vpop.xlane.xlu0 %1131
      %1133 = vmax.xlane.f32.xlu0 %v1114
      %v1134 = vpop.xlane.xlu0 %1133
      %1135 = vmax.xlane.f32.xlu0 %v1115
      %v1136 = vpop.xlane.xlu0 %1135
      %1137 = vmax.xlane.f32.xlu0 %v1116
      %v1138 = vpop.xlane.xlu0 %1137
      %1139 = vmax.xlane.f32.xlu0 %v1117
      %v1140 = vpop.xlane.xlu0 %1139
      %1141 = vmax.xlane.f32.xlu0 %v1118
      %v1142 = vpop.xlane.xlu0 %1141
      %1143 = vmax.xlane.f32.xlu0 %v1119
      %v1144 = vpop.xlane.xlu0 %1143
      %1145 = vmax.xlane.f32.xlu0 %v1120
      %v1146 = vpop.xlane.xlu0 %1145
      %1147 = vmax.xlane.f32.xlu0 %v1121
      %v1148 = vpop.xlane.xlu0 %1147
      %1149 = vmax.xlane.f32.xlu0 %v1122
      %v1150 = vpop.xlane.xlu0 %1149
      %1151 = vmax.xlane.f32.xlu0 %v1123
      %v1152 = vpop.xlane.xlu0 %1151
      %1153 = vmax.xlane.f32.xlu0 %v1124
      %v1154 = vpop.xlane.xlu0 %1153
      %1155 = vmax.xlane.f32.xlu0 %v1125
      %v1156 = vpop.xlane.xlu0 %1155
      %1157 = vmax.xlane.f32.xlu0 %v1126
      %v1158 = vpop.xlane.xlu0 %1157
      %v1159 = vsub.f32 %v1111, %v1128
      %v1160 = vsub.f32 %v1112, %v1130
      %v1161 = vsub.f32 %v1113, %v1132
      %v1162 = vsub.f32 %v1114, %v1134
      %v1163 = vsub.f32 %v1115, %v1136
      %v1164 = vsub.f32 %v1116, %v1138
      %v1165 = vsub.f32 %v1117, %v1140
      %v1166 = vsub.f32 %v1118, %v1142
      %v1167 = vsub.f32 %v1119, %v1144
      %v1168 = vsub.f32 %v1120, %v1146
      %v1169 = vsub.f32 %v1121, %v1148
      %v1170 = vsub.f32 %v1122, %v1150
      %v1171 = vsub.f32 %v1123, %v1152
      %v1172 = vsub.f32 %v1124, %v1154
      %v1173 = vsub.f32 %v1125, %v1156
      %v1174 = vsub.f32 %v1126, %v1158
      %v1175 = vmul.f32 %v1159, 1.442695
      %v1176 = vpow.pop %v1175
      %v1177 = vmul.f32 %v1160, 1.442695
      %v1178 = vpow.pop %v1177
      %v1179 = vmul.f32 %v1161, 1.442695
      %v1180 = vpow.pop %v1179
      %v1181 = vmul.f32 %v1162, 1.442695
      %v1182 = vpow.pop %v1181
      %v1183 = vmul.f32 %v1163, 1.442695
      %v1184 = vpow.pop %v1183
      %v1185 = vmul.f32 %v1164, 1.442695
      %v1186 = vpow.pop %v1185
      %v1187 = vmul.f32 %v1165, 1.442695
      %v1188 = vpow.pop %v1187
      %v1189 = vmul.f32 %v1166, 1.442695
      %v1190 = vpow.pop %v1189
      %v1191 = vmul.f32 %v1167, 1.442695
      %v1192 = vpow.pop %v1191
      %v1193 = vmul.f32 %v1168, 1.442695
      %v1194 = vpow.pop %v1193
      %v1195 = vmul.f32 %v1169, 1.442695
      %v1196 = vpow.pop %v1195
      %v1197 = vmul.f32 %v1170, 1.442695
      %v1198 = vpow.pop %v1197
      %v1199 = vmul.f32 %v1171, 1.442695
      %v1200 = vpow.pop %v1199
      %v1201 = vmul.f32 %v1172, 1.442695
      %v1202 = vpow.pop %v1201
      %v1203 = vmul.f32 %v1173, 1.442695
      %v1204 = vpow.pop %v1203
      %v1205 = vmul.f32 %v1174, 1.442695
      %v1206 = vpow.pop %v1205
      %1207 = vadd.xlane.f32.xlu0 %v1176
      %v1208 = vpop.xlane.xlu0 %1207
      %1209 = vadd.xlane.f32.xlu0 %v1178
      %v1210 = vpop.xlane.xlu0 %1209
      %1211 = vadd.xlane.f32.xlu0 %v1180
      %v1212 = vpop.xlane.xlu0 %1211
      %1213 = vadd.xlane.f32.xlu0 %v1182
      %v1214 = vpop.xlane.xlu0 %1213
      %1215 = vadd.xlane.f32.xlu0 %v1184
      %v1216 = vpop.xlane.xlu0 %1215
      %1217 = vadd.xlane.f32.xlu0 %v1186
      %v1218 = vpop.xlane.xlu0 %1217
      %1219 = vadd.xlane.f32.xlu0 %v1188
      %v1220 = vpop.xlane.xlu0 %1219
      %1221 = vadd.xlane.f32.xlu0 %v1190
      %v1222 = vpop.xlane.xlu0 %1221
      %1223 = vadd.xlane.f32.xlu0 %v1192
      %v1224 = vpop.xlane.xlu0 %1223
      %1225 = vadd.xlane.f32.xlu0 %v1194
      %v1226 = vpop.xlane.xlu0 %1225
      %1227 = vadd.xlane.f32.xlu0 %v1196
      %v1228 = vpop.xlane.xlu0 %1227
      %1229 = vadd.xlane.f32.xlu0 %v1198
      %v1230 = vpop.xlane.xlu0 %1229
      %1231 = vadd.xlane.f32.xlu0 %v1200
      %v1232 = vpop.xlane.xlu0 %1231
      %1233 = vadd.xlane.f32.xlu0 %v1202
      %v1234 = vpop.xlane.xlu0 %1233
      %1235 = vadd.xlane.f32.xlu0 %v1204
      %v1236 = vpop.xlane.xlu0 %1235
      %1237 = vadd.xlane.f32.xlu0 %v1206
      %v1238 = vpop.xlane.xlu0 %1237
      %1239 = vrot.lane.b32.xlu0 %v724, 64
      %v1240 = vpop.permute.xlu0 %1239
      %1241 = vrot.lane.b32.xlu0 %v729, 64
      %v1242 = vpop.permute.xlu0 %1241
      %1243 = vrot.lane.b32.xlu0 %v734, 64
      %v1244 = vpop.permute.xlu0 %1243
      %1245 = vrot.lane.b32.xlu0 %v739, 64
      %v1246 = vpop.permute.xlu0 %1245
      %1247 = vrot.lane.b32.xlu0 %v744, 64
      %v1248 = vpop.permute.xlu0 %1247
      %1249 = vrot.lane.b32.xlu0 %v749, 64
      %v1250 = vpop.permute.xlu0 %1249
      %1251 = vrot.lane.b32.xlu0 %v754, 64
      %v1252 = vpop.permute.xlu0 %1251
      %1253 = vrot.lane.b32.xlu0 %v759, 64
      %v1254 = vpop.permute.xlu0 %1253
      %1255 = vrot.lane.b32.xlu0 %v764, 64
      %v1256 = vpop.permute.xlu0 %1255
      %1257 = vrot.lane.b32.xlu0 %v769, 64
      %v1258 = vpop.permute.xlu0 %1257
      %1259 = vrot.lane.b32.xlu0 %v774, 64
      %v1260 = vpop.permute.xlu0 %1259
      %1261 = vrot.lane.b32.xlu0 %v779, 64
      %v1262 = vpop.permute.xlu0 %1261
      %1263 = vrot.lane.b32.xlu0 %v784, 64
      %v1264 = vpop.permute.xlu0 %1263
      %1265 = vrot.lane.b32.xlu0 %v789, 64
      %v1266 = vpop.permute.xlu0 %1265
      %1267 = vrot.lane.b32.xlu0 %v794, 64
      %v1268 = vpop.permute.xlu0 %1267
      %1269 = vrot.lane.b32.xlu0 %v799, 64
      %v1270 = vpop.permute.xlu0 %1269
      %1287 = vmatprep.subr.mxu0 0.0
      %1288 = vmatpush1.msra.mxu0 %v1240
      %1289 = vmatprep.subr.mxu0 0.0
      %1290 = vmatpush1.msra.mxu0 %v1242
      %1291 = vmatprep.subr.mxu0 0.0
      %1292 = vmatpush1.msra.mxu0 %v1244
      %1293 = vmatprep.subr.mxu0 0.0
      %1294 = vmatpush1.msra.mxu0 %v1246
      %1295 = vmatprep.subr.mxu0 0.0
      %1296 = vmatpush1.msra.mxu0 %v1248
      %1297 = vmatprep.subr.mxu0 0.0
      %1298 = vmatpush1.msra.mxu0 %v1250
      %1299 = vmatprep.subr.mxu0 0.0
      %1300 = vmatpush1.msra.mxu0 %v1252
      %1301 = vmatprep.subr.mxu0 0.0
      %1302 = vmatpush1.msra.mxu0 %v1254
      %1303 = vmatprep.subr.mxu0 0.0
      %1304 = vmatpush1.msra.mxu0 %v1256
      %1305 = vmatprep.subr.mxu0 0.0
      %1306 = vmatpush1.msra.mxu0 %v1258
      %1307 = vmatprep.subr.mxu0 0.0
      %1308 = vmatpush1.msra.mxu0 %v1260
      %1309 = vmatprep.subr.mxu0 0.0
      %1310 = vmatpush1.msra.mxu0 %v1262
      %1311 = vmatprep.subr.mxu0 0.0
      %1312 = vmatpush1.msra.mxu0 %v1264
      %1313 = vmatprep.subr.mxu0 0.0
      %1314 = vmatpush1.msra.mxu0 %v1266
      %1315 = vmatprep.subr.mxu0 0.0
      %1316 = vmatpush1.msra.mxu0 %v1268
      %1317 = vmatprep.subr.mxu0 0.0
      %1318 = vmatpush1.msra.mxu0 %v1270
      %1319 = vmatprep.subr.mxu0 0.0
      %1320 = vmatpush1.msra.mxu0 0.0
      %1321 = vmatprep.subr.mxu0 0.0
      %1322 = vmatpush1.msra.mxu0 0.0
      %1323 = vmatprep.subr.mxu0 0.0
      %1324 = vmatpush1.msra.mxu0 0.0
      %1325 = vmatprep.subr.mxu0 0.0
      %1326 = vmatpush1.msra.mxu0 0.0
      %1327 = vmatprep.subr.mxu0 0.0
      %1328 = vmatpush1.msra.mxu0 0.0
      %1329 = vmatprep.subr.mxu0 0.0
      %1330 = vmatpush1.msra.mxu0 0.0
      %1331 = vmatprep.subr.mxu0 0.0
      %1332 = vmatpush1.msra.mxu0 0.0
      %1333 = vmatprep.subr.mxu0 0.0
      %1334 = vmatpush1.msra.mxu0 0.0
      %1335 = vmatprep.subr.mxu0 0.0
      %1336 = vmatpush1.msra.mxu0 0.0
      %1337 = vmatprep.subr.mxu0 0.0
      %1338 = vmatpush1.msra.mxu0 0.0
      %1339 = vmatprep.subr.mxu0 0.0
      %1340 = vmatpush1.msra.mxu0 0.0
      %1341 = vmatprep.subr.mxu0 0.0
      %1342 = vmatpush1.msra.mxu0 0.0
      %1343 = vmatprep.subr.mxu0 0.0
      %1344 = vmatpush1.msra.mxu0 0.0
      %1345 = vmatprep.subr.mxu0 0.0
      %1346 = vmatpush1.msra.mxu0 0.0
      %1347 = vmatprep.subr.mxu0 0.0
      %1348 = vmatpush1.msra.mxu0 0.0
      %1349 = vmatprep.subr.mxu0 0.0
      %1350 = vmatpush1.msra.mxu0 0.0
      %1351 = vmatprep.mubr.f32.mxu0 0.0
      %1352 = vmatmul.mubr.f32.gmra.mrb[0].mxu0 %v1176
      %v1353 = vpop.f32.mrb[0].mxu0
      %v1354 = vadd.f32 0.0, %v1353
      %v1355 = vpop.f32.mrb[0].mxu0
      %1356 = vmatprep.mubr.f32.mxu0 0.0
      %1357 = vmatmul.mubr.f32.gmra.mrb[0].mxu0 %v1178
      %v1358 = vpop.f32.mrb[0].mxu0
      %v1359 = vadd.f32 0.0, %v1358
      %v1360 = vpop.f32.mrb[0].mxu0
      %1361 = vmatprep.mubr.f32.mxu0 0.0
      %1362 = vmatmul.mubr.f32.gmra.mrb[0].mxu0 %v1180
      %v1363 = vpop.f32.mrb[0].mxu0
      %v1364 = vadd.f32 0.0, %v1363
      %v1365 = vpop.f32.mrb[0].mxu0
      %1366 = vmatprep.mubr.f32.mxu0 0.0
      %1367 = vmatmul.mubr.f32.gmra.mrb[0].mxu0 %v1182
      %v1368 = vpop.f32.mrb[0].mxu0
      %v1369 = vadd.f32 0.0, %v1368
      %v1370 = vpop.f32.mrb[0].mxu0
      %1371 = vmatprep.mubr.f32.mxu0 0.0
      %1372 = vmatmul.mubr.f32.gmra.mrb[0].mxu0 %v1184
      %v1373 = vpop.f32.mrb[0].mxu0
      %v1374 = vadd.f32 0.0, %v1373
      %v1375 = vpop.f32.mrb[0].mxu0
      %1376 = vmatprep.mubr.f32.mxu0 0.0
      %1377 = vmatmul.mubr.f32.gmra.mrb[0].mxu0 %v1186
      %v1378 = vpop.f32.mrb[0].mxu0
      %v1379 = vadd.f32 0.0, %v1378
      %v1380 = vpop.f32.mrb[0].mxu0
      %1381 = vmatprep.mubr.f32.mxu0 0.0
      %1382 = vmatmul.mubr.f32.gmra.mrb[0].mxu0 %v1188
      %v1383 = vpop.f32.mrb[0].mxu0
      %v1384 = vadd.f32 0.0, %v1383
      %v1385 = vpop.f32.mrb[0].mxu0
      %1386 = vmatprep.mubr.f32.mxu0 0.0
      %1387 = vmatmul.mubr.f32.gmra.mrb[0].mxu0 %v1190
      %v1388 = vpop.f32.mrb[0].mxu0
      %v1389 = vadd.f32 0.0, %v1388
      %v1390 = vpop.f32.mrb[0].mxu0
      %1391 = vmatprep.mubr.f32.mxu0 0.0
      %1392 = vmatmul.mubr.f32.gmra.mrb[0].mxu0 %v1192
      %v1393 = vpop.f32.mrb[0].mxu0
      %v1394 = vadd.f32 0.0, %v1393
      %v1395 = vpop.f32.mrb[0].mxu0
      %1396 = vmatprep.mubr.f32.mxu0 0.0
      %1397 = vmatmul.mubr.f32.gmra.mrb[0].mxu0 %v1194
      %v1398 = vpop.f32.mrb[0].mxu0
      %v1399 = vadd.f32 0.0, %v1398
      %v1400 = vpop.f32.mrb[0].mxu0
      %1401 = vmatprep.mubr.f32.mxu0 0.0
      %1402 = vmatmul.mubr.f32.gmra.mrb[0].mxu0 %v1196
      %v1403 = vpop.f32.mrb[0].mxu0
      %v1404 = vadd.f32 0.0, %v1403
      %v1405 = vpop.f32.mrb[0].mxu0
      %1406 = vmatprep.mubr.f32.mxu0 0.0
      %1407 = vmatmul.mubr.f32.gmra.mrb[0].mxu0 %v1198
      %v1408 = vpop.f32.mrb[0].mxu0
      %v1409 = vadd.f32 0.0, %v1408
      %v1410 = vpop.f32.mrb[0].mxu0
      %1411 = vmatprep.mubr.f32.mxu0 0.0
      %1412 = vmatmul.mubr.f32.gmra.mrb[0].mxu0 %v1200
      %v1413 = vpop.f32.mrb[0].mxu0
      %v1414 = vadd.f32 0.0, %v1413
      %v1415 = vpop.f32.mrb[0].mxu0
      %1416 = vmatprep.mubr.f32.mxu0 0.0
      %1417 = vmatmul.mubr.f32.gmra.mrb[0].mxu0 %v1202
      %v1418 = vpop.f32.mrb[0].mxu0
      %v1419 = vadd.f32 0.0, %v1418
      %v1420 = vpop.f32.mrb[0].mxu0
      %1421 = vmatprep.mubr.f32.mxu0 0.0
      %1422 = vmatmul.mubr.f32.gmra.mrb[0].mxu0 %v1204
      %v1423 = vpop.f32.mrb[0].mxu0
      %v1424 = vadd.f32 0.0, %v1423
      %v1425 = vpop.f32.mrb[0].mxu0
      %1426 = vmatprep.mubr.f32.mxu0 0.0
      %1427 = vmatmul.mubr.f32.gmra.mrb[0].mxu0 %v1206
      %v1428 = vpop.f32.mrb[0].mxu0
      %v1429 = vadd.f32 0.0, %v1428
      %v1430 = vpop.f32.mrb[0].mxu0
      %1431 = vdwg.mxu0
      %v1432 = vrcp.pop %v1208
      %v1433 = vrcp.pop %v1210
      %v1434 = vrcp.pop %v1212
      %v1435 = vrcp.pop %v1214
      %v1436 = vrcp.pop %v1216
      %v1437 = vrcp.pop %v1218
      %v1438 = vrcp.pop %v1220
      %v1439 = vrcp.pop %v1222
      %v1440 = vrcp.pop %v1224
      %v1441 = vrcp.pop %v1226
      %v1442 = vrcp.pop %v1228
      %v1443 = vrcp.pop %v1230
      %v1444 = vrcp.pop %v1232
      %v1445 = vrcp.pop %v1234
      %v1446 = vrcp.pop %v1236
      %v1447 = vrcp.pop %v1238
      %v1448 = vmul.f32 %v1354, %v1432
      %v1449 = vmul.f32 %v1359, %v1433
      %v1450 = vmul.f32 %v1364, %v1434
      %v1451 = vmul.f32 %v1369, %v1435
      %v1452 = vmul.f32 %v1374, %v1436
      %v1453 = vmul.f32 %v1379, %v1437
      %v1454 = vmul.f32 %v1384, %v1438
      %v1455 = vmul.f32 %v1389, %v1439
      %v1456 = vmul.f32 %v1394, %v1440
      %v1457 = vmul.f32 %v1399, %v1441
      %v1458 = vmul.f32 %v1404, %v1442
      %v1459 = vmul.f32 %v1409, %v1443
      %v1460 = vmul.f32 %v1414, %v1444
      %v1461 = vmul.f32 %v1419, %v1445
      %v1462 = vmul.f32 %v1424, %v1446
      %v1463 = vmul.f32 %v1429, %v1447
      %1464 = vrot.lane.b32.xlu0 %v724, 120
      %v1465 = vpop.permute.xlu0 %1464
      %1466 = vrot.lane.b32.xlu0 %v729, 120
      %v1467 = vpop.permute.xlu0 %1466
      %1468 = vrot.lane.b32.xlu0 %v734, 120
      %v1469 = vpop.permute.xlu0 %1468
      %1470 = vrot.lane.b32.xlu0 %v739, 120
      %v1471 = vpop.permute.xlu0 %1470
      %1472 = vrot.lane.b32.xlu0 %v744, 120
      %v1473 = vpop.permute.xlu0 %1472
      %1474 = vrot.lane.b32.xlu0 %v749, 120
      %v1475 = vpop.permute.xlu0 %1474
      %1476 = vrot.lane.b32.xlu0 %v754, 120
      %v1477 = vpop.permute.xlu0 %1476
      %1478 = vrot.lane.b32.xlu0 %v759, 120
      %v1479 = vpop.permute.xlu0 %1478
      %1480 = vrot.lane.b32.xlu0 %v764, 120
      %v1481 = vpop.permute.xlu0 %1480
      %1482 = vrot.lane.b32.xlu0 %v769, 120
      %v1483 = vpop.permute.xlu0 %1482
      %1484 = vrot.lane.b32.xlu0 %v774, 120
      %v1485 = vpop.permute.xlu0 %1484
      %1486 = vrot.lane.b32.xlu0 %v779, 120
      %v1487 = vpop.permute.xlu0 %1486
      %1488 = vrot.lane.b32.xlu0 %v784, 120
      %v1489 = vpop.permute.xlu0 %1488
      %1490 = vrot.lane.b32.xlu0 %v789, 120
      %v1491 = vpop.permute.xlu0 %1490
      %1492 = vrot.lane.b32.xlu0 %v794, 120
      %v1493 = vpop.permute.xlu0 %1492
      %1494 = vrot.lane.b32.xlu0 %v799, 120
      %v1495 = vpop.permute.xlu0 %1494
      %1496 = vrot.lane.b32.xlu0 %v724, 88
      %v1497 = vpop.permute.xlu0 %1496
      %1498 = vrot.lane.b32.xlu0 %v729, 88
      %v1499 = vpop.permute.xlu0 %1498
      %1500 = vrot.lane.b32.xlu0 %v734, 88
      %v1501 = vpop.permute.xlu0 %1500
      %1502 = vrot.lane.b32.xlu0 %v739, 88
      %v1503 = vpop.permute.xlu0 %1502
      %1504 = vrot.lane.b32.xlu0 %v744, 88
      %v1505 = vpop.permute.xlu0 %1504
      %1506 = vrot.lane.b32.xlu0 %v749, 88
      %v1507 = vpop.permute.xlu0 %1506
      %1508 = vrot.lane.b32.xlu0 %v754, 88
      %v1509 = vpop.permute.xlu0 %1508
      %1510 = vrot.lane.b32.xlu0 %v759, 88
      %v1511 = vpop.permute.xlu0 %1510
      %1512 = vrot.lane.b32.xlu0 %v764, 88
      %v1513 = vpop.permute.xlu0 %1512
      %1514 = vrot.lane.b32.xlu0 %v769, 88
      %v1515 = vpop.permute.xlu0 %1514
      %1516 = vrot.lane.b32.xlu0 %v774, 88
      %v1517 = vpop.permute.xlu0 %1516
      %1518 = vrot.lane.b32.xlu0 %v779, 88
      %v1519 = vpop.permute.xlu0 %1518
      %1520 = vrot.lane.b32.xlu0 %v784, 88
      %v1521 = vpop.permute.xlu0 %1520
      %1522 = vrot.lane.b32.xlu0 %v789, 88
      %v1523 = vpop.permute.xlu0 %1522
      %1524 = vrot.lane.b32.xlu0 %v794, 88
      %v1525 = vpop.permute.xlu0 %1524
      %1526 = vrot.lane.b32.xlu0 %v799, 88
      %v1527 = vpop.permute.xlu0 %1526
      %v1528 = vsel %vm885, %v1465, 0
      %v1530 = vsel %vm885, %v1467, 0
      %v1532 = vsel %vm885, %v1469, 0
      %v1534 = vsel %vm885, %v1471, 0
      %v1536 = vsel %vm885, %v1473, 0
      %v1538 = vsel %vm885, %v1475, 0
      %v1540 = vsel %vm885, %v1477, 0
      %v1542 = vsel %vm885, %v1479, 0
      %v1544 = vsel %vm885, %v1481, 0
      %v1546 = vsel %vm885, %v1483, 0
      %v1548 = vsel %vm885, %v1485, 0
      %v1550 = vsel %vm885, %v1487, 0
      %v1552 = vsel %vm885, %v1489, 0
      %v1554 = vsel %vm885, %v1491, 0
      %v1556 = vsel %vm885, %v1493, 0
      %v1558 = vsel %vm885, %v1495, 0
      %v1560 = vsel %vm885, %v1497, 0
      %v1562 = vsel %vm885, %v1499, 0
      %v1564 = vsel %vm885, %v1501, 0
      %v1566 = vsel %vm885, %v1503, 0
      %v1568 = vsel %vm885, %v1505, 0
      %v1570 = vsel %vm885, %v1507, 0
      %v1572 = vsel %vm885, %v1509, 0
      %v1574 = vsel %vm885, %v1511, 0
      %v1576 = vsel %vm885, %v1513, 0
      %v1578 = vsel %vm885, %v1515, 0
      %v1580 = vsel %vm885, %v1517, 0
      %v1582 = vsel %vm885, %v1519, 0
      %v1584 = vsel %vm885, %v1521, 0
      %v1586 = vsel %vm885, %v1523, 0
      %v1588 = vsel %vm885, %v1525, 0
      %v1590 = vsel %vm885, %v1527, 0
      %1592 = vmatprep.subr.mxu0 0.0
      %1593 = vmatpush1.xpose.msra.mxu0 %v1560
      %1594 = vmatprep.subr.mxu0 0.0
      %1595 = vmatpush1.xpose.msra.mxu0 %v1562
      %1596 = vmatprep.subr.mxu0 0.0
      %1597 = vmatpush1.xpose.msra.mxu0 %v1564
      %1598 = vmatprep.subr.mxu0 0.0
      %1599 = vmatpush1.xpose.msra.mxu0 %v1566
      %1600 = vmatprep.subr.mxu0 0.0
      %1601 = vmatpush1.xpose.msra.mxu0 %v1568
      %1602 = vmatprep.subr.mxu0 0.0
      %1603 = vmatpush1.xpose.msra.mxu0 %v1570
      %1604 = vmatprep.subr.mxu0 0.0
      %1605 = vmatpush1.xpose.msra.mxu0 %v1572
      %1606 = vmatprep.subr.mxu0 0.0
      %1607 = vmatpush1.xpose.msra.mxu0 %v1574
      %1608 = vmatprep.subr.mxu0 0.0
      %1609 = vmatpush1.xpose.msra.mxu0 %v1576
      %1610 = vmatprep.subr.mxu0 0.0
      %1611 = vmatpush1.xpose.msra.mxu0 %v1578
      %1612 = vmatprep.subr.mxu0 0.0
      %1613 = vmatpush1.xpose.msra.mxu0 %v1580
      %1614 = vmatprep.subr.mxu0 0.0
      %1615 = vmatpush1.xpose.msra.mxu0 %v1582
      %1616 = vmatprep.subr.mxu0 0.0
      %1617 = vmatpush1.xpose.msra.mxu0 %v1584
      %1618 = vmatprep.subr.mxu0 0.0
      %1619 = vmatpush1.xpose.msra.mxu0 %v1586
      %1620 = vmatprep.subr.mxu0 0.0
      %1621 = vmatpush1.xpose.msra.mxu0 %v1588
      %1622 = vmatprep.subr.mxu0 0.0
      %1623 = vmatpush1.xpose.msra.mxu0 %v1590
      %1624 = vmatprep.subr.mxu0 0.0
      %1625 = vmatpush1.xpose.msra.mxu0 0.0
      %1626 = vmatprep.subr.mxu0 0.0
      %1627 = vmatpush1.xpose.msra.mxu0 0.0
      %1628 = vmatprep.subr.mxu0 0.0
      %1629 = vmatpush1.xpose.msra.mxu0 0.0
      %1630 = vmatprep.subr.mxu0 0.0
      %1631 = vmatpush1.xpose.msra.mxu0 0.0
      %1632 = vmatprep.subr.mxu0 0.0
      %1633 = vmatpush1.xpose.msra.mxu0 0.0
      %1634 = vmatprep.subr.mxu0 0.0
      %1635 = vmatpush1.xpose.msra.mxu0 0.0
      %1636 = vmatprep.subr.mxu0 0.0
      %1637 = vmatpush1.xpose.msra.mxu0 0.0
      %1638 = vmatprep.subr.mxu0 0.0
      %1639 = vmatpush1.xpose.msra.mxu0 0.0
      %1640 = vmatprep.subr.mxu0 0.0
      %1641 = vmatpush1.xpose.msra.mxu0 0.0
      %1642 = vmatprep.subr.mxu0 0.0
      %1643 = vmatpush1.xpose.msra.mxu0 0.0
      %1644 = vmatprep.subr.mxu0 0.0
      %1645 = vmatpush1.xpose.msra.mxu0 0.0
      %1646 = vmatprep.subr.mxu0 0.0
      %1647 = vmatpush1.xpose.msra.mxu0 0.0
      %1648 = vmatprep.subr.mxu0 0.0
      %1649 = vmatpush1.xpose.msra.mxu0 0.0
      %1650 = vmatprep.subr.mxu0 0.0
      %1651 = vmatpush1.xpose.msra.mxu0 0.0
      %1652 = vmatprep.subr.mxu0 0.0
      %1653 = vmatpush1.xpose.msra.mxu0 0.0
      %1654 = vmatprep.subr.mxu0 0.0
      %1655 = vmatpush1.xpose.msra.mxu0 0.0
      %1656 = vmatprep.mubr.f32.mxu0 0.0
      %1657 = vmatmul.mubr.f32.gmra.mrb[0].mxu0 %v1528
      %v1658 = vpop.f32.mrb[0].mxu0
      %v1659 = vadd.f32 0.0, %v1658
      %v1660 = vpop.f32.mrb[0].mxu0
      %1661 = vmatprep.mubr.f32.mxu0 0.0
      %1662 = vmatmul.mubr.f32.gmra.mrb[0].mxu0 %v1530
      %v1663 = vpop.f32.mrb[0].mxu0
      %v1664 = vadd.f32 0.0, %v1663
      %v1665 = vpop.f32.mrb[0].mxu0
      %1666 = vmatprep.mubr.f32.mxu0 0.0
      %1667 = vmatmul.mubr.f32.gmra.mrb[0].mxu0 %v1532
      %v1668 = vpop.f32.mrb[0].mxu0
      %v1669 = vadd.f32 0.0, %v1668
      %v1670 = vpop.f32.mrb[0].mxu0
      %1671 = vmatprep.mubr.f32.mxu0 0.0
      %1672 = vmatmul.mubr.f32.gmra.mrb[0].mxu0 %v1534
      %v1673 = vpop.f32.mrb[0].mxu0
      %v1674 = vadd.f32 0.0, %v1673
      %v1675 = vpop.f32.mrb[0].mxu0
      %1676 = vmatprep.mubr.f32.mxu0 0.0
      %1677 = vmatmul.mubr.f32.gmra.mrb[0].mxu0 %v1536
      %v1678 = vpop.f32.mrb[0].mxu0
      %v1679 = vadd.f32 0.0, %v1678
      %v1680 = vpop.f32.mrb[0].mxu0
      %1681 = vmatprep.mubr.f32.mxu0 0.0
      %1682 = vmatmul.mubr.f32.gmra.mrb[0].mxu0 %v1538
      %v1683 = vpop.f32.mrb[0].mxu0
      %v1684 = vadd.f32 0.0, %v1683
      %v1685 = vpop.f32.mrb[0].mxu0
      %1686 = vmatprep.mubr.f32.mxu0 0.0
      %1687 = vmatmul.mubr.f32.gmra.mrb[0].mxu0 %v1540
      %v1688 = vpop.f32.mrb[0].mxu0
      %v1689 = vadd.f32 0.0, %v1688
      %v1690 = vpop.f32.mrb[0].mxu0
      %1691 = vmatprep.mubr.f32.mxu0 0.0
      %1692 = vmatmul.mubr.f32.gmra.mrb[0].mxu0 %v1542
      %v1693 = vpop.f32.mrb[0].mxu0
      %v1694 = vadd.f32 0.0, %v1693
      %v1695 = vpop.f32.mrb[0].mxu0
      %1696 = vmatprep.mubr.f32.mxu0 0.0
      %1697 = vmatmul.mubr.f32.gmra.mrb[0].mxu0 %v1544
      %v1698 = vpop.f32.mrb[0].mxu0
      %v1699 = vadd.f32 0.0, %v1698
      %v1700 = vpop.f32.mrb[0].mxu0
      %1701 = vmatprep.mubr.f32.mxu0 0.0
      %1702 = vmatmul.mubr.f32.gmra.mrb[0].mxu0 %v1546
      %v1703 = vpop.f32.mrb[0].mxu0
      %v1704 = vadd.f32 0.0, %v1703
      %v1705 = vpop.f32.mrb[0].mxu0
      %1706 = vmatprep.mubr.f32.mxu0 0.0
      %1707 = vmatmul.mubr.f32.gmra.mrb[0].mxu0 %v1548
      %v1708 = vpop.f32.mrb[0].mxu0
      %v1709 = vadd.f32 0.0, %v1708
      %v1710 = vpop.f32.mrb[0].mxu0
      %1711 = vmatprep.mubr.f32.mxu0 0.0
      %1712 = vmatmul.mubr.f32.gmra.mrb[0].mxu0 %v1550
      %v1713 = vpop.f32.mrb[0].mxu0
      %v1714 = vadd.f32 0.0, %v1713
      %v1715 = vpop.f32.mrb[0].mxu0
      %1716 = vmatprep.mubr.f32.mxu0 0.0
      %1717 = vmatmul.mubr.f32.gmra.mrb[0].mxu0 %v1552
      %v1718 = vpop.f32.mrb[0].mxu0
      %v1719 = vadd.f32 0.0, %v1718
      %v1720 = vpop.f32.mrb[0].mxu0
      %1721 = vmatprep.mubr.f32.mxu0 0.0
      %1722 = vmatmul.mubr.f32.gmra.mrb[0].mxu0 %v1554
      %v1723 = vpop.f32.mrb[0].mxu0
      %v1724 = vadd.f32 0.0, %v1723
      %v1725 = vpop.f32.mrb[0].mxu0
      %1726 = vmatprep.mubr.f32.mxu0 0.0
      %1727 = vmatmul.mubr.f32.gmra.mrb[0].mxu0 %v1556
      %v1728 = vpop.f32.mrb[0].mxu0
      %v1729 = vadd.f32 0.0, %v1728
      %v1730 = vpop.f32.mrb[0].mxu0
      %1731 = vmatprep.mubr.f32.mxu0 0.0
      %1732 = vmatmul.mubr.f32.gmra.mrb[0].mxu0 %v1558
      %v1733 = vpop.f32.mrb[0].mxu0
      %v1734 = vadd.f32 0.0, %v1733
      %v1735 = vpop.f32.mrb[0].mxu0
      %1736 = vdwg.mxu0
      %v1737 = vmul.f32 %v1659, 0.35355338
      %v1738 = vmul.f32 %v1664, 0.35355338
      %v1739 = vmul.f32 %v1669, 0.35355338
      %v1740 = vmul.f32 %v1674, 0.35355338
      %v1741 = vmul.f32 %v1679, 0.35355338
      %v1742 = vmul.f32 %v1684, 0.35355338
      %v1743 = vmul.f32 %v1689, 0.35355338
      %v1744 = vmul.f32 %v1694, 0.35355338
      %v1745 = vmul.f32 %v1699, 0.35355338
      %v1746 = vmul.f32 %v1704, 0.35355338
      %v1747 = vmul.f32 %v1709, 0.35355338
      %v1748 = vmul.f32 %v1714, 0.35355338
      %v1749 = vmul.f32 %v1719, 0.35355338
      %v1750 = vmul.f32 %v1724, 0.35355338
      %v1751 = vmul.f32 %v1729, 0.35355338
      %v1752 = vmul.f32 %v1734, 0.35355338
      %v1753 = vsel %vm821, %v1737, -inf
      %v1754 = vsel %vm822, %v1738, -inf
      %v1755 = vsel %vm823, %v1739, -inf
      %v1756 = vsel %vm824, %v1740, -inf
      %v1757 = vsel %vm825, %v1741, -inf
      %v1758 = vsel %vm826, %v1742, -inf
      %v1759 = vsel %vm827, %v1743, -inf
      %v1760 = vsel %vm828, %v1744, -inf
      %v1761 = vsel %vm829, %v1745, -inf
      %v1762 = vsel %vm830, %v1746, -inf
      %v1763 = vsel %vm831, %v1747, -inf
      %v1764 = vsel %vm832, %v1748, -inf
      %v1765 = vsel %vm833, %v1749, -inf
      %v1766 = vsel %vm834, %v1750, -inf
      %v1767 = vsel %vm835, %v1751, -inf
      %v1768 = vsel %vm836, %v1752, -inf
      %1769 = vmax.xlane.f32.xlu0 %v1753
      %v1770 = vpop.xlane.xlu0 %1769
      %1771 = vmax.xlane.f32.xlu0 %v1754
      %v1772 = vpop.xlane.xlu0 %1771
      %1773 = vmax.xlane.f32.xlu0 %v1755
      %v1774 = vpop.xlane.xlu0 %1773
      %1775 = vmax.xlane.f32.xlu0 %v1756
      %v1776 = vpop.xlane.xlu0 %1775
      %1777 = vmax.xlane.f32.xlu0 %v1757
      %v1778 = vpop.xlane.xlu0 %1777
      %1779 = vmax.xlane.f32.xlu0 %v1758
      %v1780 = vpop.xlane.xlu0 %1779
      %1781 = vmax.xlane.f32.xlu0 %v1759
      %v1782 = vpop.xlane.xlu0 %1781
      %1783 = vmax.xlane.f32.xlu0 %v1760
      %v1784 = vpop.xlane.xlu0 %1783
      %1785 = vmax.xlane.f32.xlu0 %v1761
      %v1786 = vpop.xlane.xlu0 %1785
      %1787 = vmax.xlane.f32.xlu0 %v1762
      %v1788 = vpop.xlane.xlu0 %1787
      %1789 = vmax.xlane.f32.xlu0 %v1763
      %v1790 = vpop.xlane.xlu0 %1789
      %1791 = vmax.xlane.f32.xlu0 %v1764
      %v1792 = vpop.xlane.xlu0 %1791
      %1793 = vmax.xlane.f32.xlu0 %v1765
      %v1794 = vpop.xlane.xlu0 %1793
      %1795 = vmax.xlane.f32.xlu0 %v1766
      %v1796 = vpop.xlane.xlu0 %1795
      %1797 = vmax.xlane.f32.xlu0 %v1767
      %v1798 = vpop.xlane.xlu0 %1797
      %1799 = vmax.xlane.f32.xlu0 %v1768
      %v1800 = vpop.xlane.xlu0 %1799
      %v1801 = vsub.f32 %v1753, %v1770
      %v1802 = vsub.f32 %v1754, %v1772
      %v1803 = vsub.f32 %v1755, %v1774
      %v1804 = vsub.f32 %v1756, %v1776
      %v1805 = vsub.f32 %v1757, %v1778
      %v1806 = vsub.f32 %v1758, %v1780
      %v1807 = vsub.f32 %v1759, %v1782
      %v1808 = vsub.f32 %v1760, %v1784
      %v1809 = vsub.f32 %v1761, %v1786
      %v1810 = vsub.f32 %v1762, %v1788
      %v1811 = vsub.f32 %v1763, %v1790
      %v1812 = vsub.f32 %v1764, %v1792
      %v1813 = vsub.f32 %v1765, %v1794
      %v1814 = vsub.f32 %v1766, %v1796
      %v1815 = vsub.f32 %v1767, %v1798
      %v1816 = vsub.f32 %v1768, %v1800
      %v1817 = vmul.f32 %v1801, 1.442695
      %v1818 = vpow.pop %v1817
      %v1819 = vmul.f32 %v1802, 1.442695
      %v1820 = vpow.pop %v1819
      %v1821 = vmul.f32 %v1803, 1.442695
      %v1822 = vpow.pop %v1821
      %v1823 = vmul.f32 %v1804, 1.442695
      %v1824 = vpow.pop %v1823
      %v1825 = vmul.f32 %v1805, 1.442695
      %v1826 = vpow.pop %v1825
      %v1827 = vmul.f32 %v1806, 1.442695
      %v1828 = vpow.pop %v1827
      %v1829 = vmul.f32 %v1807, 1.442695
      %v1830 = vpow.pop %v1829
      %v1831 = vmul.f32 %v1808, 1.442695
      %v1832 = vpow.pop %v1831
      %v1833 = vmul.f32 %v1809, 1.442695
      %v1834 = vpow.pop %v1833
      %v1835 = vmul.f32 %v1810, 1.442695
      %v1836 = vpow.pop %v1835
      %v1837 = vmul.f32 %v1811, 1.442695
      %v1838 = vpow.pop %v1837
      %v1839 = vmul.f32 %v1812, 1.442695
      %v1840 = vpow.pop %v1839
      %v1841 = vmul.f32 %v1813, 1.442695
      %v1842 = vpow.pop %v1841
      %v1843 = vmul.f32 %v1814, 1.442695
      %v1844 = vpow.pop %v1843
      %v1845 = vmul.f32 %v1815, 1.442695
      %v1846 = vpow.pop %v1845
      %v1847 = vmul.f32 %v1816, 1.442695
      %v1848 = vpow.pop %v1847
      %1849 = vadd.xlane.f32.xlu0 %v1818
      %v1850 = vpop.xlane.xlu0 %1849
      %1851 = vadd.xlane.f32.xlu0 %v1820
      %v1852 = vpop.xlane.xlu0 %1851
      %1853 = vadd.xlane.f32.xlu0 %v1822
      %v1854 = vpop.xlane.xlu0 %1853
      %1855 = vadd.xlane.f32.xlu0 %v1824
      %v1856 = vpop.xlane.xlu0 %1855
      %1857 = vadd.xlane.f32.xlu0 %v1826
      %v1858 = vpop.xlane.xlu0 %1857
      %1859 = vadd.xlane.f32.xlu0 %v1828
      %v1860 = vpop.xlane.xlu0 %1859
      %1861 = vadd.xlane.f32.xlu0 %v1830
      %v1862 = vpop.xlane.xlu0 %1861
      %1863 = vadd.xlane.f32.xlu0 %v1832
      %v1864 = vpop.xlane.xlu0 %1863
      %1865 = vadd.xlane.f32.xlu0 %v1834
      %v1866 = vpop.xlane.xlu0 %1865
      %1867 = vadd.xlane.f32.xlu0 %v1836
      %v1868 = vpop.xlane.xlu0 %1867
      %1869 = vadd.xlane.f32.xlu0 %v1838
      %v1870 = vpop.xlane.xlu0 %1869
      %1871 = vadd.xlane.f32.xlu0 %v1840
      %v1872 = vpop.xlane.xlu0 %1871
      %1873 = vadd.xlane.f32.xlu0 %v1842
      %v1874 = vpop.xlane.xlu0 %1873
      %1875 = vadd.xlane.f32.xlu0 %v1844
      %v1876 = vpop.xlane.xlu0 %1875
      %1877 = vadd.xlane.f32.xlu0 %v1846
      %v1878 = vpop.xlane.xlu0 %1877
      %1879 = vadd.xlane.f32.xlu0 %v1848
      %v1880 = vpop.xlane.xlu0 %1879
      %1881 = vrot.lane.b32.xlu0 %v724, 56
      %v1882 = vpop.permute.xlu0 %1881
      %1883 = vrot.lane.b32.xlu0 %v729, 56
      %v1884 = vpop.permute.xlu0 %1883
      %1885 = vrot.lane.b32.xlu0 %v734, 56
      %v1886 = vpop.permute.xlu0 %1885
      %1887 = vrot.lane.b32.xlu0 %v739, 56
      %v1888 = vpop.permute.xlu0 %1887
      %1889 = vrot.lane.b32.xlu0 %v744, 56
      %v1890 = vpop.permute.xlu0 %1889
      %1891 = vrot.lane.b32.xlu0 %v749, 56
      %v1892 = vpop.permute.xlu0 %1891
      %1893 = vrot.lane.b32.xlu0 %v754, 56
      %v1894 = vpop.permute.xlu0 %1893
      %1895 = vrot.lane.b32.xlu0 %v759, 56
      %v1896 = vpop.permute.xlu0 %1895
      %1897 = vrot.lane.b32.xlu0 %v764, 56
      %v1898 = vpop.permute.xlu0 %1897
      %1899 = vrot.lane.b32.xlu0 %v769, 56
      %v1900 = vpop.permute.xlu0 %1899
      %1901 = vrot.lane.b32.xlu0 %v774, 56
      %v1902 = vpop.permute.xlu0 %1901
      %1903 = vrot.lane.b32.xlu0 %v779, 56
      %v1904 = vpop.permute.xlu0 %1903
      %1905 = vrot.lane.b32.xlu0 %v784, 56
      %v1906 = vpop.permute.xlu0 %1905
      %1907 = vrot.lane.b32.xlu0 %v789, 56
      %v1908 = vpop.permute.xlu0 %1907
      %1909 = vrot.lane.b32.xlu0 %v794, 56
      %v1910 = vpop.permute.xlu0 %1909
      %1911 = vrot.lane.b32.xlu0 %v799, 56
      %v1912 = vpop.permute.xlu0 %1911
      %1929 = vmatprep.subr.mxu0 0.0
      %1930 = vmatpush1.msra.mxu0 %v1882
      %1931 = vmatprep.subr.mxu0 0.0
      %1932 = vmatpush1.msra.mxu0 %v1884
      %1933 = vmatprep.subr.mxu0 0.0
      %1934 = vmatpush1.msra.mxu0 %v1886
      %1935 = vmatprep.subr.mxu0 0.0
      %1936 = vmatpush1.msra.mxu0 %v1888
      %1937 = vmatprep.subr.mxu0 0.0
      %1938 = vmatpush1.msra.mxu0 %v1890
      %1939 = vmatprep.subr.mxu0 0.0
      %1940 = vmatpush1.msra.mxu0 %v1892
      %1941 = vmatprep.subr.mxu0 0.0
      %1942 = vmatpush1.msra.mxu0 %v1894
      %1943 = vmatprep.subr.mxu0 0.0
      %1944 = vmatpush1.msra.mxu0 %v1896
      %1945 = vmatprep.subr.mxu0 0.0
      %1946 = vmatpush1.msra.mxu0 %v1898
      %1947 = vmatprep.subr.mxu0 0.0
      %1948 = vmatpush1.msra.mxu0 %v1900
      %1949 = vmatprep.subr.mxu0 0.0
      %1950 = vmatpush1.msra.mxu0 %v1902
      %1951 = vmatprep.subr.mxu0 0.0
      %1952 = vmatpush1.msra.mxu0 %v1904
      %1953 = vmatprep.subr.mxu0 0.0
      %1954 = vmatpush1.msra.mxu0 %v1906
      %1955 = vmatprep.subr.mxu0 0.0
      %1956 = vmatpush1.msra.mxu0 %v1908
      %1957 = vmatprep.subr.mxu0 0.0
      %1958 = vmatpush1.msra.mxu0 %v1910
      %1959 = vmatprep.subr.mxu0 0.0
      %1960 = vmatpush1.msra.mxu0 %v1912
      %1961 = vmatprep.subr.mxu0 0.0
      %1962 = vmatpush1.msra.mxu0 0.0
      %1963 = vmatprep.subr.mxu0 0.0
      %1964 = vmatpush1.msra.mxu0 0.0
      %1965 = vmatprep.subr.mxu0 0.0
      %1966 = vmatpush1.msra.mxu0 0.0
      %1967 = vmatprep.subr.mxu0 0.0
      %1968 = vmatpush1.msra.mxu0 0.0
      %1969 = vmatprep.subr.mxu0 0.0
      %1970 = vmatpush1.msra.mxu0 0.0
      %1971 = vmatprep.subr.mxu0 0.0
      %1972 = vmatpush1.msra.mxu0 0.0
      %1973 = vmatprep.subr.mxu0 0.0
      %1974 = vmatpush1.msra.mxu0 0.0
      %1975 = vmatprep.subr.mxu0 0.0
      %1976 = vmatpush1.msra.mxu0 0.0
      %1977 = vmatprep.subr.mxu0 0.0
      %1978 = vmatpush1.msra.mxu0 0.0
      %1979 = vmatprep.subr.mxu0 0.0
      %1980 = vmatpush1.msra.mxu0 0.0
      %1981 = vmatprep.subr.mxu0 0.0
      %1982 = vmatpush1.msra.mxu0 0.0
      %1983 = vmatprep.subr.mxu0 0.0
      %1984 = vmatpush1.msra.mxu0 0.0
      %1985 = vmatprep.subr.mxu0 0.0
      %1986 = vmatpush1.msra.mxu0 0.0
      %1987 = vmatprep.subr.mxu0 0.0
      %1988 = vmatpush1.msra.mxu0 0.0
      %1989 = vmatprep.subr.mxu0 0.0
      %1990 = vmatpush1.msra.mxu0 0.0
      %1991 = vmatprep.subr.mxu0 0.0
      %1992 = vmatpush1.msra.mxu0 0.0
      %1993 = vmatprep.mubr.f32.mxu0 0.0
      %1994 = vmatmul.mubr.f32.gmra.mrb[0].mxu0 %v1818
      %v1995 = vpop.f32.mrb[0].mxu0
      %v1996 = vadd.f32 0.0, %v1995
      %v1997 = vpop.f32.mrb[0].mxu0
      %1998 = vmatprep.mubr.f32.mxu0 0.0
      %1999 = vmatmul.mubr.f32.gmra.mrb[0].mxu0 %v1820
      %v2000 = vpop.f32.mrb[0].mxu0
      %v2001 = vadd.f32 0.0, %v2000
      %v2002 = vpop.f32.mrb[0].mxu0
      %2003 = vmatprep.mubr.f32.mxu0 0.0
      %2004 = vmatmul.mubr.f32.gmra.mrb[0].mxu0 %v1822
      %v2005 = vpop.f32.mrb[0].mxu0
      %v2006 = vadd.f32 0.0, %v2005
      %v2007 = vpop.f32.mrb[0].mxu0
      %2008 = vmatprep.mubr.f32.mxu0 0.0
      %2009 = vmatmul.mubr.f32.gmra.mrb[0].mxu0 %v1824
      %v2010 = vpop.f32.mrb[0].mxu0
      %v2011 = vadd.f32 0.0, %v2010
      %v2012 = vpop.f32.mrb[0].mxu0
      %2013 = vmatprep.mubr.f32.mxu0 0.0
      %2014 = vmatmul.mubr.f32.gmra.mrb[0].mxu0 %v1826
      %v2015 = vpop.f32.mrb[0].mxu0
      %v2016 = vadd.f32 0.0, %v2015
      %v2017 = vpop.f32.mrb[0].mxu0
      %2018 = vmatprep.mubr.f32.mxu0 0.0
      %2019 = vmatmul.mubr.f32.gmra.mrb[0].mxu0 %v1828
      %v2020 = vpop.f32.mrb[0].mxu0
      %v2021 = vadd.f32 0.0, %v2020
      %v2022 = vpop.f32.mrb[0].mxu0
      %2023 = vmatprep.mubr.f32.mxu0 0.0
      %2024 = vmatmul.mubr.f32.gmra.mrb[0].mxu0 %v1830
      %v2025 = vpop.f32.mrb[0].mxu0
      %v2026 = vadd.f32 0.0, %v2025
      %v2027 = vpop.f32.mrb[0].mxu0
      %2028 = vmatprep.mubr.f32.mxu0 0.0
      %2029 = vmatmul.mubr.f32.gmra.mrb[0].mxu0 %v1832
      %v2030 = vpop.f32.mrb[0].mxu0
      %v2031 = vadd.f32 0.0, %v2030
      %v2032 = vpop.f32.mrb[0].mxu0
      %2033 = vmatprep.mubr.f32.mxu0 0.0
      %2034 = vmatmul.mubr.f32.gmra.mrb[0].mxu0 %v1834
      %v2035 = vpop.f32.mrb[0].mxu0
      %v2036 = vadd.f32 0.0, %v2035
      %v2037 = vpop.f32.mrb[0].mxu0
      %2038 = vmatprep.mubr.f32.mxu0 0.0
      %2039 = vmatmul.mubr.f32.gmra.mrb[0].mxu0 %v1836
      %v2040 = vpop.f32.mrb[0].mxu0
      %v2041 = vadd.f32 0.0, %v2040
      %v2042 = vpop.f32.mrb[0].mxu0
      %2043 = vmatprep.mubr.f32.mxu0 0.0
      %2044 = vmatmul.mubr.f32.gmra.mrb[0].mxu0 %v1838
      %v2045 = vpop.f32.mrb[0].mxu0
      %v2046 = vadd.f32 0.0, %v2045
      %v2047 = vpop.f32.mrb[0].mxu0
      %2048 = vmatprep.mubr.f32.mxu0 0.0
      %2049 = vmatmul.mubr.f32.gmra.mrb[0].mxu0 %v1840
      %v2050 = vpop.f32.mrb[0].mxu0
      %v2051 = vadd.f32 0.0, %v2050
      %v2052 = vpop.f32.mrb[0].mxu0
      %2053 = vmatprep.mubr.f32.mxu0 0.0
      %2054 = vmatmul.mubr.f32.gmra.mrb[0].mxu0 %v1842
      %v2055 = vpop.f32.mrb[0].mxu0
      %v2056 = vadd.f32 0.0, %v2055
      %v2057 = vpop.f32.mrb[0].mxu0
      %2058 = vmatprep.mubr.f32.mxu0 0.0
      %2059 = vmatmul.mubr.f32.gmra.mrb[0].mxu0 %v1844
      %v2060 = vpop.f32.mrb[0].mxu0
      %v2061 = vadd.f32 0.0, %v2060
      %v2062 = vpop.f32.mrb[0].mxu0
      %2063 = vmatprep.mubr.f32.mxu0 0.0
      %2064 = vmatmul.mubr.f32.gmra.mrb[0].mxu0 %v1846
      %v2065 = vpop.f32.mrb[0].mxu0
      %v2066 = vadd.f32 0.0, %v2065
      %v2067 = vpop.f32.mrb[0].mxu0
      %2068 = vmatprep.mubr.f32.mxu0 0.0
      %2069 = vmatmul.mubr.f32.gmra.mrb[0].mxu0 %v1848
      %v2070 = vpop.f32.mrb[0].mxu0
      %v2071 = vadd.f32 0.0, %v2070
      %v2072 = vpop.f32.mrb[0].mxu0
      %2073 = vdwg.mxu0
      %v2074 = vrcp.pop %v1850
      %v2075 = vrcp.pop %v1852
      %v2076 = vrcp.pop %v1854
      %v2077 = vrcp.pop %v1856
      %v2078 = vrcp.pop %v1858
      %v2079 = vrcp.pop %v1860
      %v2080 = vrcp.pop %v1862
      %v2081 = vrcp.pop %v1864
      %v2082 = vrcp.pop %v1866
      %v2083 = vrcp.pop %v1868
      %v2084 = vrcp.pop %v1870
      %v2085 = vrcp.pop %v1872
      %v2086 = vrcp.pop %v1874
      %v2087 = vrcp.pop %v1876
      %v2088 = vrcp.pop %v1878
      %v2089 = vrcp.pop %v1880
      %v2090 = vmul.f32 %v1996, %v2074
      %v2091 = vmul.f32 %v2001, %v2075
      %v2092 = vmul.f32 %v2006, %v2076
      %v2093 = vmul.f32 %v2011, %v2077
      %v2094 = vmul.f32 %v2016, %v2078
      %v2095 = vmul.f32 %v2021, %v2079
      %v2096 = vmul.f32 %v2026, %v2080
      %v2097 = vmul.f32 %v2031, %v2081
      %v2098 = vmul.f32 %v2036, %v2082
      %v2099 = vmul.f32 %v2041, %v2083
      %v2100 = vmul.f32 %v2046, %v2084
      %v2101 = vmul.f32 %v2051, %v2085
      %v2102 = vmul.f32 %v2056, %v2086
      %v2103 = vmul.f32 %v2061, %v2087
      %v2104 = vmul.f32 %v2066, %v2088
      %v2105 = vmul.f32 %v2071, %v2089
      %2106 = vrot.lane.b32.xlu0 %v724, 112
      %v2107 = vpop.permute.xlu0 %2106
      %2108 = vrot.lane.b32.xlu0 %v729, 112
      %v2109 = vpop.permute.xlu0 %2108
      %2110 = vrot.lane.b32.xlu0 %v734, 112
      %v2111 = vpop.permute.xlu0 %2110
      %2112 = vrot.lane.b32.xlu0 %v739, 112
      %v2113 = vpop.permute.xlu0 %2112
      %2114 = vrot.lane.b32.xlu0 %v744, 112
      %v2115 = vpop.permute.xlu0 %2114
      %2116 = vrot.lane.b32.xlu0 %v749, 112
      %v2117 = vpop.permute.xlu0 %2116
      %2118 = vrot.lane.b32.xlu0 %v754, 112
      %v2119 = vpop.permute.xlu0 %2118
      %2120 = vrot.lane.b32.xlu0 %v759, 112
      %v2121 = vpop.permute.xlu0 %2120
      %2122 = vrot.lane.b32.xlu0 %v764, 112
      %v2123 = vpop.permute.xlu0 %2122
      %2124 = vrot.lane.b32.xlu0 %v769, 112
      %v2125 = vpop.permute.xlu0 %2124
      %2126 = vrot.lane.b32.xlu0 %v774, 112
      %v2127 = vpop.permute.xlu0 %2126
      %2128 = vrot.lane.b32.xlu0 %v779, 112
      %v2129 = vpop.permute.xlu0 %2128
      %2130 = vrot.lane.b32.xlu0 %v784, 112
      %v2131 = vpop.permute.xlu0 %2130
      %2132 = vrot.lane.b32.xlu0 %v789, 112
      %v2133 = vpop.permute.xlu0 %2132
      %2134 = vrot.lane.b32.xlu0 %v794, 112
      %v2135 = vpop.permute.xlu0 %2134
      %2136 = vrot.lane.b32.xlu0 %v799, 112
      %v2137 = vpop.permute.xlu0 %2136
      %2138 = vrot.lane.b32.xlu0 %v724, 80
      %v2139 = vpop.permute.xlu0 %2138
      %2140 = vrot.lane.b32.xlu0 %v729, 80
      %v2141 = vpop.permute.xlu0 %2140
      %2142 = vrot.lane.b32.xlu0 %v734, 80
      %v2143 = vpop.permute.xlu0 %2142
      %2144 = vrot.lane.b32.xlu0 %v739, 80
      %v2145 = vpop.permute.xlu0 %2144
      %2146 = vrot.lane.b32.xlu0 %v744, 80
      %v2147 = vpop.permute.xlu0 %2146
      %2148 = vrot.lane.b32.xlu0 %v749, 80
      %v2149 = vpop.permute.xlu0 %2148
      %2150 = vrot.lane.b32.xlu0 %v754, 80
      %v2151 = vpop.permute.xlu0 %2150
      %2152 = vrot.lane.b32.xlu0 %v759, 80
      %v2153 = vpop.permute.xlu0 %2152
      %2154 = vrot.lane.b32.xlu0 %v764, 80
      %v2155 = vpop.permute.xlu0 %2154
      %2156 = vrot.lane.b32.xlu0 %v769, 80
      %v2157 = vpop.permute.xlu0 %2156
      %2158 = vrot.lane.b32.xlu0 %v774, 80
      %v2159 = vpop.permute.xlu0 %2158
      %2160 = vrot.lane.b32.xlu0 %v779, 80
      %v2161 = vpop.permute.xlu0 %2160
      %2162 = vrot.lane.b32.xlu0 %v784, 80
      %v2163 = vpop.permute.xlu0 %2162
      %2164 = vrot.lane.b32.xlu0 %v789, 80
      %v2165 = vpop.permute.xlu0 %2164
      %2166 = vrot.lane.b32.xlu0 %v794, 80
      %v2167 = vpop.permute.xlu0 %2166
      %2168 = vrot.lane.b32.xlu0 %v799, 80
      %v2169 = vpop.permute.xlu0 %2168
      %v2170 = vsel %vm885, %v2107, 0
      %v2172 = vsel %vm885, %v2109, 0
      %v2174 = vsel %vm885, %v2111, 0
      %v2176 = vsel %vm885, %v2113, 0
      %v2178 = vsel %vm885, %v2115, 0
      %v2180 = vsel %vm885, %v2117, 0
      %v2182 = vsel %vm885, %v2119, 0
      %v2184 = vsel %vm885, %v2121, 0
      %v2186 = vsel %vm885, %v2123, 0
      %v2188 = vsel %vm885, %v2125, 0
      %v2190 = vsel %vm885, %v2127, 0
      %v2192 = vsel %vm885, %v2129, 0
      %v2194 = vsel %vm885, %v2131, 0
      %v2196 = vsel %vm885, %v2133, 0
      %v2198 = vsel %vm885, %v2135, 0
      %v2200 = vsel %vm885, %v2137, 0
      %v2202 = vsel %vm885, %v2139, 0
      %v2204 = vsel %vm885, %v2141, 0
      %v2206 = vsel %vm885, %v2143, 0
      %v2208 = vsel %vm885, %v2145, 0
      %v2210 = vsel %vm885, %v2147, 0
      %v2212 = vsel %vm885, %v2149, 0
      %v2214 = vsel %vm885, %v2151, 0
      %v2216 = vsel %vm885, %v2153, 0
      %v2218 = vsel %vm885, %v2155, 0
      %v2220 = vsel %vm885, %v2157, 0
      %v2222 = vsel %vm885, %v2159, 0
      %v2224 = vsel %vm885, %v2161, 0
      %v2226 = vsel %vm885, %v2163, 0
      %v2228 = vsel %vm885, %v2165, 0
      %v2230 = vsel %vm885, %v2167, 0
      %v2232 = vsel %vm885, %v2169, 0
      %2234 = vmatprep.subr.mxu0 0.0
      %2235 = vmatpush1.xpose.msra.mxu0 %v2202
      %2236 = vmatprep.subr.mxu0 0.0
      %2237 = vmatpush1.xpose.msra.mxu0 %v2204
      %2238 = vmatprep.subr.mxu0 0.0
      %2239 = vmatpush1.xpose.msra.mxu0 %v2206
      %2240 = vmatprep.subr.mxu0 0.0
      %2241 = vmatpush1.xpose.msra.mxu0 %v2208
      %2242 = vmatprep.subr.mxu0 0.0
      %2243 = vmatpush1.xpose.msra.mxu0 %v2210
      %2244 = vmatprep.subr.mxu0 0.0
      %2245 = vmatpush1.xpose.msra.mxu0 %v2212
      %2246 = vmatprep.subr.mxu0 0.0
      %2247 = vmatpush1.xpose.msra.mxu0 %v2214
      %2248 = vmatprep.subr.mxu0 0.0
      %2249 = vmatpush1.xpose.msra.mxu0 %v2216
      %2250 = vmatprep.subr.mxu0 0.0
      %2251 = vmatpush1.xpose.msra.mxu0 %v2218
      %2252 = vmatprep.subr.mxu0 0.0
      %2253 = vmatpush1.xpose.msra.mxu0 %v2220
      %2254 = vmatprep.subr.mxu0 0.0
      %2255 = vmatpush1.xpose.msra.mxu0 %v2222
      %2256 = vmatprep.subr.mxu0 0.0
      %2257 = vmatpush1.xpose.msra.mxu0 %v2224
      %2258 = vmatprep.subr.mxu0 0.0
      %2259 = vmatpush1.xpose.msra.mxu0 %v2226
      %2260 = vmatprep.subr.mxu0 0.0
      %2261 = vmatpush1.xpose.msra.mxu0 %v2228
      %2262 = vmatprep.subr.mxu0 0.0
      %2263 = vmatpush1.xpose.msra.mxu0 %v2230
      %2264 = vmatprep.subr.mxu0 0.0
      %2265 = vmatpush1.xpose.msra.mxu0 %v2232
      %2266 = vmatprep.subr.mxu0 0.0
      %2267 = vmatpush1.xpose.msra.mxu0 0.0
      %2268 = vmatprep.subr.mxu0 0.0
      %2269 = vmatpush1.xpose.msra.mxu0 0.0
      %2270 = vmatprep.subr.mxu0 0.0
      %2271 = vmatpush1.xpose.msra.mxu0 0.0
      %2272 = vmatprep.subr.mxu0 0.0
      %2273 = vmatpush1.xpose.msra.mxu0 0.0
      %2274 = vmatprep.subr.mxu0 0.0
      %2275 = vmatpush1.xpose.msra.mxu0 0.0
      %2276 = vmatprep.subr.mxu0 0.0
      %2277 = vmatpush1.xpose.msra.mxu0 0.0
      %2278 = vmatprep.subr.mxu0 0.0
      %2279 = vmatpush1.xpose.msra.mxu0 0.0
      %2280 = vmatprep.subr.mxu0 0.0
      %2281 = vmatpush1.xpose.msra.mxu0 0.0
      %2282 = vmatprep.subr.mxu0 0.0
      %2283 = vmatpush1.xpose.msra.mxu0 0.0
      %2284 = vmatprep.subr.mxu0 0.0
      %2285 = vmatpush1.xpose.msra.mxu0 0.0
      %2286 = vmatprep.subr.mxu0 0.0
      %2287 = vmatpush1.xpose.msra.mxu0 0.0
      %2288 = vmatprep.subr.mxu0 0.0
      %2289 = vmatpush1.xpose.msra.mxu0 0.0
      %2290 = vmatprep.subr.mxu0 0.0
      %2291 = vmatpush1.xpose.msra.mxu0 0.0
      %2292 = vmatprep.subr.mxu0 0.0
      %2293 = vmatpush1.xpose.msra.mxu0 0.0
      %2294 = vmatprep.subr.mxu0 0.0
      %2295 = vmatpush1.xpose.msra.mxu0 0.0
      %2296 = vmatprep.subr.mxu0 0.0
      %2297 = vmatpush1.xpose.msra.mxu0 0.0
      %2298 = vmatprep.mubr.f32.mxu0 0.0
      %2299 = vmatmul.mubr.f32.gmra.mrb[0].mxu0 %v2170
      %v2300 = vpop.f32.mrb[0].mxu0
      %v2301 = vadd.f32 0.0, %v2300
      %v2302 = vpop.f32.mrb[0].mxu0
      %2303 = vmatprep.mubr.f32.mxu0 0.0
      %2304 = vmatmul.mubr.f32.gmra.mrb[0].mxu0 %v2172
      %v2305 = vpop.f32.mrb[0].mxu0
      %v2306 = vadd.f32 0.0, %v2305
      %v2307 = vpop.f32.mrb[0].mxu0
      %2308 = vmatprep.mubr.f32.mxu0 0.0
      %2309 = vmatmul.mubr.f32.gmra.mrb[0].mxu0 %v2174
      %v2310 = vpop.f32.mrb[0].mxu0
      %v2311 = vadd.f32 0.0, %v2310
      %v2312 = vpop.f32.mrb[0].mxu0
      %2313 = vmatprep.mubr.f32.mxu0 0.0
      %2314 = vmatmul.mubr.f32.gmra.mrb[0].mxu0 %v2176
      %v2315 = vpop.f32.mrb[0].mxu0
      %v2316 = vadd.f32 0.0, %v2315
      %v2317 = vpop.f32.mrb[0].mxu0
      %2318 = vmatprep.mubr.f32.mxu0 0.0
      %2319 = vmatmul.mubr.f32.gmra.mrb[0].mxu0 %v2178
      %v2320 = vpop.f32.mrb[0].mxu0
      %v2321 = vadd.f32 0.0, %v2320
      %v2322 = vpop.f32.mrb[0].mxu0
      %2323 = vmatprep.mubr.f32.mxu0 0.0
      %2324 = vmatmul.mubr.f32.gmra.mrb[0].mxu0 %v2180
      %v2325 = vpop.f32.mrb[0].mxu0
      %v2326 = vadd.f32 0.0, %v2325
      %v2327 = vpop.f32.mrb[0].mxu0
      %2328 = vmatprep.mubr.f32.mxu0 0.0
      %2329 = vmatmul.mubr.f32.gmra.mrb[0].mxu0 %v2182
      %v2330 = vpop.f32.mrb[0].mxu0
      %v2331 = vadd.f32 0.0, %v2330
      %v2332 = vpop.f32.mrb[0].mxu0
      %2333 = vmatprep.mubr.f32.mxu0 0.0
      %2334 = vmatmul.mubr.f32.gmra.mrb[0].mxu0 %v2184
      %v2335 = vpop.f32.mrb[0].mxu0
      %v2336 = vadd.f32 0.0, %v2335
      %v2337 = vpop.f32.mrb[0].mxu0
      %2338 = vmatprep.mubr.f32.mxu0 0.0
      %2339 = vmatmul.mubr.f32.gmra.mrb[0].mxu0 %v2186
      %v2340 = vpop.f32.mrb[0].mxu0
      %v2341 = vadd.f32 0.0, %v2340
      %v2342 = vpop.f32.mrb[0].mxu0
      %2343 = vmatprep.mubr.f32.mxu0 0.0
      %2344 = vmatmul.mubr.f32.gmra.mrb[0].mxu0 %v2188
      %v2345 = vpop.f32.mrb[0].mxu0
      %v2346 = vadd.f32 0.0, %v2345
      %v2347 = vpop.f32.mrb[0].mxu0
      %2348 = vmatprep.mubr.f32.mxu0 0.0
      %2349 = vmatmul.mubr.f32.gmra.mrb[0].mxu0 %v2190
      %v2350 = vpop.f32.mrb[0].mxu0
      %v2351 = vadd.f32 0.0, %v2350
      %v2352 = vpop.f32.mrb[0].mxu0
      %2353 = vmatprep.mubr.f32.mxu0 0.0
      %2354 = vmatmul.mubr.f32.gmra.mrb[0].mxu0 %v2192
      %v2355 = vpop.f32.mrb[0].mxu0
      %v2356 = vadd.f32 0.0, %v2355
      %v2357 = vpop.f32.mrb[0].mxu0
      %2358 = vmatprep.mubr.f32.mxu0 0.0
      %2359 = vmatmul.mubr.f32.gmra.mrb[0].mxu0 %v2194
      %v2360 = vpop.f32.mrb[0].mxu0
      %v2361 = vadd.f32 0.0, %v2360
      %v2362 = vpop.f32.mrb[0].mxu0
      %2363 = vmatprep.mubr.f32.mxu0 0.0
      %2364 = vmatmul.mubr.f32.gmra.mrb[0].mxu0 %v2196
      %v2365 = vpop.f32.mrb[0].mxu0
      %v2366 = vadd.f32 0.0, %v2365
      %v2367 = vpop.f32.mrb[0].mxu0
      %2368 = vmatprep.mubr.f32.mxu0 0.0
      %2369 = vmatmul.mubr.f32.gmra.mrb[0].mxu0 %v2198
      %v2370 = vpop.f32.mrb[0].mxu0
      %v2371 = vadd.f32 0.0, %v2370
      %v2372 = vpop.f32.mrb[0].mxu0
      %2373 = vmatprep.mubr.f32.mxu0 0.0
      %2374 = vmatmul.mubr.f32.gmra.mrb[0].mxu0 %v2200
      %v2375 = vpop.f32.mrb[0].mxu0
      %v2376 = vadd.f32 0.0, %v2375
      %v2377 = vpop.f32.mrb[0].mxu0
      %2378 = vdwg.mxu0
      %v2379 = vmul.f32 %v2301, 0.35355338
      %v2380 = vmul.f32 %v2306, 0.35355338
      %v2381 = vmul.f32 %v2311, 0.35355338
      %v2382 = vmul.f32 %v2316, 0.35355338
      %v2383 = vmul.f32 %v2321, 0.35355338
      %v2384 = vmul.f32 %v2326, 0.35355338
      %v2385 = vmul.f32 %v2331, 0.35355338
      %v2386 = vmul.f32 %v2336, 0.35355338
      %v2387 = vmul.f32 %v2341, 0.35355338
      %v2388 = vmul.f32 %v2346, 0.35355338
      %v2389 = vmul.f32 %v2351, 0.35355338
      %v2390 = vmul.f32 %v2356, 0.35355338
      %v2391 = vmul.f32 %v2361, 0.35355338
      %v2392 = vmul.f32 %v2366, 0.35355338
      %v2393 = vmul.f32 %v2371, 0.35355338
      %v2394 = vmul.f32 %v2376, 0.35355338
      %v2395 = vsel %vm821, %v2379, -inf
      %v2396 = vsel %vm822, %v2380, -inf
      %v2397 = vsel %vm823, %v2381, -inf
      %v2398 = vsel %vm824, %v2382, -inf
      %v2399 = vsel %vm825, %v2383, -inf
      %v2400 = vsel %vm826, %v2384, -inf
      %v2401 = vsel %vm827, %v2385, -inf
      %v2402 = vsel %vm828, %v2386, -inf
      %v2403 = vsel %vm829, %v2387, -inf
      %v2404 = vsel %vm830, %v2388, -inf
      %v2405 = vsel %vm831, %v2389, -inf
      %v2406 = vsel %vm832, %v2390, -inf
      %v2407 = vsel %vm833, %v2391, -inf
      %v2408 = vsel %vm834, %v2392, -inf
      %v2409 = vsel %vm835, %v2393, -inf
      %v2410 = vsel %vm836, %v2394, -inf
      %2411 = vmax.xlane.f32.xlu0 %v2395
      %v2412 = vpop.xlane.xlu0 %2411
      %2413 = vmax.xlane.f32.xlu0 %v2396
      %v2414 = vpop.xlane.xlu0 %2413
      %2415 = vmax.xlane.f32.xlu0 %v2397
      %v2416 = vpop.xlane.xlu0 %2415
      %2417 = vmax.xlane.f32.xlu0 %v2398
      %v2418 = vpop.xlane.xlu0 %2417
      %2419 = vmax.xlane.f32.xlu0 %v2399
      %v2420 = vpop.xlane.xlu0 %2419
      %2421 = vmax.xlane.f32.xlu0 %v2400
      %v2422 = vpop.xlane.xlu0 %2421
      %2423 = vmax.xlane.f32.xlu0 %v2401
      %v2424 = vpop.xlane.xlu0 %2423
      %2425 = vmax.xlane.f32.xlu0 %v2402
      %v2426 = vpop.xlane.xlu0 %2425
      %2427 = vmax.xlane.f32.xlu0 %v2403
      %v2428 = vpop.xlane.xlu0 %2427
      %2429 = vmax.xlane.f32.xlu0 %v2404
      %v2430 = vpop.xlane.xlu0 %2429
      %2431 = vmax.xlane.f32.xlu0 %v2405
      %v2432 = vpop.xlane.xlu0 %2431
      %2433 = vmax.xlane.f32.xlu0 %v2406
      %v2434 = vpop.xlane.xlu0 %2433
      %2435 = vmax.xlane.f32.xlu0 %v2407
      %v2436 = vpop.xlane.xlu0 %2435
      %2437 = vmax.xlane.f32.xlu0 %v2408
      %v2438 = vpop.xlane.xlu0 %2437
      %2439 = vmax.xlane.f32.xlu0 %v2409
      %v2440 = vpop.xlane.xlu0 %2439
      %2441 = vmax.xlane.f32.xlu0 %v2410
      %v2442 = vpop.xlane.xlu0 %2441
      %v2443 = vsub.f32 %v2395, %v2412
      %v2444 = vsub.f32 %v2396, %v2414
      %v2445 = vsub.f32 %v2397, %v2416
      %v2446 = vsub.f32 %v2398, %v2418
      %v2447 = vsub.f32 %v2399, %v2420
      %v2448 = vsub.f32 %v2400, %v2422
      %v2449 = vsub.f32 %v2401, %v2424
      %v2450 = vsub.f32 %v2402, %v2426
      %v2451 = vsub.f32 %v2403, %v2428
      %v2452 = vsub.f32 %v2404, %v2430
      %v2453 = vsub.f32 %v2405, %v2432
      %v2454 = vsub.f32 %v2406, %v2434
      %v2455 = vsub.f32 %v2407, %v2436
      %v2456 = vsub.f32 %v2408, %v2438
      %v2457 = vsub.f32 %v2409, %v2440
      %v2458 = vsub.f32 %v2410, %v2442
      %v2459 = vmul.f32 %v2443, 1.442695
      %v2460 = vpow.pop %v2459
      %v2461 = vmul.f32 %v2444, 1.442695
      %v2462 = vpow.pop %v2461
      %v2463 = vmul.f32 %v2445, 1.442695
      %v2464 = vpow.pop %v2463
      %v2465 = vmul.f32 %v2446, 1.442695
      %v2466 = vpow.pop %v2465
      %v2467 = vmul.f32 %v2447, 1.442695
      %v2468 = vpow.pop %v2467
      %v2469 = vmul.f32 %v2448, 1.442695
      %v2470 = vpow.pop %v2469
      %v2471 = vmul.f32 %v2449, 1.442695
      %v2472 = vpow.pop %v2471
      %v2473 = vmul.f32 %v2450, 1.442695
      %v2474 = vpow.pop %v2473
      %v2475 = vmul.f32 %v2451, 1.442695
      %v2476 = vpow.pop %v2475
      %v2477 = vmul.f32 %v2452, 1.442695
      %v2478 = vpow.pop %v2477
      %v2479 = vmul.f32 %v2453, 1.442695
      %v2480 = vpow.pop %v2479
      %v2481 = vmul.f32 %v2454, 1.442695
      %v2482 = vpow.pop %v2481
      %v2483 = vmul.f32 %v2455, 1.442695
      %v2484 = vpow.pop %v2483
      %v2485 = vmul.f32 %v2456, 1.442695
      %v2486 = vpow.pop %v2485
      %v2487 = vmul.f32 %v2457, 1.442695
      %v2488 = vpow.pop %v2487
      %v2489 = vmul.f32 %v2458, 1.442695
      %v2490 = vpow.pop %v2489
      %2491 = vadd.xlane.f32.xlu0 %v2460
      %v2492 = vpop.xlane.xlu0 %2491
      %2493 = vadd.xlane.f32.xlu0 %v2462
      %v2494 = vpop.xlane.xlu0 %2493
      %2495 = vadd.xlane.f32.xlu0 %v2464
      %v2496 = vpop.xlane.xlu0 %2495
      %2497 = vadd.xlane.f32.xlu0 %v2466
      %v2498 = vpop.xlane.xlu0 %2497
      %2499 = vadd.xlane.f32.xlu0 %v2468
      %v2500 = vpop.xlane.xlu0 %2499
      %2501 = vadd.xlane.f32.xlu0 %v2470
      %v2502 = vpop.xlane.xlu0 %2501
      %2503 = vadd.xlane.f32.xlu0 %v2472
      %v2504 = vpop.xlane.xlu0 %2503
      %2505 = vadd.xlane.f32.xlu0 %v2474
      %v2506 = vpop.xlane.xlu0 %2505
      %2507 = vadd.xlane.f32.xlu0 %v2476
      %v2508 = vpop.xlane.xlu0 %2507
      %2509 = vadd.xlane.f32.xlu0 %v2478
      %v2510 = vpop.xlane.xlu0 %2509
      %2511 = vadd.xlane.f32.xlu0 %v2480
      %v2512 = vpop.xlane.xlu0 %2511
      %2513 = vadd.xlane.f32.xlu0 %v2482
      %v2514 = vpop.xlane.xlu0 %2513
      %2515 = vadd.xlane.f32.xlu0 %v2484
      %v2516 = vpop.xlane.xlu0 %2515
      %2517 = vadd.xlane.f32.xlu0 %v2486
      %v2518 = vpop.xlane.xlu0 %2517
      %2519 = vadd.xlane.f32.xlu0 %v2488
      %v2520 = vpop.xlane.xlu0 %2519
      %2521 = vadd.xlane.f32.xlu0 %v2490
      %v2522 = vpop.xlane.xlu0 %2521
      %2523 = vrot.lane.b32.xlu0 %v724, 48
      %v2524 = vpop.permute.xlu0 %2523
      %2525 = vrot.lane.b32.xlu0 %v729, 48
      %v2526 = vpop.permute.xlu0 %2525
      %2527 = vrot.lane.b32.xlu0 %v734, 48
      %v2528 = vpop.permute.xlu0 %2527
      %2529 = vrot.lane.b32.xlu0 %v739, 48
      %v2530 = vpop.permute.xlu0 %2529
      %2531 = vrot.lane.b32.xlu0 %v744, 48
      %v2532 = vpop.permute.xlu0 %2531
      %2533 = vrot.lane.b32.xlu0 %v749, 48
      %v2534 = vpop.permute.xlu0 %2533
      %2535 = vrot.lane.b32.xlu0 %v754, 48
      %v2536 = vpop.permute.xlu0 %2535
      %2537 = vrot.lane.b32.xlu0 %v759, 48
      %v2538 = vpop.permute.xlu0 %2537
      %2539 = vrot.lane.b32.xlu0 %v764, 48
      %v2540 = vpop.permute.xlu0 %2539
      %2541 = vrot.lane.b32.xlu0 %v769, 48
      %v2542 = vpop.permute.xlu0 %2541
      %2543 = vrot.lane.b32.xlu0 %v774, 48
      %v2544 = vpop.permute.xlu0 %2543
      %2545 = vrot.lane.b32.xlu0 %v779, 48
      %v2546 = vpop.permute.xlu0 %2545
      %2547 = vrot.lane.b32.xlu0 %v784, 48
      %v2548 = vpop.permute.xlu0 %2547
      %2549 = vrot.lane.b32.xlu0 %v789, 48
      %v2550 = vpop.permute.xlu0 %2549
      %2551 = vrot.lane.b32.xlu0 %v794, 48
      %v2552 = vpop.permute.xlu0 %2551
      %2553 = vrot.lane.b32.xlu0 %v799, 48
      %v2554 = vpop.permute.xlu0 %2553
      %2571 = vmatprep.subr.mxu0 0.0
      %2572 = vmatpush1.msra.mxu0 %v2524
      %2573 = vmatprep.subr.mxu0 0.0
      %2574 = vmatpush1.msra.mxu0 %v2526
      %2575 = vmatprep.subr.mxu0 0.0
      %2576 = vmatpush1.msra.mxu0 %v2528
      %2577 = vmatprep.subr.mxu0 0.0
      %2578 = vmatpush1.msra.mxu0 %v2530
      %2579 = vmatprep.subr.mxu0 0.0
      %2580 = vmatpush1.msra.mxu0 %v2532
      %2581 = vmatprep.subr.mxu0 0.0
      %2582 = vmatpush1.msra.mxu0 %v2534
      %2583 = vmatprep.subr.mxu0 0.0
      %2584 = vmatpush1.msra.mxu0 %v2536
      %2585 = vmatprep.subr.mxu0 0.0
      %2586 = vmatpush1.msra.mxu0 %v2538
      %2587 = vmatprep.subr.mxu0 0.0
      %2588 = vmatpush1.msra.mxu0 %v2540
      %2589 = vmatprep.subr.mxu0 0.0
      %2590 = vmatpush1.msra.mxu0 %v2542
      %2591 = vmatprep.subr.mxu0 0.0
      %2592 = vmatpush1.msra.mxu0 %v2544
      %2593 = vmatprep.subr.mxu0 0.0
      %2594 = vmatpush1.msra.mxu0 %v2546
      %2595 = vmatprep.subr.mxu0 0.0
      %2596 = vmatpush1.msra.mxu0 %v2548
      %2597 = vmatprep.subr.mxu0 0.0
      %2598 = vmatpush1.msra.mxu0 %v2550
      %2599 = vmatprep.subr.mxu0 0.0
      %2600 = vmatpush1.msra.mxu0 %v2552
      %2601 = vmatprep.subr.mxu0 0.0
      %2602 = vmatpush1.msra.mxu0 %v2554
      %2603 = vmatprep.subr.mxu0 0.0
      %2604 = vmatpush1.msra.mxu0 0.0
      %2605 = vmatprep.subr.mxu0 0.0
      %2606 = vmatpush1.msra.mxu0 0.0
      %2607 = vmatprep.subr.mxu0 0.0
      %2608 = vmatpush1.msra.mxu0 0.0
      %2609 = vmatprep.subr.mxu0 0.0
      %2610 = vmatpush1.msra.mxu0 0.0
      %2611 = vmatprep.subr.mxu0 0.0
      %2612 = vmatpush1.msra.mxu0 0.0
      %2613 = vmatprep.subr.mxu0 0.0
      %2614 = vmatpush1.msra.mxu0 0.0
      %2615 = vmatprep.subr.mxu0 0.0
      %2616 = vmatpush1.msra.mxu0 0.0
      %2617 = vmatprep.subr.mxu0 0.0
      %2618 = vmatpush1.msra.mxu0 0.0
      %2619 = vmatprep.subr.mxu0 0.0
      %2620 = vmatpush1.msra.mxu0 0.0
      %2621 = vmatprep.subr.mxu0 0.0
      %2622 = vmatpush1.msra.mxu0 0.0
      %2623 = vmatprep.subr.mxu0 0.0
      %2624 = vmatpush1.msra.mxu0 0.0
      %2625 = vmatprep.subr.mxu0 0.0
      %2626 = vmatpush1.msra.mxu0 0.0
      %2627 = vmatprep.subr.mxu0 0.0
      %2628 = vmatpush1.msra.mxu0 0.0
      %2629 = vmatprep.subr.mxu0 0.0
      %2630 = vmatpush1.msra.mxu0 0.0
      %2631 = vmatprep.subr.mxu0 0.0
      %2632 = vmatpush1.msra.mxu0 0.0
      %2633 = vmatprep.subr.mxu0 0.0
      %2634 = vmatpush1.msra.mxu0 0.0
      %2635 = vmatprep.mubr.f32.mxu0 0.0
      %2636 = vmatmul.mubr.f32.gmra.mrb[0].mxu0 %v2460
      %v2637 = vpop.f32.mrb[0].mxu0
      %v2638 = vadd.f32 0.0, %v2637
      %v2639 = vpop.f32.mrb[0].mxu0
      %2640 = vmatprep.mubr.f32.mxu0 0.0
      %2641 = vmatmul.mubr.f32.gmra.mrb[0].mxu0 %v2462
      %v2642 = vpop.f32.mrb[0].mxu0
      %v2643 = vadd.f32 0.0, %v2642
      %v2644 = vpop.f32.mrb[0].mxu0
      %2645 = vmatprep.mubr.f32.mxu0 0.0
      %2646 = vmatmul.mubr.f32.gmra.mrb[0].mxu0 %v2464
      %v2647 = vpop.f32.mrb[0].mxu0
      %v2648 = vadd.f32 0.0, %v2647
      %v2649 = vpop.f32.mrb[0].mxu0
      %2650 = vmatprep.mubr.f32.mxu0 0.0
      %2651 = vmatmul.mubr.f32.gmra.mrb[0].mxu0 %v2466
      %v2652 = vpop.f32.mrb[0].mxu0
      %v2653 = vadd.f32 0.0, %v2652
      %v2654 = vpop.f32.mrb[0].mxu0
      %2655 = vmatprep.mubr.f32.mxu0 0.0
      %2656 = vmatmul.mubr.f32.gmra.mrb[0].mxu0 %v2468
      %v2657 = vpop.f32.mrb[0].mxu0
      %v2658 = vadd.f32 0.0, %v2657
      %v2659 = vpop.f32.mrb[0].mxu0
      %2660 = vmatprep.mubr.f32.mxu0 0.0
      %2661 = vmatmul.mubr.f32.gmra.mrb[0].mxu0 %v2470
      %v2662 = vpop.f32.mrb[0].mxu0
      %v2663 = vadd.f32 0.0, %v2662
      %v2664 = vpop.f32.mrb[0].mxu0
      %2665 = vmatprep.mubr.f32.mxu0 0.0
      %2666 = vmatmul.mubr.f32.gmra.mrb[0].mxu0 %v2472
      %v2667 = vpop.f32.mrb[0].mxu0
      %v2668 = vadd.f32 0.0, %v2667
      %v2669 = vpop.f32.mrb[0].mxu0
      %2670 = vmatprep.mubr.f32.mxu0 0.0
      %2671 = vmatmul.mubr.f32.gmra.mrb[0].mxu0 %v2474
      %v2672 = vpop.f32.mrb[0].mxu0
      %v2673 = vadd.f32 0.0, %v2672
      %v2674 = vpop.f32.mrb[0].mxu0
      %2675 = vmatprep.mubr.f32.mxu0 0.0
      %2676 = vmatmul.mubr.f32.gmra.mrb[0].mxu0 %v2476
      %v2677 = vpop.f32.mrb[0].mxu0
      %v2678 = vadd.f32 0.0, %v2677
      %v2679 = vpop.f32.mrb[0].mxu0
      %2680 = vmatprep.mubr.f32.mxu0 0.0
      %2681 = vmatmul.mubr.f32.gmra.mrb[0].mxu0 %v2478
      %v2682 = vpop.f32.mrb[0].mxu0
      %v2683 = vadd.f32 0.0, %v2682
      %v2684 = vpop.f32.mrb[0].mxu0
      %2685 = vmatprep.mubr.f32.mxu0 0.0
      %2686 = vmatmul.mubr.f32.gmra.mrb[0].mxu0 %v2480
      %v2687 = vpop.f32.mrb[0].mxu0
      %v2688 = vadd.f32 0.0, %v2687
      %v2689 = vpop.f32.mrb[0].mxu0
      %2690 = vmatprep.mubr.f32.mxu0 0.0
      %2691 = vmatmul.mubr.f32.gmra.mrb[0].mxu0 %v2482
      %v2692 = vpop.f32.mrb[0].mxu0
      %v2693 = vadd.f32 0.0, %v2692
      %v2694 = vpop.f32.mrb[0].mxu0
      %2695 = vmatprep.mubr.f32.mxu0 0.0
      %2696 = vmatmul.mubr.f32.gmra.mrb[0].mxu0 %v2484
      %v2697 = vpop.f32.mrb[0].mxu0
      %v2698 = vadd.f32 0.0, %v2697
      %v2699 = vpop.f32.mrb[0].mxu0
      %2700 = vmatprep.mubr.f32.mxu0 0.0
      %2701 = vmatmul.mubr.f32.gmra.mrb[0].mxu0 %v2486
      %v2702 = vpop.f32.mrb[0].mxu0
      %v2703 = vadd.f32 0.0, %v2702
      %v2704 = vpop.f32.mrb[0].mxu0
      %2705 = vmatprep.mubr.f32.mxu0 0.0
      %2706 = vmatmul.mubr.f32.gmra.mrb[0].mxu0 %v2488
      %v2707 = vpop.f32.mrb[0].mxu0
      %v2708 = vadd.f32 0.0, %v2707
      %v2709 = vpop.f32.mrb[0].mxu0
      %2710 = vmatprep.mubr.f32.mxu0 0.0
      %2711 = vmatmul.mubr.f32.gmra.mrb[0].mxu0 %v2490
      %v2712 = vpop.f32.mrb[0].mxu0
      %v2713 = vadd.f32 0.0, %v2712
      %v2714 = vpop.f32.mrb[0].mxu0
      %2715 = vdwg.mxu0
      %v2716 = vrcp.pop %v2492
      %v2717 = vrcp.pop %v2494
      %v2718 = vrcp.pop %v2496
      %v2719 = vrcp.pop %v2498
      %v2720 = vrcp.pop %v2500
      %v2721 = vrcp.pop %v2502
      %v2722 = vrcp.pop %v2504
      %v2723 = vrcp.pop %v2506
      %v2724 = vrcp.pop %v2508
      %v2725 = vrcp.pop %v2510
      %v2726 = vrcp.pop %v2512
      %v2727 = vrcp.pop %v2514
      %v2728 = vrcp.pop %v2516
      %v2729 = vrcp.pop %v2518
      %v2730 = vrcp.pop %v2520
      %v2731 = vrcp.pop %v2522
      %v2732 = vmul.f32 %v2638, %v2716
      %v2733 = vmul.f32 %v2643, %v2717
      %v2734 = vmul.f32 %v2648, %v2718
      %v2735 = vmul.f32 %v2653, %v2719
      %v2736 = vmul.f32 %v2658, %v2720
      %v2737 = vmul.f32 %v2663, %v2721
      %v2738 = vmul.f32 %v2668, %v2722
      %v2739 = vmul.f32 %v2673, %v2723
      %v2740 = vmul.f32 %v2678, %v2724
      %v2741 = vmul.f32 %v2683, %v2725
      %v2742 = vmul.f32 %v2688, %v2726
      %v2743 = vmul.f32 %v2693, %v2727
      %v2744 = vmul.f32 %v2698, %v2728
      %v2745 = vmul.f32 %v2703, %v2729
      %v2746 = vmul.f32 %v2708, %v2730
      %v2747 = vmul.f32 %v2713, %v2731
      %2748 = vrot.lane.b32.xlu0 %v724, 104
      %v2749 = vpop.permute.xlu0 %2748
      %2750 = vrot.lane.b32.xlu0 %v729, 104
      %v2751 = vpop.permute.xlu0 %2750
      %2752 = vrot.lane.b32.xlu0 %v734, 104
      %v2753 = vpop.permute.xlu0 %2752
      %2754 = vrot.lane.b32.xlu0 %v739, 104
      %v2755 = vpop.permute.xlu0 %2754
      %2756 = vrot.lane.b32.xlu0 %v744, 104
      %v2757 = vpop.permute.xlu0 %2756
      %2758 = vrot.lane.b32.xlu0 %v749, 104
      %v2759 = vpop.permute.xlu0 %2758
      %2760 = vrot.lane.b32.xlu0 %v754, 104
      %v2761 = vpop.permute.xlu0 %2760
      %2762 = vrot.lane.b32.xlu0 %v759, 104
      %v2763 = vpop.permute.xlu0 %2762
      %2764 = vrot.lane.b32.xlu0 %v764, 104
      %v2765 = vpop.permute.xlu0 %2764
      %2766 = vrot.lane.b32.xlu0 %v769, 104
      %v2767 = vpop.permute.xlu0 %2766
      %2768 = vrot.lane.b32.xlu0 %v774, 104
      %v2769 = vpop.permute.xlu0 %2768
      %2770 = vrot.lane.b32.xlu0 %v779, 104
      %v2771 = vpop.permute.xlu0 %2770
      %2772 = vrot.lane.b32.xlu0 %v784, 104
      %v2773 = vpop.permute.xlu0 %2772
      %2774 = vrot.lane.b32.xlu0 %v789, 104
      %v2775 = vpop.permute.xlu0 %2774
      %2776 = vrot.lane.b32.xlu0 %v794, 104
      %v2777 = vpop.permute.xlu0 %2776
      %2778 = vrot.lane.b32.xlu0 %v799, 104
      %v2779 = vpop.permute.xlu0 %2778
      %2780 = vrot.lane.b32.xlu0 %v724, 72
      %v2781 = vpop.permute.xlu0 %2780
      %2782 = vrot.lane.b32.xlu0 %v729, 72
      %v2783 = vpop.permute.xlu0 %2782
      %2784 = vrot.lane.b32.xlu0 %v734, 72
      %v2785 = vpop.permute.xlu0 %2784
      %2786 = vrot.lane.b32.xlu0 %v739, 72
      %v2787 = vpop.permute.xlu0 %2786
      %2788 = vrot.lane.b32.xlu0 %v744, 72
      %v2789 = vpop.permute.xlu0 %2788
      %2790 = vrot.lane.b32.xlu0 %v749, 72
      %v2791 = vpop.permute.xlu0 %2790
      %2792 = vrot.lane.b32.xlu0 %v754, 72
      %v2793 = vpop.permute.xlu0 %2792
      %2794 = vrot.lane.b32.xlu0 %v759, 72
      %v2795 = vpop.permute.xlu0 %2794
      %2796 = vrot.lane.b32.xlu0 %v764, 72
      %v2797 = vpop.permute.xlu0 %2796
      %2798 = vrot.lane.b32.xlu0 %v769, 72
      %v2799 = vpop.permute.xlu0 %2798
      %2800 = vrot.lane.b32.xlu0 %v774, 72
      %v2801 = vpop.permute.xlu0 %2800
      %2802 = vrot.lane.b32.xlu0 %v779, 72
      %v2803 = vpop.permute.xlu0 %2802
      %2804 = vrot.lane.b32.xlu0 %v784, 72
      %v2805 = vpop.permute.xlu0 %2804
      %2806 = vrot.lane.b32.xlu0 %v789, 72
      %v2807 = vpop.permute.xlu0 %2806
      %2808 = vrot.lane.b32.xlu0 %v794, 72
      %v2809 = vpop.permute.xlu0 %2808
      %2810 = vrot.lane.b32.xlu0 %v799, 72
      %v2811 = vpop.permute.xlu0 %2810
      %v2812 = vsel %vm885, %v2749, 0
      %v2814 = vsel %vm885, %v2751, 0
      %v2816 = vsel %vm885, %v2753, 0
      %v2818 = vsel %vm885, %v2755, 0
      %v2820 = vsel %vm885, %v2757, 0
      %v2822 = vsel %vm885, %v2759, 0
      %v2824 = vsel %vm885, %v2761, 0
      %v2826 = vsel %vm885, %v2763, 0
      %v2828 = vsel %vm885, %v2765, 0
      %v2830 = vsel %vm885, %v2767, 0
      %v2832 = vsel %vm885, %v2769, 0
      %v2834 = vsel %vm885, %v2771, 0
      %v2836 = vsel %vm885, %v2773, 0
      %v2838 = vsel %vm885, %v2775, 0
      %v2840 = vsel %vm885, %v2777, 0
      %v2842 = vsel %vm885, %v2779, 0
      %v2844 = vsel %vm885, %v2781, 0
      %v2846 = vsel %vm885, %v2783, 0
      %v2848 = vsel %vm885, %v2785, 0
      %v2850 = vsel %vm885, %v2787, 0
      %v2852 = vsel %vm885, %v2789, 0
      %v2854 = vsel %vm885, %v2791, 0
      %v2856 = vsel %vm885, %v2793, 0
      %v2858 = vsel %vm885, %v2795, 0
      %v2860 = vsel %vm885, %v2797, 0
      %v2862 = vsel %vm885, %v2799, 0
      %v2864 = vsel %vm885, %v2801, 0
      %v2866 = vsel %vm885, %v2803, 0
      %v2868 = vsel %vm885, %v2805, 0
      %v2870 = vsel %vm885, %v2807, 0
      %v2872 = vsel %vm885, %v2809, 0
      %v2874 = vsel %vm885, %v2811, 0
      %2876 = vmatprep.subr.mxu0 0.0
      %2877 = vmatpush1.xpose.msra.mxu0 %v2844
      %2878 = vmatprep.subr.mxu0 0.0
      %2879 = vmatpush1.xpose.msra.mxu0 %v2846
      %2880 = vmatprep.subr.mxu0 0.0
      %2881 = vmatpush1.xpose.msra.mxu0 %v2848
      %2882 = vmatprep.subr.mxu0 0.0
      %2883 = vmatpush1.xpose.msra.mxu0 %v2850
      %2884 = vmatprep.subr.mxu0 0.0
      %2885 = vmatpush1.xpose.msra.mxu0 %v2852
      %2886 = vmatprep.subr.mxu0 0.0
      %2887 = vmatpush1.xpose.msra.mxu0 %v2854
      %2888 = vmatprep.subr.mxu0 0.0
      %2889 = vmatpush1.xpose.msra.mxu0 %v2856
      %2890 = vmatprep.subr.mxu0 0.0
      %2891 = vmatpush1.xpose.msra.mxu0 %v2858
      %2892 = vmatprep.subr.mxu0 0.0
      %2893 = vmatpush1.xpose.msra.mxu0 %v2860
      %2894 = vmatprep.subr.mxu0 0.0
      %2895 = vmatpush1.xpose.msra.mxu0 %v2862
      %2896 = vmatprep.subr.mxu0 0.0
      %2897 = vmatpush1.xpose.msra.mxu0 %v2864
      %2898 = vmatprep.subr.mxu0 0.0
      %2899 = vmatpush1.xpose.msra.mxu0 %v2866
      %2900 = vmatprep.subr.mxu0 0.0
      %2901 = vmatpush1.xpose.msra.mxu0 %v2868
      %2902 = vmatprep.subr.mxu0 0.0
      %2903 = vmatpush1.xpose.msra.mxu0 %v2870
      %2904 = vmatprep.subr.mxu0 0.0
      %2905 = vmatpush1.xpose.msra.mxu0 %v2872
      %2906 = vmatprep.subr.mxu0 0.0
      %2907 = vmatpush1.xpose.msra.mxu0 %v2874
      %2908 = vmatprep.subr.mxu0 0.0
      %2909 = vmatpush1.xpose.msra.mxu0 0.0
      %2910 = vmatprep.subr.mxu0 0.0
      %2911 = vmatpush1.xpose.msra.mxu0 0.0
      %2912 = vmatprep.subr.mxu0 0.0
      %2913 = vmatpush1.xpose.msra.mxu0 0.0
      %2914 = vmatprep.subr.mxu0 0.0
      %2915 = vmatpush1.xpose.msra.mxu0 0.0
      %2916 = vmatprep.subr.mxu0 0.0
      %2917 = vmatpush1.xpose.msra.mxu0 0.0
      %2918 = vmatprep.subr.mxu0 0.0
      %2919 = vmatpush1.xpose.msra.mxu0 0.0
      %2920 = vmatprep.subr.mxu0 0.0
      %2921 = vmatpush1.xpose.msra.mxu0 0.0
      %2922 = vmatprep.subr.mxu0 0.0
      %2923 = vmatpush1.xpose.msra.mxu0 0.0
      %2924 = vmatprep.subr.mxu0 0.0
      %2925 = vmatpush1.xpose.msra.mxu0 0.0
      %2926 = vmatprep.subr.mxu0 0.0
      %2927 = vmatpush1.xpose.msra.mxu0 0.0
      %2928 = vmatprep.subr.mxu0 0.0
      %2929 = vmatpush1.xpose.msra.mxu0 0.0
      %2930 = vmatprep.subr.mxu0 0.0
      %2931 = vmatpush1.xpose.msra.mxu0 0.0
      %2932 = vmatprep.subr.mxu0 0.0
      %2933 = vmatpush1.xpose.msra.mxu0 0.0
      %2934 = vmatprep.subr.mxu0 0.0
      %2935 = vmatpush1.xpose.msra.mxu0 0.0
      %2936 = vmatprep.subr.mxu0 0.0
      %2937 = vmatpush1.xpose.msra.mxu0 0.0
      %2938 = vmatprep.subr.mxu0 0.0
      %2939 = vmatpush1.xpose.msra.mxu0 0.0
      %2940 = vmatprep.mubr.f32.mxu0 0.0
      %2941 = vmatmul.mubr.f32.gmra.mrb[0].mxu0 %v2812
      %v2942 = vpop.f32.mrb[0].mxu0
      %v2943 = vadd.f32 0.0, %v2942
      %v2944 = vpop.f32.mrb[0].mxu0
      %2945 = vmatprep.mubr.f32.mxu0 0.0
      %2946 = vmatmul.mubr.f32.gmra.mrb[0].mxu0 %v2814
      %v2947 = vpop.f32.mrb[0].mxu0
      %v2948 = vadd.f32 0.0, %v2947
      %v2949 = vpop.f32.mrb[0].mxu0
      %2950 = vmatprep.mubr.f32.mxu0 0.0
      %2951 = vmatmul.mubr.f32.gmra.mrb[0].mxu0 %v2816
      %v2952 = vpop.f32.mrb[0].mxu0
      %v2953 = vadd.f32 0.0, %v2952
      %v2954 = vpop.f32.mrb[0].mxu0
      %2955 = vmatprep.mubr.f32.mxu0 0.0
      %2956 = vmatmul.mubr.f32.gmra.mrb[0].mxu0 %v2818
      %v2957 = vpop.f32.mrb[0].mxu0
      %v2958 = vadd.f32 0.0, %v2957
      %v2959 = vpop.f32.mrb[0].mxu0
      %2960 = vmatprep.mubr.f32.mxu0 0.0
      %2961 = vmatmul.mubr.f32.gmra.mrb[0].mxu0 %v2820
      %v2962 = vpop.f32.mrb[0].mxu0
      %v2963 = vadd.f32 0.0, %v2962
      %v2964 = vpop.f32.mrb[0].mxu0
      %2965 = vmatprep.mubr.f32.mxu0 0.0
      %2966 = vmatmul.mubr.f32.gmra.mrb[0].mxu0 %v2822
      %v2967 = vpop.f32.mrb[0].mxu0
      %v2968 = vadd.f32 0.0, %v2967
      %v2969 = vpop.f32.mrb[0].mxu0
      %2970 = vmatprep.mubr.f32.mxu0 0.0
      %2971 = vmatmul.mubr.f32.gmra.mrb[0].mxu0 %v2824
      %v2972 = vpop.f32.mrb[0].mxu0
      %v2973 = vadd.f32 0.0, %v2972
      %v2974 = vpop.f32.mrb[0].mxu0
      %2975 = vmatprep.mubr.f32.mxu0 0.0
      %2976 = vmatmul.mubr.f32.gmra.mrb[0].mxu0 %v2826
      %v2977 = vpop.f32.mrb[0].mxu0
      %v2978 = vadd.f32 0.0, %v2977
      %v2979 = vpop.f32.mrb[0].mxu0
      %2980 = vmatprep.mubr.f32.mxu0 0.0
      %2981 = vmatmul.mubr.f32.gmra.mrb[0].mxu0 %v2828
      %v2982 = vpop.f32.mrb[0].mxu0
      %v2983 = vadd.f32 0.0, %v2982
      %v2984 = vpop.f32.mrb[0].mxu0
      %2985 = vmatprep.mubr.f32.mxu0 0.0
      %2986 = vmatmul.mubr.f32.gmra.mrb[0].mxu0 %v2830
      %v2987 = vpop.f32.mrb[0].mxu0
      %v2988 = vadd.f32 0.0, %v2987
      %v2989 = vpop.f32.mrb[0].mxu0
      %2990 = vmatprep.mubr.f32.mxu0 0.0
      %2991 = vmatmul.mubr.f32.gmra.mrb[0].mxu0 %v2832
      %v2992 = vpop.f32.mrb[0].mxu0
      %v2993 = vadd.f32 0.0, %v2992
      %v2994 = vpop.f32.mrb[0].mxu0
      %2995 = vmatprep.mubr.f32.mxu0 0.0
      %2996 = vmatmul.mubr.f32.gmra.mrb[0].mxu0 %v2834
      %v2997 = vpop.f32.mrb[0].mxu0
      %v2998 = vadd.f32 0.0, %v2997
      %v2999 = vpop.f32.mrb[0].mxu0
      %3000 = vmatprep.mubr.f32.mxu0 0.0
      %3001 = vmatmul.mubr.f32.gmra.mrb[0].mxu0 %v2836
      %v3002 = vpop.f32.mrb[0].mxu0
      %v3003 = vadd.f32 0.0, %v3002
      %v3004 = vpop.f32.mrb[0].mxu0
      %3005 = vmatprep.mubr.f32.mxu0 0.0
      %3006 = vmatmul.mubr.f32.gmra.mrb[0].mxu0 %v2838
      %v3007 = vpop.f32.mrb[0].mxu0
      %v3008 = vadd.f32 0.0, %v3007
      %v3009 = vpop.f32.mrb[0].mxu0
      %3010 = vmatprep.mubr.f32.mxu0 0.0
      %3011 = vmatmul.mubr.f32.gmra.mrb[0].mxu0 %v2840
      %v3012 = vpop.f32.mrb[0].mxu0
      %v3013 = vadd.f32 0.0, %v3012
      %v3014 = vpop.f32.mrb[0].mxu0
      %3015 = vmatprep.mubr.f32.mxu0 0.0
      %3016 = vmatmul.mubr.f32.gmra.mrb[0].mxu0 %v2842
      %v3017 = vpop.f32.mrb[0].mxu0
      %v3018 = vadd.f32 0.0, %v3017
      %v3019 = vpop.f32.mrb[0].mxu0
      %3020 = vdwg.mxu0
      %v3021 = vmul.f32 %v2943, 0.35355338
      %v3022 = vmul.f32 %v2948, 0.35355338
      %v3023 = vmul.f32 %v2953, 0.35355338
      %v3024 = vmul.f32 %v2958, 0.35355338
      %v3025 = vmul.f32 %v2963, 0.35355338
      %v3026 = vmul.f32 %v2968, 0.35355338
      %v3027 = vmul.f32 %v2973, 0.35355338
      %v3028 = vmul.f32 %v2978, 0.35355338
      %v3029 = vmul.f32 %v2983, 0.35355338
      %v3030 = vmul.f32 %v2988, 0.35355338
      %v3031 = vmul.f32 %v2993, 0.35355338
      %v3032 = vmul.f32 %v2998, 0.35355338
      %v3033 = vmul.f32 %v3003, 0.35355338
      %v3034 = vmul.f32 %v3008, 0.35355338
      %v3035 = vmul.f32 %v3013, 0.35355338
      %v3036 = vmul.f32 %v3018, 0.35355338
      %v3037 = vsel %vm821, %v3021, -inf
      %v3038 = vsel %vm822, %v3022, -inf
      %v3039 = vsel %vm823, %v3023, -inf
      %v3040 = vsel %vm824, %v3024, -inf
      %v3041 = vsel %vm825, %v3025, -inf
      %v3042 = vsel %vm826, %v3026, -inf
      %v3043 = vsel %vm827, %v3027, -inf
      %v3044 = vsel %vm828, %v3028, -inf
      %v3045 = vsel %vm829, %v3029, -inf
      %v3046 = vsel %vm830, %v3030, -inf
      %v3047 = vsel %vm831, %v3031, -inf
      %v3048 = vsel %vm832, %v3032, -inf
      %v3049 = vsel %vm833, %v3033, -inf
      %v3050 = vsel %vm834, %v3034, -inf
      %v3051 = vsel %vm835, %v3035, -inf
      %v3052 = vsel %vm836, %v3036, -inf
      %3053 = vmax.xlane.f32.xlu0 %v3037
      %v3054 = vpop.xlane.xlu0 %3053
      %3055 = vmax.xlane.f32.xlu0 %v3038
      %v3056 = vpop.xlane.xlu0 %3055
      %3057 = vmax.xlane.f32.xlu0 %v3039
      %v3058 = vpop.xlane.xlu0 %3057
      %3059 = vmax.xlane.f32.xlu0 %v3040
      %v3060 = vpop.xlane.xlu0 %3059
      %3061 = vmax.xlane.f32.xlu0 %v3041
      %v3062 = vpop.xlane.xlu0 %3061
      %3063 = vmax.xlane.f32.xlu0 %v3042
      %v3064 = vpop.xlane.xlu0 %3063
      %3065 = vmax.xlane.f32.xlu0 %v3043
      %v3066 = vpop.xlane.xlu0 %3065
      %3067 = vmax.xlane.f32.xlu0 %v3044
      %v3068 = vpop.xlane.xlu0 %3067
      %3069 = vmax.xlane.f32.xlu0 %v3045
      %v3070 = vpop.xlane.xlu0 %3069
      %3071 = vmax.xlane.f32.xlu0 %v3046
      %v3072 = vpop.xlane.xlu0 %3071
      %3073 = vmax.xlane.f32.xlu0 %v3047
      %v3074 = vpop.xlane.xlu0 %3073
      %3075 = vmax.xlane.f32.xlu0 %v3048
      %v3076 = vpop.xlane.xlu0 %3075
      %3077 = vmax.xlane.f32.xlu0 %v3049
      %v3078 = vpop.xlane.xlu0 %3077
      %3079 = vmax.xlane.f32.xlu0 %v3050
      %v3080 = vpop.xlane.xlu0 %3079
      %3081 = vmax.xlane.f32.xlu0 %v3051
      %v3082 = vpop.xlane.xlu0 %3081
      %3083 = vmax.xlane.f32.xlu0 %v3052
      %v3084 = vpop.xlane.xlu0 %3083
      %v3085 = vsub.f32 %v3037, %v3054
      %v3086 = vsub.f32 %v3038, %v3056
      %v3087 = vsub.f32 %v3039, %v3058
      %v3088 = vsub.f32 %v3040, %v3060
      %v3089 = vsub.f32 %v3041, %v3062
      %v3090 = vsub.f32 %v3042, %v3064
      %v3091 = vsub.f32 %v3043, %v3066
      %v3092 = vsub.f32 %v3044, %v3068
      %v3093 = vsub.f32 %v3045, %v3070
      %v3094 = vsub.f32 %v3046, %v3072
      %v3095 = vsub.f32 %v3047, %v3074
      %v3096 = vsub.f32 %v3048, %v3076
      %v3097 = vsub.f32 %v3049, %v3078
      %v3098 = vsub.f32 %v3050, %v3080
      %v3099 = vsub.f32 %v3051, %v3082
      %v3100 = vsub.f32 %v3052, %v3084
      %v3101 = vmul.f32 %v3085, 1.442695
      %v3102 = vpow.pop %v3101
      %v3103 = vmul.f32 %v3086, 1.442695
      %v3104 = vpow.pop %v3103
      %v3105 = vmul.f32 %v3087, 1.442695
      %v3106 = vpow.pop %v3105
      %v3107 = vmul.f32 %v3088, 1.442695
      %v3108 = vpow.pop %v3107
      %v3109 = vmul.f32 %v3089, 1.442695
      %v3110 = vpow.pop %v3109
      %v3111 = vmul.f32 %v3090, 1.442695
      %v3112 = vpow.pop %v3111
      %v3113 = vmul.f32 %v3091, 1.442695
      %v3114 = vpow.pop %v3113
      %v3115 = vmul.f32 %v3092, 1.442695
      %v3116 = vpow.pop %v3115
      %v3117 = vmul.f32 %v3093, 1.442695
      %v3118 = vpow.pop %v3117
      %v3119 = vmul.f32 %v3094, 1.442695
      %v3120 = vpow.pop %v3119
      %v3121 = vmul.f32 %v3095, 1.442695
      %v3122 = vpow.pop %v3121
      %v3123 = vmul.f32 %v3096, 1.442695
      %v3124 = vpow.pop %v3123
      %v3125 = vmul.f32 %v3097, 1.442695
      %v3126 = vpow.pop %v3125
      %v3127 = vmul.f32 %v3098, 1.442695
      %v3128 = vpow.pop %v3127
      %v3129 = vmul.f32 %v3099, 1.442695
      %v3130 = vpow.pop %v3129
      %v3131 = vmul.f32 %v3100, 1.442695
      %v3132 = vpow.pop %v3131
      %3133 = vadd.xlane.f32.xlu0 %v3102
      %v3134 = vpop.xlane.xlu0 %3133
      %3135 = vadd.xlane.f32.xlu0 %v3104
      %v3136 = vpop.xlane.xlu0 %3135
      %3137 = vadd.xlane.f32.xlu0 %v3106
      %v3138 = vpop.xlane.xlu0 %3137
      %3139 = vadd.xlane.f32.xlu0 %v3108
      %v3140 = vpop.xlane.xlu0 %3139
      %3141 = vadd.xlane.f32.xlu0 %v3110
      %v3142 = vpop.xlane.xlu0 %3141
      %3143 = vadd.xlane.f32.xlu0 %v3112
      %v3144 = vpop.xlane.xlu0 %3143
      %3145 = vadd.xlane.f32.xlu0 %v3114
      %v3146 = vpop.xlane.xlu0 %3145
      %3147 = vadd.xlane.f32.xlu0 %v3116
      %v3148 = vpop.xlane.xlu0 %3147
      %3149 = vadd.xlane.f32.xlu0 %v3118
      %v3150 = vpop.xlane.xlu0 %3149
      %3151 = vadd.xlane.f32.xlu0 %v3120
      %v3152 = vpop.xlane.xlu0 %3151
      %3153 = vadd.xlane.f32.xlu0 %v3122
      %v3154 = vpop.xlane.xlu0 %3153
      %3155 = vadd.xlane.f32.xlu0 %v3124
      %v3156 = vpop.xlane.xlu0 %3155
      %3157 = vadd.xlane.f32.xlu0 %v3126
      %v3158 = vpop.xlane.xlu0 %3157
      %3159 = vadd.xlane.f32.xlu0 %v3128
      %v3160 = vpop.xlane.xlu0 %3159
      %3161 = vadd.xlane.f32.xlu0 %v3130
      %v3162 = vpop.xlane.xlu0 %3161
      %3163 = vadd.xlane.f32.xlu0 %v3132
      %v3164 = vpop.xlane.xlu0 %3163
      %3165 = vrot.lane.b32.xlu0 %v724, 40
      %v3166 = vpop.permute.xlu0 %3165
      %3167 = vrot.lane.b32.xlu0 %v729, 40
      %v3168 = vpop.permute.xlu0 %3167
      %3169 = vrot.lane.b32.xlu0 %v734, 40
      %v3170 = vpop.permute.xlu0 %3169
      %3171 = vrot.lane.b32.xlu0 %v739, 40
      %v3172 = vpop.permute.xlu0 %3171
      %3173 = vrot.lane.b32.xlu0 %v744, 40
      %v3174 = vpop.permute.xlu0 %3173
      %3175 = vrot.lane.b32.xlu0 %v749, 40
      %v3176 = vpop.permute.xlu0 %3175
      %3177 = vrot.lane.b32.xlu0 %v754, 40
      %v3178 = vpop.permute.xlu0 %3177
      %3179 = vrot.lane.b32.xlu0 %v759, 40
      %v3180 = vpop.permute.xlu0 %3179
      %3181 = vrot.lane.b32.xlu0 %v764, 40
      %v3182 = vpop.permute.xlu0 %3181
      %3183 = vrot.lane.b32.xlu0 %v769, 40
      %v3184 = vpop.permute.xlu0 %3183
      %3185 = vrot.lane.b32.xlu0 %v774, 40
      %v3186 = vpop.permute.xlu0 %3185
      %3187 = vrot.lane.b32.xlu0 %v779, 40
      %v3188 = vpop.permute.xlu0 %3187
      %3189 = vrot.lane.b32.xlu0 %v784, 40
      %v3190 = vpop.permute.xlu0 %3189
      %3191 = vrot.lane.b32.xlu0 %v789, 40
      %v3192 = vpop.permute.xlu0 %3191
      %3193 = vrot.lane.b32.xlu0 %v794, 40
      %v3194 = vpop.permute.xlu0 %3193
      %3195 = vrot.lane.b32.xlu0 %v799, 40
      %v3196 = vpop.permute.xlu0 %3195
      %3213 = vmatprep.subr.mxu0 0.0
      %3214 = vmatpush1.msra.mxu0 %v3166
      %3215 = vmatprep.subr.mxu0 0.0
      %3216 = vmatpush1.msra.mxu0 %v3168
      %3217 = vmatprep.subr.mxu0 0.0
      %3218 = vmatpush1.msra.mxu0 %v3170
      %3219 = vmatprep.subr.mxu0 0.0
      %3220 = vmatpush1.msra.mxu0 %v3172
      %3221 = vmatprep.subr.mxu0 0.0
      %3222 = vmatpush1.msra.mxu0 %v3174
      %3223 = vmatprep.subr.mxu0 0.0
      %3224 = vmatpush1.msra.mxu0 %v3176
      %3225 = vmatprep.subr.mxu0 0.0
      %3226 = vmatpush1.msra.mxu0 %v3178
      %3227 = vmatprep.subr.mxu0 0.0
      %3228 = vmatpush1.msra.mxu0 %v3180
      %3229 = vmatprep.subr.mxu0 0.0
      %3230 = vmatpush1.msra.mxu0 %v3182
      %3231 = vmatprep.subr.mxu0 0.0
      %3232 = vmatpush1.msra.mxu0 %v3184
      %3233 = vmatprep.subr.mxu0 0.0
      %3234 = vmatpush1.msra.mxu0 %v3186
      %3235 = vmatprep.subr.mxu0 0.0
      %3236 = vmatpush1.msra.mxu0 %v3188
      %3237 = vmatprep.subr.mxu0 0.0
      %3238 = vmatpush1.msra.mxu0 %v3190
      %3239 = vmatprep.subr.mxu0 0.0
      %3240 = vmatpush1.msra.mxu0 %v3192
      %3241 = vmatprep.subr.mxu0 0.0
      %3242 = vmatpush1.msra.mxu0 %v3194
      %3243 = vmatprep.subr.mxu0 0.0
      %3244 = vmatpush1.msra.mxu0 %v3196
      %3245 = vmatprep.subr.mxu0 0.0
      %3246 = vmatpush1.msra.mxu0 0.0
      %3247 = vmatprep.subr.mxu0 0.0
      %3248 = vmatpush1.msra.mxu0 0.0
      %3249 = vmatprep.subr.mxu0 0.0
      %3250 = vmatpush1.msra.mxu0 0.0
      %3251 = vmatprep.subr.mxu0 0.0
      %3252 = vmatpush1.msra.mxu0 0.0
      %3253 = vmatprep.subr.mxu0 0.0
      %3254 = vmatpush1.msra.mxu0 0.0
      %3255 = vmatprep.subr.mxu0 0.0
      %3256 = vmatpush1.msra.mxu0 0.0
      %3257 = vmatprep.subr.mxu0 0.0
      %3258 = vmatpush1.msra.mxu0 0.0
      %3259 = vmatprep.subr.mxu0 0.0
      %3260 = vmatpush1.msra.mxu0 0.0
      %3261 = vmatprep.subr.mxu0 0.0
      %3262 = vmatpush1.msra.mxu0 0.0
      %3263 = vmatprep.subr.mxu0 0.0
      %3264 = vmatpush1.msra.mxu0 0.0
      %3265 = vmatprep.subr.mxu0 0.0
      %3266 = vmatpush1.msra.mxu0 0.0
      %3267 = vmatprep.subr.mxu0 0.0
      %3268 = vmatpush1.msra.mxu0 0.0
      %3269 = vmatprep.subr.mxu0 0.0
      %3270 = vmatpush1.msra.mxu0 0.0
      %3271 = vmatprep.subr.mxu0 0.0
      %3272 = vmatpush1.msra.mxu0 0.0
      %3273 = vmatprep.subr.mxu0 0.0
      %3274 = vmatpush1.msra.mxu0 0.0
      %3275 = vmatprep.subr.mxu0 0.0
      %3276 = vmatpush1.msra.mxu0 0.0
      %3277 = vmatprep.mubr.f32.mxu0 0.0
      %3278 = vmatmul.mubr.f32.gmra.mrb[0].mxu0 %v3102
      %v3279 = vpop.f32.mrb[0].mxu0
      %v3280 = vadd.f32 0.0, %v3279
      %v3281 = vpop.f32.mrb[0].mxu0
      %3282 = vmatprep.mubr.f32.mxu0 0.0
      %3283 = vmatmul.mubr.f32.gmra.mrb[0].mxu0 %v3104
      %v3284 = vpop.f32.mrb[0].mxu0
      %v3285 = vadd.f32 0.0, %v3284
      %v3286 = vpop.f32.mrb[0].mxu0
      %3287 = vmatprep.mubr.f32.mxu0 0.0
      %3288 = vmatmul.mubr.f32.gmra.mrb[0].mxu0 %v3106
      %v3289 = vpop.f32.mrb[0].mxu0
      %v3290 = vadd.f32 0.0, %v3289
      %v3291 = vpop.f32.mrb[0].mxu0
      %3292 = vmatprep.mubr.f32.mxu0 0.0
      %3293 = vmatmul.mubr.f32.gmra.mrb[0].mxu0 %v3108
      %v3294 = vpop.f32.mrb[0].mxu0
      %v3295 = vadd.f32 0.0, %v3294
      %v3296 = vpop.f32.mrb[0].mxu0
      %3297 = vmatprep.mubr.f32.mxu0 0.0
      %3298 = vmatmul.mubr.f32.gmra.mrb[0].mxu0 %v3110
      %v3299 = vpop.f32.mrb[0].mxu0
      %v3300 = vadd.f32 0.0, %v3299
      %v3301 = vpop.f32.mrb[0].mxu0
      %3302 = vmatprep.mubr.f32.mxu0 0.0
      %3303 = vmatmul.mubr.f32.gmra.mrb[0].mxu0 %v3112
      %v3304 = vpop.f32.mrb[0].mxu0
      %v3305 = vadd.f32 0.0, %v3304
      %v3306 = vpop.f32.mrb[0].mxu0
      %3307 = vmatprep.mubr.f32.mxu0 0.0
      %3308 = vmatmul.mubr.f32.gmra.mrb[0].mxu0 %v3114
      %v3309 = vpop.f32.mrb[0].mxu0
      %v3310 = vadd.f32 0.0, %v3309
      %v3311 = vpop.f32.mrb[0].mxu0
      %3312 = vmatprep.mubr.f32.mxu0 0.0
      %3313 = vmatmul.mubr.f32.gmra.mrb[0].mxu0 %v3116
      %v3314 = vpop.f32.mrb[0].mxu0
      %v3315 = vadd.f32 0.0, %v3314
      %v3316 = vpop.f32.mrb[0].mxu0
      %3317 = vmatprep.mubr.f32.mxu0 0.0
      %3318 = vmatmul.mubr.f32.gmra.mrb[0].mxu0 %v3118
      %v3319 = vpop.f32.mrb[0].mxu0
      %v3320 = vadd.f32 0.0, %v3319
      %v3321 = vpop.f32.mrb[0].mxu0
      %3322 = vmatprep.mubr.f32.mxu0 0.0
      %3323 = vmatmul.mubr.f32.gmra.mrb[0].mxu0 %v3120
      %v3324 = vpop.f32.mrb[0].mxu0
      %v3325 = vadd.f32 0.0, %v3324
      %v3326 = vpop.f32.mrb[0].mxu0
      %3327 = vmatprep.mubr.f32.mxu0 0.0
      %3328 = vmatmul.mubr.f32.gmra.mrb[0].mxu0 %v3122
      %v3329 = vpop.f32.mrb[0].mxu0
      %v3330 = vadd.f32 0.0, %v3329
      %v3331 = vpop.f32.mrb[0].mxu0
      %3332 = vmatprep.mubr.f32.mxu0 0.0
      %3333 = vmatmul.mubr.f32.gmra.mrb[0].mxu0 %v3124
      %v3334 = vpop.f32.mrb[0].mxu0
      %v3335 = vadd.f32 0.0, %v3334
      %v3336 = vpop.f32.mrb[0].mxu0
      %3337 = vmatprep.mubr.f32.mxu0 0.0
      %3338 = vmatmul.mubr.f32.gmra.mrb[0].mxu0 %v3126
      %v3339 = vpop.f32.mrb[0].mxu0
      %v3340 = vadd.f32 0.0, %v3339
      %v3341 = vpop.f32.mrb[0].mxu0
      %3342 = vmatprep.mubr.f32.mxu0 0.0
      %3343 = vmatmul.mubr.f32.gmra.mrb[0].mxu0 %v3128
      %v3344 = vpop.f32.mrb[0].mxu0
      %v3345 = vadd.f32 0.0, %v3344
      %v3346 = vpop.f32.mrb[0].mxu0
      %3347 = vmatprep.mubr.f32.mxu0 0.0
      %3348 = vmatmul.mubr.f32.gmra.mrb[0].mxu0 %v3130
      %v3349 = vpop.f32.mrb[0].mxu0
      %v3350 = vadd.f32 0.0, %v3349
      %v3351 = vpop.f32.mrb[0].mxu0
      %3352 = vmatprep.mubr.f32.mxu0 0.0
      %3353 = vmatmul.mubr.f32.gmra.mrb[0].mxu0 %v3132
      %v3354 = vpop.f32.mrb[0].mxu0
      %v3355 = vadd.f32 0.0, %v3354
      %v3356 = vpop.f32.mrb[0].mxu0
      %3357 = vdwg.mxu0
      %v3358 = vrcp.pop %v3134
      %v3359 = vrcp.pop %v3136
      %v3360 = vrcp.pop %v3138
      %v3361 = vrcp.pop %v3140
      %v3362 = vrcp.pop %v3142
      %v3363 = vrcp.pop %v3144
      %v3364 = vrcp.pop %v3146
      %v3365 = vrcp.pop %v3148
      %v3366 = vrcp.pop %v3150
      %v3367 = vrcp.pop %v3152
      %v3368 = vrcp.pop %v3154
      %v3369 = vrcp.pop %v3156
      %v3370 = vrcp.pop %v3158
      %v3371 = vrcp.pop %v3160
      %v3372 = vrcp.pop %v3162
      %v3373 = vrcp.pop %v3164
      %v3374 = vmul.f32 %v3280, %v3358
      %v3375 = vmul.f32 %v3285, %v3359
      %v3376 = vmul.f32 %v3290, %v3360
      %v3377 = vmul.f32 %v3295, %v3361
      %v3378 = vmul.f32 %v3300, %v3362
      %v3379 = vmul.f32 %v3305, %v3363
      %v3380 = vmul.f32 %v3310, %v3364
      %v3381 = vmul.f32 %v3315, %v3365
      %v3382 = vmul.f32 %v3320, %v3366
      %v3383 = vmul.f32 %v3325, %v3367
      %v3384 = vmul.f32 %v3330, %v3368
      %v3385 = vmul.f32 %v3335, %v3369
      %v3386 = vmul.f32 %v3340, %v3370
      %v3387 = vmul.f32 %v3345, %v3371
      %v3388 = vmul.f32 %v3350, %v3372
      %v3389 = vmul.f32 %v3355, %v3373
      %3406 = vrot.lane.b32.xlu0 %v2090, 8
      %v3407 = vpop.permute.xlu0 %3406
      %3408 = vrot.lane.b32.xlu0 %v2091, 8
      %v3409 = vpop.permute.xlu0 %3408
      %3410 = vrot.lane.b32.xlu0 %v2092, 8
      %v3411 = vpop.permute.xlu0 %3410
      %3412 = vrot.lane.b32.xlu0 %v2093, 8
      %v3413 = vpop.permute.xlu0 %3412
      %3414 = vrot.lane.b32.xlu0 %v2094, 8
      %v3415 = vpop.permute.xlu0 %3414
      %3416 = vrot.lane.b32.xlu0 %v2095, 8
      %v3417 = vpop.permute.xlu0 %3416
      %3418 = vrot.lane.b32.xlu0 %v2096, 8
      %v3419 = vpop.permute.xlu0 %3418
      %3420 = vrot.lane.b32.xlu0 %v2097, 8
      %v3421 = vpop.permute.xlu0 %3420
      %3422 = vrot.lane.b32.xlu0 %v2098, 8
      %v3423 = vpop.permute.xlu0 %3422
      %3424 = vrot.lane.b32.xlu0 %v2099, 8
      %v3425 = vpop.permute.xlu0 %3424
      %3426 = vrot.lane.b32.xlu0 %v2100, 8
      %v3427 = vpop.permute.xlu0 %3426
      %3428 = vrot.lane.b32.xlu0 %v2101, 8
      %v3429 = vpop.permute.xlu0 %3428
      %3430 = vrot.lane.b32.xlu0 %v2102, 8
      %v3431 = vpop.permute.xlu0 %3430
      %3432 = vrot.lane.b32.xlu0 %v2103, 8
      %v3433 = vpop.permute.xlu0 %3432
      %3434 = vrot.lane.b32.xlu0 %v2104, 8
      %v3435 = vpop.permute.xlu0 %3434
      %3436 = vrot.lane.b32.xlu0 %v2105, 8
      %v3437 = vpop.permute.xlu0 %3436
      %3470 = vrot.lane.b32.xlu0 %v2732, 16
      %v3471 = vpop.permute.xlu0 %3470
      %3472 = vrot.lane.b32.xlu0 %v2733, 16
      %v3473 = vpop.permute.xlu0 %3472
      %3474 = vrot.lane.b32.xlu0 %v2734, 16
      %v3475 = vpop.permute.xlu0 %3474
      %3476 = vrot.lane.b32.xlu0 %v2735, 16
      %v3477 = vpop.permute.xlu0 %3476
      %3478 = vrot.lane.b32.xlu0 %v2736, 16
      %v3479 = vpop.permute.xlu0 %3478
      %3480 = vrot.lane.b32.xlu0 %v2737, 16
      %v3481 = vpop.permute.xlu0 %3480
      %3482 = vrot.lane.b32.xlu0 %v2738, 16
      %v3483 = vpop.permute.xlu0 %3482
      %3484 = vrot.lane.b32.xlu0 %v2739, 16
      %v3485 = vpop.permute.xlu0 %3484
      %3486 = vrot.lane.b32.xlu0 %v2740, 16
      %v3487 = vpop.permute.xlu0 %3486
      %3488 = vrot.lane.b32.xlu0 %v2741, 16
      %v3489 = vpop.permute.xlu0 %3488
      %3490 = vrot.lane.b32.xlu0 %v2742, 16
      %v3491 = vpop.permute.xlu0 %3490
      %3492 = vrot.lane.b32.xlu0 %v2743, 16
      %v3493 = vpop.permute.xlu0 %3492
      %3494 = vrot.lane.b32.xlu0 %v2744, 16
      %v3495 = vpop.permute.xlu0 %3494
      %3496 = vrot.lane.b32.xlu0 %v2745, 16
      %v3497 = vpop.permute.xlu0 %3496
      %3498 = vrot.lane.b32.xlu0 %v2746, 16
      %v3499 = vpop.permute.xlu0 %3498
      %3500 = vrot.lane.b32.xlu0 %v2747, 16
      %v3501 = vpop.permute.xlu0 %3500
      %3534 = vrot.lane.b32.xlu0 %v3374, 24
      %v3535 = vpop.permute.xlu0 %3534
      %3536 = vrot.lane.b32.xlu0 %v3375, 24
      %v3537 = vpop.permute.xlu0 %3536
      %3538 = vrot.lane.b32.xlu0 %v3376, 24
      %v3539 = vpop.permute.xlu0 %3538
      %3540 = vrot.lane.b32.xlu0 %v3377, 24
      %v3541 = vpop.permute.xlu0 %3540
      %3542 = vrot.lane.b32.xlu0 %v3378, 24
      %v3543 = vpop.permute.xlu0 %3542
      %3544 = vrot.lane.b32.xlu0 %v3379, 24
      %v3545 = vpop.permute.xlu0 %3544
      %3546 = vrot.lane.b32.xlu0 %v3380, 24
      %v3547 = vpop.permute.xlu0 %3546
      %3548 = vrot.lane.b32.xlu0 %v3381, 24
      %v3549 = vpop.permute.xlu0 %3548
      %3550 = vrot.lane.b32.xlu0 %v3382, 24
      %v3551 = vpop.permute.xlu0 %3550
      %3552 = vrot.lane.b32.xlu0 %v3383, 24
      %v3553 = vpop.permute.xlu0 %3552
      %3554 = vrot.lane.b32.xlu0 %v3384, 24
      %v3555 = vpop.permute.xlu0 %3554
      %3556 = vrot.lane.b32.xlu0 %v3385, 24
      %v3557 = vpop.permute.xlu0 %3556
      %3558 = vrot.lane.b32.xlu0 %v3386, 24
      %v3559 = vpop.permute.xlu0 %3558
      %3560 = vrot.lane.b32.xlu0 %v3387, 24
      %v3561 = vpop.permute.xlu0 %3560
      %3562 = vrot.lane.b32.xlu0 %v3388, 24
      %v3563 = vpop.permute.xlu0 %3562
      %3564 = vrot.lane.b32.xlu0 %v3389, 24
      %v3565 = vpop.permute.xlu0 %3564
      %v3582 = vsel %vm885, %v1448, %v3407
      %v3583 = vsel %vm885, %v1449, %v3409
      %v3584 = vsel %vm885, %v1450, %v3411
      %v3585 = vsel %vm885, %v1451, %v3413
      %v3586 = vsel %vm885, %v1452, %v3415
      %v3587 = vsel %vm885, %v1453, %v3417
      %v3588 = vsel %vm885, %v1454, %v3419
      %v3589 = vsel %vm885, %v1455, %v3421
      %v3590 = vsel %vm885, %v1456, %v3423
      %v3591 = vsel %vm885, %v1457, %v3425
      %v3592 = vsel %vm885, %v1458, %v3427
      %v3593 = vsel %vm885, %v1459, %v3429
      %v3594 = vsel %vm885, %v1460, %v3431
      %v3595 = vsel %vm885, %v1461, %v3433
      %v3596 = vsel %vm885, %v1462, %v3435
      %v3597 = vsel %vm885, %v1463, %v3437
      %vm3598 = vcmask 130048
      %v3599 = vsel %vm3598, %v3582, %v3471
      %v3600 = vsel %vm3598, %v3583, %v3473
      %v3601 = vsel %vm3598, %v3584, %v3475
      %v3602 = vsel %vm3598, %v3585, %v3477
      %v3603 = vsel %vm3598, %v3586, %v3479
      %v3604 = vsel %vm3598, %v3587, %v3481
      %v3605 = vsel %vm3598, %v3588, %v3483
      %v3606 = vsel %vm3598, %v3589, %v3485
      %v3607 = vsel %vm3598, %v3590, %v3487
      %v3608 = vsel %vm3598, %v3591, %v3489
      %v3609 = vsel %vm3598, %v3592, %v3491
      %v3610 = vsel %vm3598, %v3593, %v3493
      %v3611 = vsel %vm3598, %v3594, %v3495
      %v3612 = vsel %vm3598, %v3595, %v3497
      %v3613 = vsel %vm3598, %v3596, %v3499
      %v3614 = vsel %vm3598, %v3597, %v3501
      %vm3615 = vcmask 195584
      %v3616 = vsel %vm3615, %v3599, %v3535
      %v3617 = vsel %vm3615, %v3600, %v3537
      %v3618 = vsel %vm3615, %v3601, %v3539
      %v3619 = vsel %vm3615, %v3602, %v3541
      %v3620 = vsel %vm3615, %v3603, %v3543
      %v3621 = vsel %vm3615, %v3604, %v3545
      %v3622 = vsel %vm3615, %v3605, %v3547
      %v3623 = vsel %vm3615, %v3606, %v3549
      %v3624 = vsel %vm3615, %v3607, %v3551
      %v3625 = vsel %vm3615, %v3608, %v3553
      %v3626 = vsel %vm3615, %v3609, %v3555
      %v3627 = vsel %vm3615, %v3610, %v3557
      %v3628 = vsel %vm3615, %v3611, %v3559
      %v3629 = vsel %vm3615, %v3612, %v3561
      %v3630 = vsel %vm3615, %v3613, %v3563
      %v3631 = vsel %vm3615, %v3614, %v3565
      %v3632 = vld [vmem:[%s2] sm:$0xff]
      %v3633 = vld [vmem:[%s2 + $0x8] sm:$0xff]
      %v3634 = vld [vmem:[%s2 + $0x10] sm:$0xff]
      %v3635 = vld [vmem:[%s2 + $0x18] sm:$0xff]
      %v3637 = vsel %vm349, %v3616, 0
      %v3640 = vsel %vm349, %v3617, 0
      %v3643 = vsel %vm349, %v3618, 0
      %v3646 = vsel %vm349, %v3619, 0
      %v3649 = vsel %vm349, %v3620, 0
      %v3652 = vsel %vm349, %v3621, 0
      %v3655 = vsel %vm349, %v3622, 0
      %v3658 = vsel %vm349, %v3623, 0
      %v3661 = vsel %vm349, %v3624, 0
      %v3664 = vsel %vm349, %v3625, 0
      %v3667 = vsel %vm349, %v3626, 0
      %v3670 = vsel %vm349, %v3627, 0
      %v3673 = vsel %vm349, %v3628, 0
      %v3676 = vsel %vm349, %v3629, 0
      %v3679 = vsel %vm349, %v3630, 0
      %v3682 = vsel %vm349, %v3631, 0
      %3684 = vmatprep.subr.mxu0 0.0
      %3685 = vmatpush1.msra.mxu0 %v3632
      %3686 = vmatprep.subr.mxu0 0.0
      %3687 = vmatpush1.msra.mxu0 %v3633
      %3688 = vmatprep.subr.mxu0 0.0
      %3689 = vmatpush1.msra.mxu0 %v3634
      %3690 = vmatprep.subr.mxu0 0.0
      %3691 = vmatpush1.msra.mxu0 %v3635
      %3692 = vmatprep.subr.mxu0 0.0
      %3693 = vmatpush1.msra.mxu0 0.0
      %3694 = vmatprep.subr.mxu0 0.0
      %3695 = vmatpush1.msra.mxu0 0.0
      %3696 = vmatprep.subr.mxu0 0.0
      %3697 = vmatpush1.msra.mxu0 0.0
      %3698 = vmatprep.subr.mxu0 0.0
      %3699 = vmatpush1.msra.mxu0 0.0
      %3700 = vmatprep.subr.mxu0 0.0
      %3701 = vmatpush1.msra.mxu0 0.0
      %3702 = vmatprep.subr.mxu0 0.0
      %3703 = vmatpush1.msra.mxu0 0.0
      %3704 = vmatprep.subr.mxu0 0.0
      %3705 = vmatpush1.msra.mxu0 0.0
      %3706 = vmatprep.subr.mxu0 0.0
      %3707 = vmatpush1.msra.mxu0 0.0
      %3708 = vmatprep.subr.mxu0 0.0
      %3709 = vmatpush1.msra.mxu0 0.0
      %3710 = vmatprep.subr.mxu0 0.0
      %3711 = vmatpush1.msra.mxu0 0.0
      %3712 = vmatprep.subr.mxu0 0.0
      %3713 = vmatpush1.msra.mxu0 0.0
      %3714 = vmatprep.subr.mxu0 0.0
      %3715 = vmatpush1.msra.mxu0 0.0
      %3716 = vmatprep.subr.mxu0 0.0
      %3717 = vmatpush1.msra.mxu0 0.0
      %3718 = vmatprep.subr.mxu0 0.0
      %3719 = vmatpush1.msra.mxu0 0.0
      %3720 = vmatprep.subr.mxu0 0.0
      %3721 = vmatpush1.msra.mxu0 0.0
      %3722 = vmatprep.subr.mxu0 0.0
      %3723 = vmatpush1.msra.mxu0 0.0
      %3724 = vmatprep.subr.mxu0 0.0
      %3725 = vmatpush1.msra.mxu0 0.0
      %3726 = vmatprep.subr.mxu0 0.0
      %3727 = vmatpush1.msra.mxu0 0.0
      %3728 = vmatprep.subr.mxu0 0.0
      %3729 = vmatpush1.msra.mxu0 0.0
      %3730 = vmatprep.subr.mxu0 0.0
      %3731 = vmatpush1.msra.mxu0 0.0
      %3732 = vmatprep.subr.mxu0 0.0
      %3733 = vmatpush1.msra.mxu0 0.0
      %3734 = vmatprep.subr.mxu0 0.0
      %3735 = vmatpush1.msra.mxu0 0.0
      %3736 = vmatprep.subr.mxu0 0.0
      %3737 = vmatpush1.msra.mxu0 0.0
      %3738 = vmatprep.subr.mxu0 0.0
      %3739 = vmatpush1.msra.mxu0 0.0
      %3740 = vmatprep.subr.mxu0 0.0
      %3741 = vmatpush1.msra.mxu0 0.0
      %3742 = vmatprep.subr.mxu0 0.0
      %3743 = vmatpush1.msra.mxu0 0.0
      %3744 = vmatprep.subr.mxu0 0.0
      %3745 = vmatpush1.msra.mxu0 0.0
      %3746 = vmatprep.subr.mxu0 0.0
      %3747 = vmatpush1.msra.mxu0 0.0
      %3748 = vmatprep.mubr.f32.mxu0 0.0
      %3749 = vmatmul.mubr.f32.gmra.mrb[0].mxu0 %v3637
      %v3750 = vpop.f32.mrb[0].mxu0
      %v3751 = vadd.f32 0.0, %v3750
      %v3752 = vpop.f32.mrb[0].mxu0
      %3753 = vmatprep.mubr.f32.mxu0 0.0
      %3754 = vmatmul.mubr.f32.gmra.mrb[0].mxu0 %v3640
      %v3755 = vpop.f32.mrb[0].mxu0
      %v3756 = vadd.f32 0.0, %v3755
      %v3757 = vpop.f32.mrb[0].mxu0
      %3758 = vmatprep.mubr.f32.mxu0 0.0
      %3759 = vmatmul.mubr.f32.gmra.mrb[0].mxu0 %v3643
      %v3760 = vpop.f32.mrb[0].mxu0
      %v3761 = vadd.f32 0.0, %v3760
      %v3762 = vpop.f32.mrb[0].mxu0
      %3763 = vmatprep.mubr.f32.mxu0 0.0
      %3764 = vmatmul.mubr.f32.gmra.mrb[0].mxu0 %v3646
      %v3765 = vpop.f32.mrb[0].mxu0
      %v3766 = vadd.f32 0.0, %v3765
      %v3767 = vpop.f32.mrb[0].mxu0
      %3768 = vmatprep.mubr.f32.mxu0 0.0
      %3769 = vmatmul.mubr.f32.gmra.mrb[0].mxu0 %v3649
      %v3770 = vpop.f32.mrb[0].mxu0
      %v3771 = vadd.f32 0.0, %v3770
      %v3772 = vpop.f32.mrb[0].mxu0
      %3773 = vmatprep.mubr.f32.mxu0 0.0
      %3774 = vmatmul.mubr.f32.gmra.mrb[0].mxu0 %v3652
      %v3775 = vpop.f32.mrb[0].mxu0
      %v3776 = vadd.f32 0.0, %v3775
      %v3777 = vpop.f32.mrb[0].mxu0
      %3778 = vmatprep.mubr.f32.mxu0 0.0
      %3779 = vmatmul.mubr.f32.gmra.mrb[0].mxu0 %v3655
      %v3780 = vpop.f32.mrb[0].mxu0
      %v3781 = vadd.f32 0.0, %v3780
      %v3782 = vpop.f32.mrb[0].mxu0
      %3783 = vmatprep.mubr.f32.mxu0 0.0
      %3784 = vmatmul.mubr.f32.gmra.mrb[0].mxu0 %v3658
      %v3785 = vpop.f32.mrb[0].mxu0
      %v3786 = vadd.f32 0.0, %v3785
      %v3787 = vpop.f32.mrb[0].mxu0
      %3788 = vmatprep.mubr.f32.mxu0 0.0
      %3789 = vmatmul.mubr.f32.gmra.mrb[0].mxu0 %v3661
      %v3790 = vpop.f32.mrb[0].mxu0
      %v3791 = vadd.f32 0.0, %v3790
      %v3792 = vpop.f32.mrb[0].mxu0
      %3793 = vmatprep.mubr.f32.mxu0 0.0
      %3794 = vmatmul.mubr.f32.gmra.mrb[0].mxu0 %v3664
      %v3795 = vpop.f32.mrb[0].mxu0
      %v3796 = vadd.f32 0.0, %v3795
      %v3797 = vpop.f32.mrb[0].mxu0
      %3798 = vmatprep.mubr.f32.mxu0 0.0
      %3799 = vmatmul.mubr.f32.gmra.mrb[0].mxu0 %v3667
      %v3800 = vpop.f32.mrb[0].mxu0
      %v3801 = vadd.f32 0.0, %v3800
      %v3802 = vpop.f32.mrb[0].mxu0
      %3803 = vmatprep.mubr.f32.mxu0 0.0
      %3804 = vmatmul.mubr.f32.gmra.mrb[0].mxu0 %v3670
      %v3805 = vpop.f32.mrb[0].mxu0
      %v3806 = vadd.f32 0.0, %v3805
      %v3807 = vpop.f32.mrb[0].mxu0
      %3808 = vmatprep.mubr.f32.mxu0 0.0
      %3809 = vmatmul.mubr.f32.gmra.mrb[0].mxu0 %v3673
      %v3810 = vpop.f32.mrb[0].mxu0
      %v3811 = vadd.f32 0.0, %v3810
      %v3812 = vpop.f32.mrb[0].mxu0
      %3813 = vmatprep.mubr.f32.mxu0 0.0
      %3814 = vmatmul.mubr.f32.gmra.mrb[0].mxu0 %v3676
      %v3815 = vpop.f32.mrb[0].mxu0
      %v3816 = vadd.f32 0.0, %v3815
      %v3817 = vpop.f32.mrb[0].mxu0
      %3818 = vmatprep.mubr.f32.mxu0 0.0
      %3819 = vmatmul.mubr.f32.gmra.mrb[0].mxu0 %v3679
      %v3820 = vpop.f32.mrb[0].mxu0
      %v3821 = vadd.f32 0.0, %v3820
      %v3822 = vpop.f32.mrb[0].mxu0
      %3823 = vmatprep.mubr.f32.mxu0 0.0
      %3824 = vmatmul.mubr.f32.gmra.mrb[0].mxu0 %v3682
      %v3825 = vpop.f32.mrb[0].mxu0
      %v3826 = vadd.f32 0.0, %v3825
      %v3827 = vpop.f32.mrb[0].mxu0
      %3828 = vdwg.mxu0
      %v3829 = vadd.f32 %v333, %v3751
      %v3830 = vadd.f32 %v334, %v3756
      %v3831 = vadd.f32 %v335, %v3761
      %v3832 = vadd.f32 %v336, %v3766
      %v3833 = vadd.f32 %v337, %v3771
      %v3834 = vadd.f32 %v338, %v3776
      %v3835 = vadd.f32 %v339, %v3781
      %v3836 = vadd.f32 %v340, %v3786
      %v3837 = vadd.f32 %v341, %v3791
      %v3838 = vadd.f32 %v342, %v3796
      %v3839 = vadd.f32 %v343, %v3801
      %v3840 = vadd.f32 %v344, %v3806
      %v3841 = vadd.f32 %v345, %v3811
      %v3842 = vadd.f32 %v346, %v3816
      %v3843 = vadd.f32 %v347, %v3821
      %v3844 = vadd.f32 %v348, %v3826
      %v3845 = vsel %vm349, %v3829, 0.0
      %3846 = vadd.xlane.f32.xlu0 %v3845
      %v3847 = vpop.xlane.xlu0 %3846
      %v3848 = vsel %vm349, %v3830, 0.0
      %3849 = vadd.xlane.f32.xlu0 %v3848
      %v3850 = vpop.xlane.xlu0 %3849
      %v3851 = vsel %vm349, %v3831, 0.0
      %3852 = vadd.xlane.f32.xlu0 %v3851
      %v3853 = vpop.xlane.xlu0 %3852
      %v3854 = vsel %vm349, %v3832, 0.0
      %3855 = vadd.xlane.f32.xlu0 %v3854
      %v3856 = vpop.xlane.xlu0 %3855
      %v3857 = vsel %vm349, %v3833, 0.0
      %3858 = vadd.xlane.f32.xlu0 %v3857
      %v3859 = vpop.xlane.xlu0 %3858
      %v3860 = vsel %vm349, %v3834, 0.0
      %3861 = vadd.xlane.f32.xlu0 %v3860
      %v3862 = vpop.xlane.xlu0 %3861
      %v3863 = vsel %vm349, %v3835, 0.0
      %3864 = vadd.xlane.f32.xlu0 %v3863
      %v3865 = vpop.xlane.xlu0 %3864
      %v3866 = vsel %vm349, %v3836, 0.0
      %3867 = vadd.xlane.f32.xlu0 %v3866
      %v3868 = vpop.xlane.xlu0 %3867
      %v3869 = vsel %vm349, %v3837, 0.0
      %3870 = vadd.xlane.f32.xlu0 %v3869
      %v3871 = vpop.xlane.xlu0 %3870
      %v3872 = vsel %vm349, %v3838, 0.0
      %3873 = vadd.xlane.f32.xlu0 %v3872
      %v3874 = vpop.xlane.xlu0 %3873
      %v3875 = vsel %vm349, %v3839, 0.0
      %3876 = vadd.xlane.f32.xlu0 %v3875
      %v3877 = vpop.xlane.xlu0 %3876
      %v3878 = vsel %vm349, %v3840, 0.0
      %3879 = vadd.xlane.f32.xlu0 %v3878
      %v3880 = vpop.xlane.xlu0 %3879
      %v3881 = vsel %vm349, %v3841, 0.0
      %3882 = vadd.xlane.f32.xlu0 %v3881
      %v3883 = vpop.xlane.xlu0 %3882
      %v3884 = vsel %vm349, %v3842, 0.0
      %3885 = vadd.xlane.f32.xlu0 %v3884
      %v3886 = vpop.xlane.xlu0 %3885
      %v3887 = vsel %vm349, %v3843, 0.0
      %3888 = vadd.xlane.f32.xlu0 %v3887
      %v3889 = vpop.xlane.xlu0 %3888
      %v3890 = vsel %vm349, %v3844, 0.0
      %3891 = vadd.xlane.f32.xlu0 %v3890
      %v3892 = vpop.xlane.xlu0 %3891
      %v3893 = vmul.f32 %v3847, %v398
      %v3894 = vmul.f32 %v3850, %v398
      %v3895 = vmul.f32 %v3853, %v398
      %v3896 = vmul.f32 %v3856, %v398
      %v3897 = vmul.f32 %v3859, %v398
      %v3898 = vmul.f32 %v3862, %v398
      %v3899 = vmul.f32 %v3865, %v398
      %v3900 = vmul.f32 %v3868, %v398
      %v3901 = vmul.f32 %v3871, %v398
      %v3902 = vmul.f32 %v3874, %v398
      %v3903 = vmul.f32 %v3877, %v398
      %v3904 = vmul.f32 %v3880, %v398
      %v3905 = vmul.f32 %v3883, %v398
      %v3906 = vmul.f32 %v3886, %v398
      %v3907 = vmul.f32 %v3889, %v398
      %v3908 = vmul.f32 %v3892, %v398
      %v3909 = vsub.f32 %v3829, %v3893
      %v3910 = vsub.f32 %v3830, %v3894
      %v3911 = vsub.f32 %v3831, %v3895
      %v3912 = vsub.f32 %v3832, %v3896
      %v3913 = vsub.f32 %v3833, %v3897
      %v3914 = vsub.f32 %v3834, %v3898
      %v3915 = vsub.f32 %v3835, %v3899
      %v3916 = vsub.f32 %v3836, %v3900
      %v3917 = vsub.f32 %v3837, %v3901
      %v3918 = vsub.f32 %v3838, %v3902
      %v3919 = vsub.f32 %v3839, %v3903
      %v3920 = vsub.f32 %v3840, %v3904
      %v3921 = vsub.f32 %v3841, %v3905
      %v3922 = vsub.f32 %v3842, %v3906
      %v3923 = vsub.f32 %v3843, %v3907
      %v3924 = vsub.f32 %v3844, %v3908
      %v3925 = vmul.f32 %v3909, %v3909
      %v3926 = vmul.f32 %v3910, %v3910
      %v3927 = vmul.f32 %v3911, %v3911
      %v3928 = vmul.f32 %v3912, %v3912
      %v3929 = vmul.f32 %v3913, %v3913
      %v3930 = vmul.f32 %v3914, %v3914
      %v3931 = vmul.f32 %v3915, %v3915
      %v3932 = vmul.f32 %v3916, %v3916
      %v3933 = vmul.f32 %v3917, %v3917
      %v3934 = vmul.f32 %v3918, %v3918
      %v3935 = vmul.f32 %v3919, %v3919
      %v3936 = vmul.f32 %v3920, %v3920
      %v3937 = vmul.f32 %v3921, %v3921
      %v3938 = vmul.f32 %v3922, %v3922
      %v3939 = vmul.f32 %v3923, %v3923
      %v3940 = vmul.f32 %v3924, %v3924
      %v3941 = vsel %vm349, %v3925, 0.0
      %3942 = vadd.xlane.f32.xlu0 %v3941
      %v3943 = vpop.xlane.xlu0 %3942
      %v3944 = vsel %vm349, %v3926, 0.0
      %3945 = vadd.xlane.f32.xlu0 %v3944
      %v3946 = vpop.xlane.xlu0 %3945
      %v3947 = vsel %vm349, %v3927, 0.0
      %3948 = vadd.xlane.f32.xlu0 %v3947
      %v3949 = vpop.xlane.xlu0 %3948
      %v3950 = vsel %vm349, %v3928, 0.0
      %3951 = vadd.xlane.f32.xlu0 %v3950
      %v3952 = vpop.xlane.xlu0 %3951
      %v3953 = vsel %vm349, %v3929, 0.0
      %3954 = vadd.xlane.f32.xlu0 %v3953
      %v3955 = vpop.xlane.xlu0 %3954
      %v3956 = vsel %vm349, %v3930, 0.0
      %3957 = vadd.xlane.f32.xlu0 %v3956
      %v3958 = vpop.xlane.xlu0 %3957
      %v3959 = vsel %vm349, %v3931, 0.0
      %3960 = vadd.xlane.f32.xlu0 %v3959
      %v3961 = vpop.xlane.xlu0 %3960
      %v3962 = vsel %vm349, %v3932, 0.0
      %3963 = vadd.xlane.f32.xlu0 %v3962
      %v3964 = vpop.xlane.xlu0 %3963
      %v3965 = vsel %vm349, %v3933, 0.0
      %3966 = vadd.xlane.f32.xlu0 %v3965
      %v3967 = vpop.xlane.xlu0 %3966
      %v3968 = vsel %vm349, %v3934, 0.0
      %3969 = vadd.xlane.f32.xlu0 %v3968
      %v3970 = vpop.xlane.xlu0 %3969
      %v3971 = vsel %vm349, %v3935, 0.0
      %3972 = vadd.xlane.f32.xlu0 %v3971
      %v3973 = vpop.xlane.xlu0 %3972
      %v3974 = vsel %vm349, %v3936, 0.0
      %3975 = vadd.xlane.f32.xlu0 %v3974
      %v3976 = vpop.xlane.xlu0 %3975
      %v3977 = vsel %vm349, %v3937, 0.0
      %3978 = vadd.xlane.f32.xlu0 %v3977
      %v3979 = vpop.xlane.xlu0 %3978
      %v3980 = vsel %vm349, %v3938, 0.0
      %3981 = vadd.xlane.f32.xlu0 %v3980
      %v3982 = vpop.xlane.xlu0 %3981
      %v3983 = vsel %vm349, %v3939, 0.0
      %3984 = vadd.xlane.f32.xlu0 %v3983
      %v3985 = vpop.xlane.xlu0 %3984
      %v3986 = vsel %vm349, %v3940, 0.0
      %3987 = vadd.xlane.f32.xlu0 %v3986
      %v3988 = vpop.xlane.xlu0 %3987
      %v3989 = vmul.f32 %v3943, %v398
      %v3990 = vmul.f32 %v3946, %v398
      %v3991 = vmul.f32 %v3949, %v398
      %v3992 = vmul.f32 %v3952, %v398
      %v3993 = vmul.f32 %v3955, %v398
      %v3994 = vmul.f32 %v3958, %v398
      %v3995 = vmul.f32 %v3961, %v398
      %v3996 = vmul.f32 %v3964, %v398
      %v3997 = vmul.f32 %v3967, %v398
      %v3998 = vmul.f32 %v3970, %v398
      %v3999 = vmul.f32 %v3973, %v398
      %v4000 = vmul.f32 %v3976, %v398
      %v4001 = vmul.f32 %v3979, %v398
      %v4002 = vmul.f32 %v3982, %v398
      %v4003 = vmul.f32 %v3985, %v398
      %v4004 = vmul.f32 %v3988, %v398
      %v4005 = vadd.f32 %v3989, 1e-05
      %v4006 = vadd.f32 %v3990, 1e-05
      %v4007 = vadd.f32 %v3991, 1e-05
      %v4008 = vadd.f32 %v3992, 1e-05
      %v4009 = vadd.f32 %v3993, 1e-05
      %v4010 = vadd.f32 %v3994, 1e-05
      %v4011 = vadd.f32 %v3995, 1e-05
      %v4012 = vadd.f32 %v3996, 1e-05
      %v4013 = vadd.f32 %v3997, 1e-05
      %v4014 = vadd.f32 %v3998, 1e-05
      %v4015 = vadd.f32 %v3999, 1e-05
      %v4016 = vadd.f32 %v4000, 1e-05
      %v4017 = vadd.f32 %v4001, 1e-05
      %v4018 = vadd.f32 %v4002, 1e-05
      %v4019 = vadd.f32 %v4003, 1e-05
      %v4020 = vadd.f32 %v4004, 1e-05
      %v4021 = vrsqrt.pop %v4005
      %v4022 = vrsqrt.pop %v4006
      %v4023 = vrsqrt.pop %v4007
      %v4024 = vrsqrt.pop %v4008
      %v4025 = vrsqrt.pop %v4009
      %v4026 = vrsqrt.pop %v4010
      %v4027 = vrsqrt.pop %v4011
      %v4028 = vrsqrt.pop %v4012
      %v4029 = vrsqrt.pop %v4013
      %v4030 = vrsqrt.pop %v4014
      %v4031 = vrsqrt.pop %v4015
      %v4032 = vrsqrt.pop %v4016
      %v4033 = vrsqrt.pop %v4017
      %v4034 = vrsqrt.pop %v4018
      %v4035 = vrsqrt.pop %v4019
      %v4036 = vrsqrt.pop %v4020
      %v4037 = vmul.f32 %v3909, %v4021
      %v4038 = vmul.f32 %v3910, %v4022
      %v4039 = vmul.f32 %v3911, %v4023
      %v4040 = vmul.f32 %v3912, %v4024
      %v4041 = vmul.f32 %v3913, %v4025
      %v4042 = vmul.f32 %v3914, %v4026
      %v4043 = vmul.f32 %v3915, %v4027
      %v4044 = vmul.f32 %v3916, %v4028
      %v4045 = vmul.f32 %v3917, %v4029
      %v4046 = vmul.f32 %v3918, %v4030
      %v4047 = vmul.f32 %v3919, %v4031
      %v4048 = vmul.f32 %v3920, %v4032
      %v4049 = vmul.f32 %v3921, %v4033
      %v4050 = vmul.f32 %v3922, %v4034
      %v4051 = vmul.f32 %v3923, %v4035
      %v4052 = vmul.f32 %v3924, %v4036
      %v4053 = vld [vmem:[%s7] sm:$0x1]
      %v4055 = vlaneseq
      %v4056 = vshrl.u32 %v4055, 7
      %v4057 = vsub.s32 0, %v4056
      %v4058 = vrot.slane %v4053, %v4057
      %v4060 = vmul.f32 %v4037, %v4058
      %v4061 = vmul.f32 %v4038, %v4058
      %v4062 = vmul.f32 %v4039, %v4058
      %v4063 = vmul.f32 %v4040, %v4058
      %v4064 = vmul.f32 %v4041, %v4058
      %v4065 = vmul.f32 %v4042, %v4058
      %v4066 = vmul.f32 %v4043, %v4058
      %v4067 = vmul.f32 %v4044, %v4058
      %v4068 = vmul.f32 %v4045, %v4058
      %v4069 = vmul.f32 %v4046, %v4058
      %v4070 = vmul.f32 %v4047, %v4058
      %v4071 = vmul.f32 %v4048, %v4058
      %v4072 = vmul.f32 %v4049, %v4058
      %v4073 = vmul.f32 %v4050, %v4058
      %v4074 = vmul.f32 %v4051, %v4058
      %v4075 = vmul.f32 %v4052, %v4058
      %v4076 = vld [vmem:[%s8] sm:$0x1]
      %v4078 = vlaneseq
      %v4079 = vshrl.u32 %v4078, 7
      %v4080 = vsub.s32 0, %v4079
      %v4081 = vrot.slane %v4076, %v4080
      %v4083 = vadd.f32 %v4060, %v4081
      %v4084 = vadd.f32 %v4061, %v4081
      %v4085 = vadd.f32 %v4062, %v4081
      %v4086 = vadd.f32 %v4063, %v4081
      %v4087 = vadd.f32 %v4064, %v4081
      %v4088 = vadd.f32 %v4065, %v4081
      %v4089 = vadd.f32 %v4066, %v4081
      %v4090 = vadd.f32 %v4067, %v4081
      %v4091 = vadd.f32 %v4068, %v4081
      %v4092 = vadd.f32 %v4069, %v4081
      %v4093 = vadd.f32 %v4070, %v4081
      %v4094 = vadd.f32 %v4071, %v4081
      %v4095 = vadd.f32 %v4072, %v4081
      %v4096 = vadd.f32 %v4073, %v4081
      %v4097 = vadd.f32 %v4074, %v4081
      %v4098 = vadd.f32 %v4075, %v4081
      %v4099 = vld [vmem:[%s3] sm:$0xff]
      %v4100 = vld [vmem:[%s3 + $0x8] sm:$0xff]
      %v4101 = vld [vmem:[%s3 + $0x10] sm:$0xff]
      %v4102 = vld [vmem:[%s3 + $0x18] sm:$0xff]
      %v4104 = vsel %vm349, %v4083, 0
      %v4107 = vsel %vm349, %v4084, 0
      %v4110 = vsel %vm349, %v4085, 0
      %v4113 = vsel %vm349, %v4086, 0
      %v4116 = vsel %vm349, %v4087, 0
      %v4119 = vsel %vm349, %v4088, 0
      %v4122 = vsel %vm349, %v4089, 0
      %v4125 = vsel %vm349, %v4090, 0
      %v4128 = vsel %vm349, %v4091, 0
      %v4131 = vsel %vm349, %v4092, 0
      %v4134 = vsel %vm349, %v4093, 0
      %v4137 = vsel %vm349, %v4094, 0
      %v4140 = vsel %vm349, %v4095, 0
      %v4143 = vsel %vm349, %v4096, 0
      %v4146 = vsel %vm349, %v4097, 0
      %v4149 = vsel %vm349, %v4098, 0
      %4151 = vmatprep.subr.mxu0 0.0
      %4152 = vmatpush1.msra.mxu0 %v4099
      %4153 = vmatprep.subr.mxu0 0.0
      %4154 = vmatpush1.msra.mxu0 %v4100
      %4155 = vmatprep.subr.mxu0 0.0
      %4156 = vmatpush1.msra.mxu0 %v4101
      %4157 = vmatprep.subr.mxu0 0.0
      %4158 = vmatpush1.msra.mxu0 %v4102
      %4159 = vmatprep.subr.mxu0 0.0
      %4160 = vmatpush1.msra.mxu0 0.0
      %4161 = vmatprep.subr.mxu0 0.0
      %4162 = vmatpush1.msra.mxu0 0.0
      %4163 = vmatprep.subr.mxu0 0.0
      %4164 = vmatpush1.msra.mxu0 0.0
      %4165 = vmatprep.subr.mxu0 0.0
      %4166 = vmatpush1.msra.mxu0 0.0
      %4167 = vmatprep.subr.mxu0 0.0
      %4168 = vmatpush1.msra.mxu0 0.0
      %4169 = vmatprep.subr.mxu0 0.0
      %4170 = vmatpush1.msra.mxu0 0.0
      %4171 = vmatprep.subr.mxu0 0.0
      %4172 = vmatpush1.msra.mxu0 0.0
      %4173 = vmatprep.subr.mxu0 0.0
      %4174 = vmatpush1.msra.mxu0 0.0
      %4175 = vmatprep.subr.mxu0 0.0
      %4176 = vmatpush1.msra.mxu0 0.0
      %4177 = vmatprep.subr.mxu0 0.0
      %4178 = vmatpush1.msra.mxu0 0.0
      %4179 = vmatprep.subr.mxu0 0.0
      %4180 = vmatpush1.msra.mxu0 0.0
      %4181 = vmatprep.subr.mxu0 0.0
      %4182 = vmatpush1.msra.mxu0 0.0
      %4183 = vmatprep.subr.mxu0 0.0
      %4184 = vmatpush1.msra.mxu0 0.0
      %4185 = vmatprep.subr.mxu0 0.0
      %4186 = vmatpush1.msra.mxu0 0.0
      %4187 = vmatprep.subr.mxu0 0.0
      %4188 = vmatpush1.msra.mxu0 0.0
      %4189 = vmatprep.subr.mxu0 0.0
      %4190 = vmatpush1.msra.mxu0 0.0
      %4191 = vmatprep.subr.mxu0 0.0
      %4192 = vmatpush1.msra.mxu0 0.0
      %4193 = vmatprep.subr.mxu0 0.0
      %4194 = vmatpush1.msra.mxu0 0.0
      %4195 = vmatprep.subr.mxu0 0.0
      %4196 = vmatpush1.msra.mxu0 0.0
      %4197 = vmatprep.subr.mxu0 0.0
      %4198 = vmatpush1.msra.mxu0 0.0
      %4199 = vmatprep.subr.mxu0 0.0
      %4200 = vmatpush1.msra.mxu0 0.0
      %4201 = vmatprep.subr.mxu0 0.0
      %4202 = vmatpush1.msra.mxu0 0.0
      %4203 = vmatprep.subr.mxu0 0.0
      %4204 = vmatpush1.msra.mxu0 0.0
      %4205 = vmatprep.subr.mxu0 0.0
      %4206 = vmatpush1.msra.mxu0 0.0
      %4207 = vmatprep.subr.mxu0 0.0
      %4208 = vmatpush1.msra.mxu0 0.0
      %4209 = vmatprep.subr.mxu0 0.0
      %4210 = vmatpush1.msra.mxu0 0.0
      %4211 = vmatprep.subr.mxu0 0.0
      %4212 = vmatpush1.msra.mxu0 0.0
      %4213 = vmatprep.subr.mxu0 0.0
      %4214 = vmatpush1.msra.mxu0 0.0
      %4215 = vmatprep.mubr.f32.mxu0 0.0
      %4216 = vmatmul.mubr.f32.gmra.mrb[0].mxu0 %v4104
      %v4217 = vpop.f32.mrb[0].mxu0
      %v4218 = vadd.f32 0.0, %v4217
      %v4219 = vpop.f32.mrb[0].mxu0
      %4220 = vmatprep.mubr.f32.mxu0 0.0
      %4221 = vmatmul.mubr.f32.gmra.mrb[0].mxu0 %v4107
      %v4222 = vpop.f32.mrb[0].mxu0
      %v4223 = vadd.f32 0.0, %v4222
      %v4224 = vpop.f32.mrb[0].mxu0
      %4225 = vmatprep.mubr.f32.mxu0 0.0
      %4226 = vmatmul.mubr.f32.gmra.mrb[0].mxu0 %v4110
      %v4227 = vpop.f32.mrb[0].mxu0
      %v4228 = vadd.f32 0.0, %v4227
      %v4229 = vpop.f32.mrb[0].mxu0
      %4230 = vmatprep.mubr.f32.mxu0 0.0
      %4231 = vmatmul.mubr.f32.gmra.mrb[0].mxu0 %v4113
      %v4232 = vpop.f32.mrb[0].mxu0
      %v4233 = vadd.f32 0.0, %v4232
      %v4234 = vpop.f32.mrb[0].mxu0
      %4235 = vmatprep.mubr.f32.mxu0 0.0
      %4236 = vmatmul.mubr.f32.gmra.mrb[0].mxu0 %v4116
      %v4237 = vpop.f32.mrb[0].mxu0
      %v4238 = vadd.f32 0.0, %v4237
      %v4239 = vpop.f32.mrb[0].mxu0
      %4240 = vmatprep.mubr.f32.mxu0 0.0
      %4241 = vmatmul.mubr.f32.gmra.mrb[0].mxu0 %v4119
      %v4242 = vpop.f32.mrb[0].mxu0
      %v4243 = vadd.f32 0.0, %v4242
      %v4244 = vpop.f32.mrb[0].mxu0
      %4245 = vmatprep.mubr.f32.mxu0 0.0
      %4246 = vmatmul.mubr.f32.gmra.mrb[0].mxu0 %v4122
      %v4247 = vpop.f32.mrb[0].mxu0
      %v4248 = vadd.f32 0.0, %v4247
      %v4249 = vpop.f32.mrb[0].mxu0
      %4250 = vmatprep.mubr.f32.mxu0 0.0
      %4251 = vmatmul.mubr.f32.gmra.mrb[0].mxu0 %v4125
      %v4252 = vpop.f32.mrb[0].mxu0
      %v4253 = vadd.f32 0.0, %v4252
      %v4254 = vpop.f32.mrb[0].mxu0
      %4255 = vmatprep.mubr.f32.mxu0 0.0
      %4256 = vmatmul.mubr.f32.gmra.mrb[0].mxu0 %v4128
      %v4257 = vpop.f32.mrb[0].mxu0
      %v4258 = vadd.f32 0.0, %v4257
      %v4259 = vpop.f32.mrb[0].mxu0
      %4260 = vmatprep.mubr.f32.mxu0 0.0
      %4261 = vmatmul.mubr.f32.gmra.mrb[0].mxu0 %v4131
      %v4262 = vpop.f32.mrb[0].mxu0
      %v4263 = vadd.f32 0.0, %v4262
      %v4264 = vpop.f32.mrb[0].mxu0
      %4265 = vmatprep.mubr.f32.mxu0 0.0
      %4266 = vmatmul.mubr.f32.gmra.mrb[0].mxu0 %v4134
      %v4267 = vpop.f32.mrb[0].mxu0
      %v4268 = vadd.f32 0.0, %v4267
      %v4269 = vpop.f32.mrb[0].mxu0
      %4270 = vmatprep.mubr.f32.mxu0 0.0
      %4271 = vmatmul.mubr.f32.gmra.mrb[0].mxu0 %v4137
      %v4272 = vpop.f32.mrb[0].mxu0
      %v4273 = vadd.f32 0.0, %v4272
      %v4274 = vpop.f32.mrb[0].mxu0
      %4275 = vmatprep.mubr.f32.mxu0 0.0
      %4276 = vmatmul.mubr.f32.gmra.mrb[0].mxu0 %v4140
      %v4277 = vpop.f32.mrb[0].mxu0
      %v4278 = vadd.f32 0.0, %v4277
      %v4279 = vpop.f32.mrb[0].mxu0
      %4280 = vmatprep.mubr.f32.mxu0 0.0
      %4281 = vmatmul.mubr.f32.gmra.mrb[0].mxu0 %v4143
      %v4282 = vpop.f32.mrb[0].mxu0
      %v4283 = vadd.f32 0.0, %v4282
      %v4284 = vpop.f32.mrb[0].mxu0
      %4285 = vmatprep.mubr.f32.mxu0 0.0
      %4286 = vmatmul.mubr.f32.gmra.mrb[0].mxu0 %v4146
      %v4287 = vpop.f32.mrb[0].mxu0
      %v4288 = vadd.f32 0.0, %v4287
      %v4289 = vpop.f32.mrb[0].mxu0
      %4290 = vmatprep.mubr.f32.mxu0 0.0
      %4291 = vmatmul.mubr.f32.gmra.mrb[0].mxu0 %v4149
      %v4292 = vpop.f32.mrb[0].mxu0
      %v4293 = vadd.f32 0.0, %v4292
      %v4294 = vpop.f32.mrb[0].mxu0
      %4295 = vdwg.mxu0
      %v4296 = vmul.f32 %v4218, %v4218
      %v4297 = vmul.f32 %v4223, %v4223
      %v4298 = vmul.f32 %v4228, %v4228
      %v4299 = vmul.f32 %v4233, %v4233
      %v4300 = vmul.f32 %v4238, %v4238
      %v4301 = vmul.f32 %v4243, %v4243
      %v4302 = vmul.f32 %v4248, %v4248
      %v4303 = vmul.f32 %v4253, %v4253
      %v4304 = vmul.f32 %v4258, %v4258
      %v4305 = vmul.f32 %v4263, %v4263
      %v4306 = vmul.f32 %v4268, %v4268
      %v4307 = vmul.f32 %v4273, %v4273
      %v4308 = vmul.f32 %v4278, %v4278
      %v4309 = vmul.f32 %v4283, %v4283
      %v4310 = vmul.f32 %v4288, %v4288
      %v4311 = vmul.f32 %v4293, %v4293
      %v4312 = vmul.f32 %v4218, %v4296
      %v4313 = vmul.f32 %v4223, %v4297
      %v4314 = vmul.f32 %v4228, %v4298
      %v4315 = vmul.f32 %v4233, %v4299
      %v4316 = vmul.f32 %v4238, %v4300
      %v4317 = vmul.f32 %v4243, %v4301
      %v4318 = vmul.f32 %v4248, %v4302
      %v4319 = vmul.f32 %v4253, %v4303
      %v4320 = vmul.f32 %v4258, %v4304
      %v4321 = vmul.f32 %v4263, %v4305
      %v4322 = vmul.f32 %v4268, %v4306
      %v4323 = vmul.f32 %v4273, %v4307
      %v4324 = vmul.f32 %v4278, %v4308
      %v4325 = vmul.f32 %v4283, %v4309
      %v4326 = vmul.f32 %v4288, %v4310
      %v4327 = vmul.f32 %v4293, %v4311
      %v4328 = vmul.f32 %v4312, 0.044715
      %v4329 = vmul.f32 %v4313, 0.044715
      %v4330 = vmul.f32 %v4314, 0.044715
      %v4331 = vmul.f32 %v4315, 0.044715
      %v4332 = vmul.f32 %v4316, 0.044715
      %v4333 = vmul.f32 %v4317, 0.044715
      %v4334 = vmul.f32 %v4318, 0.044715
      %v4335 = vmul.f32 %v4319, 0.044715
      %v4336 = vmul.f32 %v4320, 0.044715
      %v4337 = vmul.f32 %v4321, 0.044715
      %v4338 = vmul.f32 %v4322, 0.044715
      %v4339 = vmul.f32 %v4323, 0.044715
      %v4340 = vmul.f32 %v4324, 0.044715
      %v4341 = vmul.f32 %v4325, 0.044715
      %v4342 = vmul.f32 %v4326, 0.044715
      %v4343 = vmul.f32 %v4327, 0.044715
      %v4344 = vadd.f32 %v4218, %v4328
      %v4345 = vadd.f32 %v4223, %v4329
      %v4346 = vadd.f32 %v4228, %v4330
      %v4347 = vadd.f32 %v4233, %v4331
      %v4348 = vadd.f32 %v4238, %v4332
      %v4349 = vadd.f32 %v4243, %v4333
      %v4350 = vadd.f32 %v4248, %v4334
      %v4351 = vadd.f32 %v4253, %v4335
      %v4352 = vadd.f32 %v4258, %v4336
      %v4353 = vadd.f32 %v4263, %v4337
      %v4354 = vadd.f32 %v4268, %v4338
      %v4355 = vadd.f32 %v4273, %v4339
      %v4356 = vadd.f32 %v4278, %v4340
      %v4357 = vadd.f32 %v4283, %v4341
      %v4358 = vadd.f32 %v4288, %v4342
      %v4359 = vadd.f32 %v4293, %v4343
      %v4360 = vmul.f32 %v4344, 0.7978846
      %v4361 = vmul.f32 %v4345, 0.7978846
      %v4362 = vmul.f32 %v4346, 0.7978846
      %v4363 = vmul.f32 %v4347, 0.7978846
      %v4364 = vmul.f32 %v4348, 0.7978846
      %v4365 = vmul.f32 %v4349, 0.7978846
      %v4366 = vmul.f32 %v4350, 0.7978846
      %v4367 = vmul.f32 %v4351, 0.7978846
      %v4368 = vmul.f32 %v4352, 0.7978846
      %v4369 = vmul.f32 %v4353, 0.7978846
      %v4370 = vmul.f32 %v4354, 0.7978846
      %v4371 = vmul.f32 %v4355, 0.7978846
      %v4372 = vmul.f32 %v4356, 0.7978846
      %v4373 = vmul.f32 %v4357, 0.7978846
      %v4374 = vmul.f32 %v4358, 0.7978846
      %v4375 = vmul.f32 %v4359, 0.7978846
      %v4376 = vtanh.pop %v4360
      %v4377 = vtanh.pop %v4361
      %v4378 = vtanh.pop %v4362
      %v4379 = vtanh.pop %v4363
      %v4380 = vtanh.pop %v4364
      %v4381 = vtanh.pop %v4365
      %v4382 = vtanh.pop %v4366
      %v4383 = vtanh.pop %v4367
      %v4384 = vtanh.pop %v4368
      %v4385 = vtanh.pop %v4369
      %v4386 = vtanh.pop %v4370
      %v4387 = vtanh.pop %v4371
      %v4388 = vtanh.pop %v4372
      %v4389 = vtanh.pop %v4373
      %v4390 = vtanh.pop %v4374
      %v4391 = vtanh.pop %v4375
      %v4392 = vadd.f32 %v4376, 1.0
      %v4393 = vadd.f32 %v4377, 1.0
      %v4394 = vadd.f32 %v4378, 1.0
      %v4395 = vadd.f32 %v4379, 1.0
      %v4396 = vadd.f32 %v4380, 1.0
      %v4397 = vadd.f32 %v4381, 1.0
      %v4398 = vadd.f32 %v4382, 1.0
      %v4399 = vadd.f32 %v4383, 1.0
      %v4400 = vadd.f32 %v4384, 1.0
      %v4401 = vadd.f32 %v4385, 1.0
      %v4402 = vadd.f32 %v4386, 1.0
      %v4403 = vadd.f32 %v4387, 1.0
      %v4404 = vadd.f32 %v4388, 1.0
      %v4405 = vadd.f32 %v4389, 1.0
      %v4406 = vadd.f32 %v4390, 1.0
      %v4407 = vadd.f32 %v4391, 1.0
      %v4408 = vmul.f32 %v4392, 0.5
      %v4409 = vmul.f32 %v4393, 0.5
      %v4410 = vmul.f32 %v4394, 0.5
      %v4411 = vmul.f32 %v4395, 0.5
      %v4412 = vmul.f32 %v4396, 0.5
      %v4413 = vmul.f32 %v4397, 0.5
      %v4414 = vmul.f32 %v4398, 0.5
      %v4415 = vmul.f32 %v4399, 0.5
      %v4416 = vmul.f32 %v4400, 0.5
      %v4417 = vmul.f32 %v4401, 0.5
      %v4418 = vmul.f32 %v4402, 0.5
      %v4419 = vmul.f32 %v4403, 0.5
      %v4420 = vmul.f32 %v4404, 0.5
      %v4421 = vmul.f32 %v4405, 0.5
      %v4422 = vmul.f32 %v4406, 0.5
      %v4423 = vmul.f32 %v4407, 0.5
      %v4424 = vmul.f32 %v4218, %v4408
      %v4425 = vmul.f32 %v4223, %v4409
      %v4426 = vmul.f32 %v4228, %v4410
      %v4427 = vmul.f32 %v4233, %v4411
      %v4428 = vmul.f32 %v4238, %v4412
      %v4429 = vmul.f32 %v4243, %v4413
      %v4430 = vmul.f32 %v4248, %v4414
      %v4431 = vmul.f32 %v4253, %v4415
      %v4432 = vmul.f32 %v4258, %v4416
      %v4433 = vmul.f32 %v4263, %v4417
      %v4434 = vmul.f32 %v4268, %v4418
      %v4435 = vmul.f32 %v4273, %v4419
      %v4436 = vmul.f32 %v4278, %v4420
      %v4437 = vmul.f32 %v4283, %v4421
      %v4438 = vmul.f32 %v4288, %v4422
      %v4439 = vmul.f32 %v4293, %v4423
      %v4440 = vld [vmem:[%s4] sm:$0xff]
      %v4441 = vld [vmem:[%s4 + $0x8] sm:$0xff]
      %v4442 = vld [vmem:[%s4 + $0x10] sm:$0xff]
      %v4443 = vld [vmem:[%s4 + $0x18] sm:$0xff]
      %v4444 = vld [vmem:[%s4 + $0x20] sm:$0xff]
      %v4445 = vld [vmem:[%s4 + $0x28] sm:$0xff]
      %v4446 = vld [vmem:[%s4 + $0x30] sm:$0xff]
      %v4447 = vld [vmem:[%s4 + $0x38] sm:$0xff]
      %v4448 = vld [vmem:[%s4 + $0x40] sm:$0xff]
      %v4449 = vld [vmem:[%s4 + $0x48] sm:$0xff]
      %v4450 = vld [vmem:[%s4 + $0x50] sm:$0xff]
      %v4451 = vld [vmem:[%s4 + $0x58] sm:$0xff]
      %v4452 = vld [vmem:[%s4 + $0x60] sm:$0xff]
      %v4453 = vld [vmem:[%s4 + $0x68] sm:$0xff]
      %v4454 = vld [vmem:[%s4 + $0x70] sm:$0xff]
      %v4455 = vld [vmem:[%s4 + $0x78] sm:$0xff]
      %4456 = vmatprep.subr.mxu0 0.0
      %4457 = vmatpush1.msra.mxu0 %v4440
      %4458 = vmatprep.subr.mxu0 0.0
      %4459 = vmatpush1.msra.mxu0 %v4441
      %4460 = vmatprep.subr.mxu0 0.0
      %4461 = vmatpush1.msra.mxu0 %v4442
      %4462 = vmatprep.subr.mxu0 0.0
      %4463 = vmatpush1.msra.mxu0 %v4443
      %4464 = vmatprep.subr.mxu0 0.0
      %4465 = vmatpush1.msra.mxu0 %v4444
      %4466 = vmatprep.subr.mxu0 0.0
      %4467 = vmatpush1.msra.mxu0 %v4445
      %4468 = vmatprep.subr.mxu0 0.0
      %4469 = vmatpush1.msra.mxu0 %v4446
      %4470 = vmatprep.subr.mxu0 0.0
      %4471 = vmatpush1.msra.mxu0 %v4447
      %4472 = vmatprep.subr.mxu0 0.0
      %4473 = vmatpush1.msra.mxu0 %v4448
      %4474 = vmatprep.subr.mxu0 0.0
      %4475 = vmatpush1.msra.mxu0 %v4449
      %4476 = vmatprep.subr.mxu0 0.0
      %4477 = vmatpush1.msra.mxu0 %v4450
      %4478 = vmatprep.subr.mxu0 0.0
      %4479 = vmatpush1.msra.mxu0 %v4451
      %4480 = vmatprep.subr.mxu0 0.0
      %4481 = vmatpush1.msra.mxu0 %v4452
      %4482 = vmatprep.subr.mxu0 0.0
      %4483 = vmatpush1.msra.mxu0 %v4453
      %4484 = vmatprep.subr.mxu0 0.0
      %4485 = vmatpush1.msra.mxu0 %v4454
      %4486 = vmatprep.subr.mxu0 0.0
      %4487 = vmatpush1.msra.mxu0 %v4455
      %4488 = vmatprep.subr.mxu0 0.0
      %4489 = vmatpush1.msra.mxu0 0.0
      %4490 = vmatprep.subr.mxu0 0.0
      %4491 = vmatpush1.msra.mxu0 0.0
      %4492 = vmatprep.subr.mxu0 0.0
      %4493 = vmatpush1.msra.mxu0 0.0
      %4494 = vmatprep.subr.mxu0 0.0
      %4495 = vmatpush1.msra.mxu0 0.0
      %4496 = vmatprep.subr.mxu0 0.0
      %4497 = vmatpush1.msra.mxu0 0.0
      %4498 = vmatprep.subr.mxu0 0.0
      %4499 = vmatpush1.msra.mxu0 0.0
      %4500 = vmatprep.subr.mxu0 0.0
      %4501 = vmatpush1.msra.mxu0 0.0
      %4502 = vmatprep.subr.mxu0 0.0
      %4503 = vmatpush1.msra.mxu0 0.0
      %4504 = vmatprep.subr.mxu0 0.0
      %4505 = vmatpush1.msra.mxu0 0.0
      %4506 = vmatprep.subr.mxu0 0.0
      %4507 = vmatpush1.msra.mxu0 0.0
      %4508 = vmatprep.subr.mxu0 0.0
      %4509 = vmatpush1.msra.mxu0 0.0
      %4510 = vmatprep.subr.mxu0 0.0
      %4511 = vmatpush1.msra.mxu0 0.0
      %4512 = vmatprep.subr.mxu0 0.0
      %4513 = vmatpush1.msra.mxu0 0.0
      %4514 = vmatprep.subr.mxu0 0.0
      %4515 = vmatpush1.msra.mxu0 0.0
      %4516 = vmatprep.subr.mxu0 0.0
      %4517 = vmatpush1.msra.mxu0 0.0
      %4518 = vmatprep.subr.mxu0 0.0
      %4519 = vmatpush1.msra.mxu0 0.0
      %4520 = vmatprep.mubr.f32.mxu0 0.0
      %4521 = vmatmul.mubr.f32.gmra.mrb[0].mxu0 %v4424
      %v4522 = vpop.f32.mrb[0].mxu0
      %v4523 = vadd.f32 0.0, %v4522
      %v4524 = vpop.f32.mrb[0].mxu0
      %4525 = vmatprep.mubr.f32.mxu0 0.0
      %4526 = vmatmul.mubr.f32.gmra.mrb[0].mxu0 %v4425
      %v4527 = vpop.f32.mrb[0].mxu0
      %v4528 = vadd.f32 0.0, %v4527
      %v4529 = vpop.f32.mrb[0].mxu0
      %4530 = vmatprep.mubr.f32.mxu0 0.0
      %4531 = vmatmul.mubr.f32.gmra.mrb[0].mxu0 %v4426
      %v4532 = vpop.f32.mrb[0].mxu0
      %v4533 = vadd.f32 0.0, %v4532
      %v4534 = vpop.f32.mrb[0].mxu0
      %4535 = vmatprep.mubr.f32.mxu0 0.0
      %4536 = vmatmul.mubr.f32.gmra.mrb[0].mxu0 %v4427
      %v4537 = vpop.f32.mrb[0].mxu0
      %v4538 = vadd.f32 0.0, %v4537
      %v4539 = vpop.f32.mrb[0].mxu0
      %4540 = vmatprep.mubr.f32.mxu0 0.0
      %4541 = vmatmul.mubr.f32.gmra.mrb[0].mxu0 %v4428
      %v4542 = vpop.f32.mrb[0].mxu0
      %v4543 = vadd.f32 0.0, %v4542
      %v4544 = vpop.f32.mrb[0].mxu0
      %4545 = vmatprep.mubr.f32.mxu0 0.0
      %4546 = vmatmul.mubr.f32.gmra.mrb[0].mxu0 %v4429
      %v4547 = vpop.f32.mrb[0].mxu0
      %v4548 = vadd.f32 0.0, %v4547
      %v4549 = vpop.f32.mrb[0].mxu0
      %4550 = vmatprep.mubr.f32.mxu0 0.0
      %4551 = vmatmul.mubr.f32.gmra.mrb[0].mxu0 %v4430
      %v4552 = vpop.f32.mrb[0].mxu0
      %v4553 = vadd.f32 0.0, %v4552
      %v4554 = vpop.f32.mrb[0].mxu0
      %4555 = vmatprep.mubr.f32.mxu0 0.0
      %4556 = vmatmul.mubr.f32.gmra.mrb[0].mxu0 %v4431
      %v4557 = vpop.f32.mrb[0].mxu0
      %v4558 = vadd.f32 0.0, %v4557
      %v4559 = vpop.f32.mrb[0].mxu0
      %4560 = vmatprep.mubr.f32.mxu0 0.0
      %4561 = vmatmul.mubr.f32.gmra.mrb[0].mxu0 %v4432
      %v4562 = vpop.f32.mrb[0].mxu0
      %v4563 = vadd.f32 0.0, %v4562
      %v4564 = vpop.f32.mrb[0].mxu0
      %4565 = vmatprep.mubr.f32.mxu0 0.0
      %4566 = vmatmul.mubr.f32.gmra.mrb[0].mxu0 %v4433
      %v4567 = vpop.f32.mrb[0].mxu0
      %v4568 = vadd.f32 0.0, %v4567
      %v4569 = vpop.f32.mrb[0].mxu0
      %4570 = vmatprep.mubr.f32.mxu0 0.0
      %4571 = vmatmul.mubr.f32.gmra.mrb[0].mxu0 %v4434
      %v4572 = vpop.f32.mrb[0].mxu0
      %v4573 = vadd.f32 0.0, %v4572
      %v4574 = vpop.f32.mrb[0].mxu0
      %4575 = vmatprep.mubr.f32.mxu0 0.0
      %4576 = vmatmul.mubr.f32.gmra.mrb[0].mxu0 %v4435
      %v4577 = vpop.f32.mrb[0].mxu0
      %v4578 = vadd.f32 0.0, %v4577
      %v4579 = vpop.f32.mrb[0].mxu0
      %4580 = vmatprep.mubr.f32.mxu0 0.0
      %4581 = vmatmul.mubr.f32.gmra.mrb[0].mxu0 %v4436
      %v4582 = vpop.f32.mrb[0].mxu0
      %v4583 = vadd.f32 0.0, %v4582
      %v4584 = vpop.f32.mrb[0].mxu0
      %4585 = vmatprep.mubr.f32.mxu0 0.0
      %4586 = vmatmul.mubr.f32.gmra.mrb[0].mxu0 %v4437
      %v4587 = vpop.f32.mrb[0].mxu0
      %v4588 = vadd.f32 0.0, %v4587
      %v4589 = vpop.f32.mrb[0].mxu0
      %4590 = vmatprep.mubr.f32.mxu0 0.0
      %4591 = vmatmul.mubr.f32.gmra.mrb[0].mxu0 %v4438
      %v4592 = vpop.f32.mrb[0].mxu0
      %v4593 = vadd.f32 0.0, %v4592
      %v4594 = vpop.f32.mrb[0].mxu0
      %4595 = vmatprep.mubr.f32.mxu0 0.0
      %4596 = vmatmul.mubr.f32.gmra.mrb[0].mxu0 %v4439
      %v4597 = vpop.f32.mrb[0].mxu0
      %v4598 = vadd.f32 0.0, %v4597
      %v4599 = vpop.f32.mrb[0].mxu0
      %4600 = vdwg.mxu0
      %v4601 = vadd.f32 %v3829, %v4523
      %v4602 = vadd.f32 %v3830, %v4528
      %v4603 = vadd.f32 %v3831, %v4533
      %v4604 = vadd.f32 %v3832, %v4538
      %v4605 = vadd.f32 %v3833, %v4543
      %v4606 = vadd.f32 %v3834, %v4548
      %v4607 = vadd.f32 %v3835, %v4553
      %v4608 = vadd.f32 %v3836, %v4558
      %v4609 = vadd.f32 %v3837, %v4563
      %v4610 = vadd.f32 %v3838, %v4568
      %v4611 = vadd.f32 %v3839, %v4573
      %v4612 = vadd.f32 %v3840, %v4578
      %v4613 = vadd.f32 %v3841, %v4583
      %v4614 = vadd.f32 %v3842, %v4588
      %v4615 = vadd.f32 %v3843, %v4593
      %v4616 = vadd.f32 %v3844, %v4598
      %4617 = vst.msk [vmem:[%s332] sm:$0xff] %vm349, %v4601
      %4618 = vst.msk [vmem:[%s332 + $0x8] sm:$0xff] %vm349, %v4602
      %4619 = vst.msk [vmem:[%s332 + $0x10] sm:$0xff] %vm349, %v4603
      %4620 = vst.msk [vmem:[%s332 + $0x18] sm:$0xff] %vm349, %v4604
      %4621 = vst.msk [vmem:[%s332 + $0x20] sm:$0xff] %vm349, %v4605
      %4622 = vst.msk [vmem:[%s332 + $0x28] sm:$0xff] %vm349, %v4606
      %4623 = vst.msk [vmem:[%s332 + $0x30] sm:$0xff] %vm349, %v4607
      %4624 = vst.msk [vmem:[%s332 + $0x38] sm:$0xff] %vm349, %v4608
      %4625 = vst.msk [vmem:[%s332 + $0x40] sm:$0xff] %vm349, %v4609
      %4626 = vst.msk [vmem:[%s332 + $0x48] sm:$0xff] %vm349, %v4610
      %4627 = vst.msk [vmem:[%s332 + $0x50] sm:$0xff] %vm349, %v4611
      %4628 = vst.msk [vmem:[%s332 + $0x58] sm:$0xff] %vm349, %v4612
      %4629 = vst.msk [vmem:[%s332 + $0x60] sm:$0xff] %vm349, %v4613
      %4630 = vst.msk [vmem:[%s332 + $0x68] sm:$0xff] %vm349, %v4614
      %4631 = vst.msk [vmem:[%s332 + $0x70] sm:$0xff] %vm349, %v4615
      %4632 = vst.msk [vmem:[%s332 + $0x78] sm:$0xff] %vm349, %v4616
      %p4633 = scmp.lt.s32.totalorder %s20, 1
      %s4634 = scalar_select %p4633, %s20, 1
      %s4635 = smul.addr %s4634, 16
      %s4636 = smul.addr %s4635, 8
      %s4637 = scalar_lea.vmem %s9, %s4636
      // Predicated region
      $region57: #{tpu_custom_call.1} parent=55 // pred_check
        %p4638 = pneg %p232
      $region58: #{tpu_custom_call.1} parent=55 // pred_check_branch
        %4640 = sbr.rel (%p4638) target = $region60
      $region59: #{tpu_custom_call.1} parent=55 // pred_region
        _
      $region60: #{tpu_custom_call.1} parent=55 // pred_fallthru
        _
    $region56: #{tpu_custom_call.1} parent=5 // pred_fallthru
      _
    %p4641 = scmp.le.s32.totalorder 2, %s15
    // Predicated region
    $region61: #{tpu_custom_call.1} parent=5 // pred_check
      %p4642 = pneg %p4641
    $region62: #{tpu_custom_call.1} parent=5 // pred_check_branch
      %4644 = sbr.rel (%p4642) target = $region64
    $region63: #{tpu_custom_call.1} parent=5 // pred_region
      %s4645 = ssub.s32 %s15, 2
      // Predicated region
      $region65: #{tpu_custom_call.1} parent=63 // pred_check
        %p4646 = pneg %p238
      $region66: #{tpu_custom_call.1} parent=63 // pred_check_branch
        %4648 = sbr.rel (%p4646) target = $region68
      $region67: #{tpu_custom_call.1} parent=63 // pred_region
        %p4649 = scmp.lt.s32.totalorder %s21, 1
        %s4650 = scalar_select %p4649, %s21, 1
        %s4651 = smul.addr %s4650, 16
        %s4652 = smul.addr %s4651, 8
        %s4653 = scalar_lea.vmem %s9, %s4652
      $region68: #{tpu_custom_call.1} parent=63 // pred_fallthru
        _
    $region64: #{tpu_custom_call.1} parent=5 // pred_fallthru
      _
  $region6: #{tpu_custom_call.1} parent=0 // loop_footer
    %s19 = sadd.s32 1, %s15
  $region7: #{tpu_custom_call.1} parent=0 // loop_footer_branch
    %14 = sbr.rel target = $region3
  $region8: #{tpu_custom_call.1} parent=0 // loop_exit
    _

</llo_original>
